<compile_context>
chip_gen: v7x
topology: tpu7x:2x2x1
jax: 0.10.0
libtpu: 0.0.40
codegen_flags: <defaults>
</compile_context>

<pallas_src>
import functools

import jax
import jax.numpy as jnp
from jax import lax
from jax.experimental import pallas as pl
from jax.experimental.pallas import tpu as pltpu


def _round_up(x, m):
    return (x + m - 1) // m * m


# ------------------------------ fused RDB kernel ------------------------------

def _rdb_kernel(x_ref, w1, w2, w3, w4, w5, b1, b2, b3, b4, b5,
                o_ref, stack_ref, *, C, G, H, W, P0):
    """Fused ResidualDenseBlock for one batch element.

    x_ref     : (1, C, H*W)        input features, spatial dims flattened
    wN        : (9, coutN, cinN)   per-tap weight matrices, tap = 3*dy + dx
    bN        : (coutN, 1)         biases
    o_ref     : (1, C, H*W)        output
    stack_ref : (C + 4*G, Lp) f32  resident feature stack with zero halo;
                                   live data occupies lanes [P0, P0 + H*W)
    """
    L = H * W
    w_refs = (w1, w2, w3, w4, w5)
    b_refs = (b1, b2, b3, b4, b5)

    # Zero the stack (provides the zero halo for out-of-image rows), then drop
    # this batch element's features into the live region.
    stack_ref[...] = jnp.zeros_like(stack_ref)
    stack_ref[0:C, P0:P0 + L] = x_ref[0, :, :].astype(jnp.float32)

    # Column-validity masks for horizontal taps (hoisted out of all loops).
    ww = lax.broadcasted_iota(jnp.int32, (1, L), 1) % W
    col_mask = {-1: ww >= 1, 0: None, 1: ww <= W - 2}

    for j in range(5):                          # unrolled at trace time
        cin = C + j * G
        cout = G if j < 4 else C
        w_ref = w_refs[j]
        b_ref = b_refs[j]

        acc = jnp.zeros((cout, L), jnp.float32)
        for dy in range(3):
            for dx in range(3):
                off = (dy - 1) * W + (dx - 1)
                # window[c, h*W + w] == stack[c, (h+dy-1)*W + (w+dx-1)]
                # (vertical out-of-range rows land in the zero halo).
                window = stack_ref[0:cin, P0 + off:P0 + off + L]
                mask = col_mask[dx - 1]
                if mask is not None:            # kill row wrap-around columns
                    window = jnp.where(mask, window, 0.0)
                acc = acc + jnp.dot(w_ref[dy * 3 + dx], window,
                                    preferred_element_type=jnp.float32)
        acc = acc + b_ref[...]

        if j < 4:
            acc = jnp.where(acc >= 0.0, acc, 0.2 * acc)   # LeakyReLU(0.2)
            stack_ref[cin:cin + cout, P0:P0 + L] = acc    # dense "concat"
        else:
            # conv5 * 0.2 + x, fused into the final store.
            out = acc * 0.2 + stack_ref[0:C, P0:P0 + L]
            o_ref[0, :, :] = out.astype(o_ref.dtype)


# --------------------------------- wrapper ------------------------------------

def rdb_forward(x_nchw, params):
    """ResidualDenseBlock forward.  x_nchw: (N, C, H, W) float32 (NCHW)."""
    N, C, H, W = x_nchw.shape
    G = params[0][0].shape[1]                   # growth channels (conv1 cout)
    L = H * W
    P0 = _round_up(W + 1, 128)                  # lane-aligned start of live data
    Lp = _round_up(P0 + L + W + 1, 128)         # live data + left/right halo

    x_flat = x_nchw.reshape(N, C, L)            # NCHW -> (N, C, H*W): pure reshape
    ws = [p[0] for p in params]
    bs = [p[1] for p in params]

    kernel = functools.partial(_rdb_kernel, C=C, G=G, H=H, W=W, P0=P0)
    in_specs = [pl.BlockSpec((1, C, L), lambda n: (n, 0, 0))]
    in_specs += [pl.BlockSpec(w.shape, lambda n: (0, 0, 0)) for w in ws]
    in_specs += [pl.BlockSpec(b.shape, lambda n: (0, 0)) for b in bs]

    out_flat = pl.pallas_call(
        kernel,
        out_shape=jax.ShapeDtypeStruct((N, C, L), x_nchw.dtype),
        grid=(N,),
        in_specs=in_specs,
        out_specs=pl.BlockSpec((1, C, L), lambda n: (n, 0, 0)),
        scratch_shapes=[pltpu.VMEM((C + 4 * G, Lp), jnp.float32)],
        compiler_params=pltpu.CompilerParams(
            dimension_semantics=("parallel",),
            vmem_limit_bytes=32 * 1024 * 1024),
    )(x_flat, *ws, *bs)
    return out_flat.reshape(N, C, H, W)


# ----------------------------- parameter helpers ------------------------------

def init_conv_params(key, cin, cout):
    """nn.init.kaiming_normal_ (fan_in, gain=sqrt(2)), then *= 0.1; zero bias."""
    fan_in = cin * 9
    std = (2.0 / fan_in) ** 0.5
    w_oihw = jax.random.normal(key, (cout, cin, 3, 3), jnp.float32) * std * 0.1
    # OIHW -> (kh*kw, Cout, Cin): each spatial tap is a (Cout, Cin) matmul LHS.
    w_taps = jnp.transpose(w_oihw, (2, 3, 0, 1)).reshape(9, cout, cin)
    b = jnp.zeros((cout, 1), jnp.float32)
    return w_taps, b


def make_rdb_params(key, channels, growth):
    keys = jax.random.split(key, 5)
    params = []
    for j in range(5):
        cin = channels + j * growth
        cout = growth if j < 4 else channels
        params.append(init_conv_params(keys[j], cin, cout))
    return params


# --------------------------- pure-JAX reference -------------------------------

def _conv3x3_ref(x, w_taps, b):
    cout, cin = w_taps.shape[1], w_taps.shape[2]
    w_oihw = jnp.transpose(w_taps.reshape(3, 3, cout, cin), (2, 3, 0, 1))
    y = lax.conv_general_dilated(
        x, w_oihw, window_strides=(1, 1), padding="SAME",
        dimension_numbers=("NCHW", "OIHW", "NCHW"),
        precision=lax.Precision.HIGHEST)
    return y + b.reshape(1, cout, 1, 1)


def rdb_reference(x, params):
    feats = x
    for j in range(4):
        w, b = params[j]
        c = _conv3x3_ref(feats, w, b)
        c = jnp.where(c >= 0.0, c, 0.2 * c)
        feats = jnp.concatenate([feats, c], axis=1)
    w, b = params[4]
    conv5 = _conv3x3_ref(feats, w, b)
    return conv5 * 0.2 + x


# ------------------------------------ main -------------------------------------

if __name__ == "__main__":
    channels, growth = 8, 4
    N, H, W = 2, 16, 16

    key = jax.random.PRNGKey(0)
    kx, kp = jax.random.split(key)
    x = jax.random.normal(kx, (N, channels, H, W), jnp.float32)
    params = make_rdb_params(kp, channels, growth)

    out = jax.jit(rdb_forward)(x, params)
    jax.block_until_ready(out)

    assert out.shape == x.shape and out.dtype == x.dtype
    ref = rdb_reference(x, params)
    assert jnp.allclose(out, ref, rtol=2e-3, atol=2e-3), (
        "max abs err = %e" % float(jnp.max(jnp.abs(out - ref))))
    print("KERNEL_OK")
</pallas_src>

<mosaic_0001>
module attributes {stable_mosaic.version = 11 : i64} {
  func.func @_rdb_kernel(%arg0: i32, %arg1: memref<1x8x256xf32, #tpu.memory_space<vmem>>, %arg2: memref<9x4x8xf32, #tpu.memory_space<vmem>>, %arg3: memref<9x4x12xf32, #tpu.memory_space<vmem>>, %arg4: memref<9x4x16xf32, #tpu.memory_space<vmem>>, %arg5: memref<9x4x20xf32, #tpu.memory_space<vmem>>, %arg6: memref<9x8x24xf32, #tpu.memory_space<vmem>>, %arg7: memref<4x1xf32, #tpu.memory_space<vmem>>, %arg8: memref<4x1xf32, #tpu.memory_space<vmem>>, %arg9: memref<4x1xf32, #tpu.memory_space<vmem>>, %arg10: memref<4x1xf32, #tpu.memory_space<vmem>>, %arg11: memref<8x1xf32, #tpu.memory_space<vmem>>, %arg12: memref<1x8x256xf32, #tpu.memory_space<vmem>>, %arg13: memref<24x512xf32, #tpu.memory_space<vmem>>) attributes {dimension_semantics = [#tpu.dimension_semantics<parallel>], iteration_bounds = array<i64: 2>, scalar_prefetch = 0 : i64, scratch_operands = 1 : i64, tpu.core_type = #tpu.core_type<tc>, window_params = [{transform_indices = @transform_0, window_bounds = array<i64: 1, 8, 256>}, {pipeline_mode = #tpu.pipeline_mode<synchronous>, transform_indices = @transform_1, window_bounds = array<i64: 9, 4, 8>}, {pipeline_mode = #tpu.pipeline_mode<synchronous>, transform_indices = @transform_2, window_bounds = array<i64: 9, 4, 12>}, {pipeline_mode = #tpu.pipeline_mode<synchronous>, transform_indices = @transform_3, window_bounds = array<i64: 9, 4, 16>}, {pipeline_mode = #tpu.pipeline_mode<synchronous>, transform_indices = @transform_4, window_bounds = array<i64: 9, 4, 20>}, {pipeline_mode = #tpu.pipeline_mode<synchronous>, transform_indices = @transform_5, window_bounds = array<i64: 9, 8, 24>}, {pipeline_mode = #tpu.pipeline_mode<synchronous>, transform_indices = @transform_6, window_bounds = array<i64: 4, 1>}, {pipeline_mode = #tpu.pipeline_mode<synchronous>, transform_indices = @transform_7, window_bounds = array<i64: 4, 1>}, {pipeline_mode = #tpu.pipeline_mode<synchronous>, transform_indices = @transform_8, window_bounds = array<i64: 4, 1>}, {pipeline_mode = #tpu.pipeline_mode<synchronous>, transform_indices = @transform_9, window_bounds = array<i64: 4, 1>}, {pipeline_mode = #tpu.pipeline_mode<synchronous>, transform_indices = @transform_10, window_bounds = array<i64: 8, 1>}, {transform_indices = @transform_11, window_bounds = array<i64: 1, 8, 256>}]} {
    %cst = arith.constant 0.000000e+00 : f32
    %0 = vector.broadcast %cst : f32 to vector<24x512xf32>
    %c0 = arith.constant 0 : index
    %c0_0 = arith.constant 0 : index
    %1 = vector.load %arg13[%c0, %c0_0] : memref<24x512xf32, #tpu.memory_space<vmem>>, vector<24x512xf32>
    tpu.vector_store %arg13[%c0, %c0_0], %0 {strides = array<i32>} : memref<24x512xf32, #tpu.memory_space<vmem>>, vector<24x512xf32>,
    %c0_1 = arith.constant 0 : index
    %c0_2 = arith.constant 0 : index
    %c0_3 = arith.constant 0 : index
    %2 = vector.load %arg1[%c0_1, %c0_2, %c0_3] : memref<1x8x256xf32, #tpu.memory_space<vmem>>, vector<1x8x256xf32>
    %3 = vector.shape_cast %2 : vector<1x8x256xf32> to vector<8x256xf32>
    %c0_4 = arith.constant 0 : index
    %c128 = arith.constant 128 : index
    %4 = vector.load %arg13[%c0_4, %c128] : memref<24x512xf32, #tpu.memory_space<vmem>>, vector<8x256xf32>
    tpu.vector_store %arg13[%c0_4, %c128], %3 {strides = array<i32>} : memref<24x512xf32, #tpu.memory_space<vmem>>, vector<8x256xf32>,
    %5 = tpu.iota {dimensions = array<i32: 1>} : vector<1x256xi32>
    %c16_i32 = arith.constant 16 : i32
    %c0_i32 = arith.constant 0 : i32
    %6 = arith.cmpi eq, %c16_i32, %c0_i32 : i32
    %c1_i32 = arith.constant 1 : i32
    %7 = arith.select %6, %c1_i32, %c16_i32 : i32
    %8 = vector.broadcast %7 : i32 to vector<1x256xi32>
    %9 = arith.remsi %5, %8 : vector<1x256xi32>
    %c0_i32_5 = arith.constant 0 : i32
    %10 = vector.broadcast %c0_i32_5 : i32 to vector<1x256xi32>
    %11 = arith.cmpi ne, %9, %10 : vector<1x256xi32>
    %c0_i32_6 = arith.constant 0 : i32
    %12 = vector.broadcast %c0_i32_6 : i32 to vector<1x256xi32>
    %13 = arith.cmpi slt, %9, %12 : vector<1x256xi32>
    %c0_i32_7 = arith.constant 0 : i32
    %14 = arith.cmpi slt, %7, %c0_i32_7 : i32
    %15 = vector.broadcast %14 : i1 to vector<1x256xi1>
    %16 = vector.broadcast %15 : vector<1x256xi1> to vector<1x256xi1>
    %17 = arith.xori %13, %16 : vector<1x256xi1>
    %18 = arith.andi %17, %11 : vector<1x256xi1>
    %19 = vector.broadcast %7 : i32 to vector<1x256xi32>
    %20 = arith.addi %9, %19 : vector<1x256xi32>
    %21 = arith.select %18, %20, %9 : vector<1x256xi1>, vector<1x256xi32>
    %c1_i32_8 = arith.constant 1 : i32
    %22 = vector.broadcast %c1_i32_8 : i32 to vector<1x256xi32>
    %23 = arith.cmpi sge, %21, %22 : vector<1x256xi32>
    %c14_i32 = arith.constant 14 : i32
    %24 = vector.broadcast %c14_i32 : i32 to vector<1x256xi32>
    %25 = arith.cmpi sle, %21, %24 : vector<1x256xi32>
    %cst_9 = arith.constant 0.000000e+00 : f32
    %26 = vector.broadcast %cst_9 : f32 to vector<4x256xf32>
    %c0_10 = arith.constant 0 : index
    %c111 = arith.constant 111 : index
    %27 = vector.load %arg13[%c0_10, %c111] : memref<24x512xf32, #tpu.memory_space<vmem>>, vector<8x256xf32>
    %cst_11 = arith.constant 0.000000e+00 : f32
    %28 = vector.shape_cast %23 : vector<1x256xi1> to vector<1x256xi1>
    %29 = vector.broadcast %28 : vector<1x256xi1> to vector<8x256xi1>
    %30 = vector.broadcast %cst_11 : f32 to vector<8x256xf32>
    %31 = arith.select %29, %27, %30 : vector<8x256xi1>, vector<8x256xf32>
    %c0_12 = arith.constant 0 : index
    %c0_13 = arith.constant 0 : index
    %c0_14 = arith.constant 0 : index
    %32 = vector.load %arg2[%c0_12, %c0_13, %c0_14] : memref<9x4x8xf32, #tpu.memory_space<vmem>>, vector<1x4x8xf32>
    %33 = vector.shape_cast %32 : vector<1x4x8xf32> to vector<4x8xf32>
    %cst_15 = arith.constant dense<0.000000e+00> : vector<4x256xf32>
    %34 = tpu.matmul %33, %31, %cst_15 {dimension_numbers = #tpu.dot_dimension_numbers<[1], [0], [0], [1], [0, 0, 1, 1], [], []>} : vector<4x8xf32>, vector<8x256xf32>, vector<4x256xf32> -> vector<4x256xf32>
    %35 = arith.addf %26, %34 : vector<4x256xf32>
    %c0_16 = arith.constant 0 : index
    %c112 = arith.constant 112 : index
    %36 = vector.load %arg13[%c0_16, %c112] : memref<24x512xf32, #tpu.memory_space<vmem>>, vector<8x256xf32>
    %c1 = arith.constant 1 : index
    %c0_17 = arith.constant 0 : index
    %c0_18 = arith.constant 0 : index
    %37 = vector.load %arg2[%c1, %c0_17, %c0_18] : memref<9x4x8xf32, #tpu.memory_space<vmem>>, vector<1x4x8xf32>
    %38 = vector.shape_cast %37 : vector<1x4x8xf32> to vector<4x8xf32>
    %cst_19 = arith.constant dense<0.000000e+00> : vector<4x256xf32>
    %39 = tpu.matmul %38, %36, %cst_19 {dimension_numbers = #tpu.dot_dimension_numbers<[1], [0], [0], [1], [0, 0, 1, 1], [], []>} : vector<4x8xf32>, vector<8x256xf32>, vector<4x256xf32> -> vector<4x256xf32>
    %40 = arith.addf %35, %39 : vector<4x256xf32>
    %c0_20 = arith.constant 0 : index
    %c113 = arith.constant 113 : index
    %41 = vector.load %arg13[%c0_20, %c113] : memref<24x512xf32, #tpu.memory_space<vmem>>, vector<8x256xf32>
    %cst_21 = arith.constant 0.000000e+00 : f32
    %42 = vector.shape_cast %25 : vector<1x256xi1> to vector<1x256xi1>
    %43 = vector.broadcast %42 : vector<1x256xi1> to vector<8x256xi1>
    %44 = vector.broadcast %cst_21 : f32 to vector<8x256xf32>
    %45 = arith.select %43, %41, %44 : vector<8x256xi1>, vector<8x256xf32>
    %c2 = arith.constant 2 : index
    %c0_22 = arith.constant 0 : index
    %c0_23 = arith.constant 0 : index
    %46 = vector.load %arg2[%c2, %c0_22, %c0_23] : memref<9x4x8xf32, #tpu.memory_space<vmem>>, vector<1x4x8xf32>
    %47 = vector.shape_cast %46 : vector<1x4x8xf32> to vector<4x8xf32>
    %cst_24 = arith.constant dense<0.000000e+00> : vector<4x256xf32>
    %48 = tpu.matmul %47, %45, %cst_24 {dimension_numbers = #tpu.dot_dimension_numbers<[1], [0], [0], [1], [0, 0, 1, 1], [], []>} : vector<4x8xf32>, vector<8x256xf32>, vector<4x256xf32> -> vector<4x256xf32>
    %49 = arith.addf %40, %48 : vector<4x256xf32>
    %c0_25 = arith.constant 0 : index
    %c127 = arith.constant 127 : index
    %50 = vector.load %arg13[%c0_25, %c127] : memref<24x512xf32, #tpu.memory_space<vmem>>, vector<8x256xf32>
    %cst_26 = arith.constant 0.000000e+00 : f32
    %51 = vector.shape_cast %23 : vector<1x256xi1> to vector<1x256xi1>
    %52 = vector.broadcast %51 : vector<1x256xi1> to vector<8x256xi1>
    %53 = vector.broadcast %cst_26 : f32 to vector<8x256xf32>
    %54 = arith.select %52, %50, %53 : vector<8x256xi1>, vector<8x256xf32>
    %c3 = arith.constant 3 : index
    %c0_27 = arith.constant 0 : index
    %c0_28 = arith.constant 0 : index
    %55 = vector.load %arg2[%c3, %c0_27, %c0_28] : memref<9x4x8xf32, #tpu.memory_space<vmem>>, vector<1x4x8xf32>
    %56 = vector.shape_cast %55 : vector<1x4x8xf32> to vector<4x8xf32>
    %cst_29 = arith.constant dense<0.000000e+00> : vector<4x256xf32>
    %57 = tpu.matmul %56, %54, %cst_29 {dimension_numbers = #tpu.dot_dimension_numbers<[1], [0], [0], [1], [0, 0, 1, 1], [], []>} : vector<4x8xf32>, vector<8x256xf32>, vector<4x256xf32> -> vector<4x256xf32>
    %58 = arith.addf %49, %57 : vector<4x256xf32>
    %c0_30 = arith.constant 0 : index
    %c128_31 = arith.constant 128 : index
    %59 = vector.load %arg13[%c0_30, %c128_31] : memref<24x512xf32, #tpu.memory_space<vmem>>, vector<8x256xf32>
    %c4 = arith.constant 4 : index
    %c0_32 = arith.constant 0 : index
    %c0_33 = arith.constant 0 : index
    %60 = vector.load %arg2[%c4, %c0_32, %c0_33] : memref<9x4x8xf32, #tpu.memory_space<vmem>>, vector<1x4x8xf32>
    %61 = vector.shape_cast %60 : vector<1x4x8xf32> to vector<4x8xf32>
    %cst_34 = arith.constant dense<0.000000e+00> : vector<4x256xf32>
    %62 = tpu.matmul %61, %59, %cst_34 {dimension_numbers = #tpu.dot_dimension_numbers<[1], [0], [0], [1], [0, 0, 1, 1], [], []>} : vector<4x8xf32>, vector<8x256xf32>, vector<4x256xf32> -> vector<4x256xf32>
    %63 = arith.addf %58, %62 : vector<4x256xf32>
    %c0_35 = arith.constant 0 : index
    %c129 = arith.constant 129 : index
    %64 = vector.load %arg13[%c0_35, %c129] : memref<24x512xf32, #tpu.memory_space<vmem>>, vector<8x256xf32>
    %cst_36 = arith.constant 0.000000e+00 : f32
    %65 = vector.shape_cast %25 : vector<1x256xi1> to vector<1x256xi1>
    %66 = vector.broadcast %65 : vector<1x256xi1> to vector<8x256xi1>
    %67 = vector.broadcast %cst_36 : f32 to vector<8x256xf32>
    %68 = arith.select %66, %64, %67 : vector<8x256xi1>, vector<8x256xf32>
    %c5 = arith.constant 5 : index
    %c0_37 = arith.constant 0 : index
    %c0_38 = arith.constant 0 : index
    %69 = vector.load %arg2[%c5, %c0_37, %c0_38] : memref<9x4x8xf32, #tpu.memory_space<vmem>>, vector<1x4x8xf32>
    %70 = vector.shape_cast %69 : vector<1x4x8xf32> to vector<4x8xf32>
    %cst_39 = arith.constant dense<0.000000e+00> : vector<4x256xf32>
    %71 = tpu.matmul %70, %68, %cst_39 {dimension_numbers = #tpu.dot_dimension_numbers<[1], [0], [0], [1], [0, 0, 1, 1], [], []>} : vector<4x8xf32>, vector<8x256xf32>, vector<4x256xf32> -> vector<4x256xf32>
    %72 = arith.addf %63, %71 : vector<4x256xf32>
    %c0_40 = arith.constant 0 : index
    %c143 = arith.constant 143 : index
    %73 = vector.load %arg13[%c0_40, %c143] : memref<24x512xf32, #tpu.memory_space<vmem>>, vector<8x256xf32>
    %cst_41 = arith.constant 0.000000e+00 : f32
    %74 = vector.shape_cast %23 : vector<1x256xi1> to vector<1x256xi1>
    %75 = vector.broadcast %74 : vector<1x256xi1> to vector<8x256xi1>
    %76 = vector.broadcast %cst_41 : f32 to vector<8x256xf32>
    %77 = arith.select %75, %73, %76 : vector<8x256xi1>, vector<8x256xf32>
    %c6 = arith.constant 6 : index
    %c0_42 = arith.constant 0 : index
    %c0_43 = arith.constant 0 : index
    %78 = vector.load %arg2[%c6, %c0_42, %c0_43] : memref<9x4x8xf32, #tpu.memory_space<vmem>>, vector<1x4x8xf32>
    %79 = vector.shape_cast %78 : vector<1x4x8xf32> to vector<4x8xf32>
    %cst_44 = arith.constant dense<0.000000e+00> : vector<4x256xf32>
    %80 = tpu.matmul %79, %77, %cst_44 {dimension_numbers = #tpu.dot_dimension_numbers<[1], [0], [0], [1], [0, 0, 1, 1], [], []>} : vector<4x8xf32>, vector<8x256xf32>, vector<4x256xf32> -> vector<4x256xf32>
    %81 = arith.addf %72, %80 : vector<4x256xf32>
    %c0_45 = arith.constant 0 : index
    %c144 = arith.constant 144 : index
    %82 = vector.load %arg13[%c0_45, %c144] : memref<24x512xf32, #tpu.memory_space<vmem>>, vector<8x256xf32>
    %c7 = arith.constant 7 : index
    %c0_46 = arith.constant 0 : index
    %c0_47 = arith.constant 0 : index
    %83 = vector.load %arg2[%c7, %c0_46, %c0_47] : memref<9x4x8xf32, #tpu.memory_space<vmem>>, vector<1x4x8xf32>
    %84 = vector.shape_cast %83 : vector<1x4x8xf32> to vector<4x8xf32>
    %cst_48 = arith.constant dense<0.000000e+00> : vector<4x256xf32>
    %85 = tpu.matmul %84, %82, %cst_48 {dimension_numbers = #tpu.dot_dimension_numbers<[1], [0], [0], [1], [0, 0, 1, 1], [], []>} : vector<4x8xf32>, vector<8x256xf32>, vector<4x256xf32> -> vector<4x256xf32>
    %86 = arith.addf %81, %85 : vector<4x256xf32>
    %c0_49 = arith.constant 0 : index
    %c145 = arith.constant 145 : index
    %87 = vector.load %arg13[%c0_49, %c145] : memref<24x512xf32, #tpu.memory_space<vmem>>, vector<8x256xf32>
    %cst_50 = arith.constant 0.000000e+00 : f32
    %88 = vector.shape_cast %25 : vector<1x256xi1> to vector<1x256xi1>
    %89 = vector.broadcast %88 : vector<1x256xi1> to vector<8x256xi1>
    %90 = vector.broadcast %cst_50 : f32 to vector<8x256xf32>
    %91 = arith.select %89, %87, %90 : vector<8x256xi1>, vector<8x256xf32>
    %c8 = arith.constant 8 : index
    %c0_51 = arith.constant 0 : index
    %c0_52 = arith.constant 0 : index
    %92 = vector.load %arg2[%c8, %c0_51, %c0_52] : memref<9x4x8xf32, #tpu.memory_space<vmem>>, vector<1x4x8xf32>
    %93 = vector.shape_cast %92 : vector<1x4x8xf32> to vector<4x8xf32>
    %cst_53 = arith.constant dense<0.000000e+00> : vector<4x256xf32>
    %94 = tpu.matmul %93, %91, %cst_53 {dimension_numbers = #tpu.dot_dimension_numbers<[1], [0], [0], [1], [0, 0, 1, 1], [], []>} : vector<4x8xf32>, vector<8x256xf32>, vector<4x256xf32> -> vector<4x256xf32>
    %95 = arith.addf %86, %94 : vector<4x256xf32>
    %c0_54 = arith.constant 0 : index
    %c0_55 = arith.constant 0 : index
    %96 = vector.load %arg7[%c0_54, %c0_55] : memref<4x1xf32, #tpu.memory_space<vmem>>, vector<4x1xf32>
    %97 = vector.broadcast %96 : vector<4x1xf32> to vector<4x256xf32>
    %98 = arith.addf %95, %97 : vector<4x256xf32>
    %cst_56 = arith.constant 0.000000e+00 : f32
    %99 = vector.broadcast %cst_56 : f32 to vector<4x256xf32>
    %100 = arith.cmpf oge, %98, %99 : vector<4x256xf32>
    %cst_57 = arith.constant 2.000000e-01 : f32
    %101 = vector.broadcast %cst_57 : f32 to vector<4x256xf32>
    %102 = arith.mulf %101, %98 : vector<4x256xf32>
    %103 = arith.select %100, %98, %102 : vector<4x256xi1>, vector<4x256xf32>
    %c8_58 = arith.constant 8 : index
    %c128_59 = arith.constant 128 : index
    %104 = vector.load %arg13[%c8_58, %c128_59] : memref<24x512xf32, #tpu.memory_space<vmem>>, vector<4x256xf32>
    tpu.vector_store %arg13[%c8_58, %c128_59], %103 {strides = array<i32>} : memref<24x512xf32, #tpu.memory_space<vmem>>, vector<4x256xf32>,
    %cst_60 = arith.constant 0.000000e+00 : f32
    %105 = vector.broadcast %cst_60 : f32 to vector<4x256xf32>
    %c0_61 = arith.constant 0 : index
    %c111_62 = arith.constant 111 : index
    %106 = vector.load %arg13[%c0_61, %c111_62] : memref<24x512xf32, #tpu.memory_space<vmem>>, vector<12x256xf32>
    %cst_63 = arith.constant 0.000000e+00 : f32
    %107 = vector.shape_cast %23 : vector<1x256xi1> to vector<1x256xi1>
    %108 = vector.broadcast %107 : vector<1x256xi1> to vector<12x256xi1>
    %109 = vector.broadcast %cst_63 : f32 to vector<12x256xf32>
    %110 = arith.select %108, %106, %109 : vector<12x256xi1>, vector<12x256xf32>
    %c0_64 = arith.constant 0 : index
    %c0_65 = arith.constant 0 : index
    %c0_66 = arith.constant 0 : index
    %111 = vector.load %arg3[%c0_64, %c0_65, %c0_66] : memref<9x4x12xf32, #tpu.memory_space<vmem>>, vector<1x4x12xf32>
    %112 = vector.shape_cast %111 : vector<1x4x12xf32> to vector<4x12xf32>
    %cst_67 = arith.constant dense<0.000000e+00> : vector<4x256xf32>
    %113 = tpu.matmul %112, %110, %cst_67 {dimension_numbers = #tpu.dot_dimension_numbers<[1], [0], [0], [1], [0, 0, 1, 1], [], []>} : vector<4x12xf32>, vector<12x256xf32>, vector<4x256xf32> -> vector<4x256xf32>
    %114 = arith.addf %105, %113 : vector<4x256xf32>
    %c0_68 = arith.constant 0 : index
    %c112_69 = arith.constant 112 : index
    %115 = vector.load %arg13[%c0_68, %c112_69] : memref<24x512xf32, #tpu.memory_space<vmem>>, vector<12x256xf32>
    %c1_70 = arith.constant 1 : index
    %c0_71 = arith.constant 0 : index
    %c0_72 = arith.constant 0 : index
    %116 = vector.load %arg3[%c1_70, %c0_71, %c0_72] : memref<9x4x12xf32, #tpu.memory_space<vmem>>, vector<1x4x12xf32>
    %117 = vector.shape_cast %116 : vector<1x4x12xf32> to vector<4x12xf32>
    %cst_73 = arith.constant dense<0.000000e+00> : vector<4x256xf32>
    %118 = tpu.matmul %117, %115, %cst_73 {dimension_numbers = #tpu.dot_dimension_numbers<[1], [0], [0], [1], [0, 0, 1, 1], [], []>} : vector<4x12xf32>, vector<12x256xf32>, vector<4x256xf32> -> vector<4x256xf32>
    %119 = arith.addf %114, %118 : vector<4x256xf32>
    %c0_74 = arith.constant 0 : index
    %c113_75 = arith.constant 113 : index
    %120 = vector.load %arg13[%c0_74, %c113_75] : memref<24x512xf32, #tpu.memory_space<vmem>>, vector<12x256xf32>
    %cst_76 = arith.constant 0.000000e+00 : f32
    %121 = vector.shape_cast %25 : vector<1x256xi1> to vector<1x256xi1>
    %122 = vector.broadcast %121 : vector<1x256xi1> to vector<12x256xi1>
    %123 = vector.broadcast %cst_76 : f32 to vector<12x256xf32>
    %124 = arith.select %122, %120, %123 : vector<12x256xi1>, vector<12x256xf32>
    %c2_77 = arith.constant 2 : index
    %c0_78 = arith.constant 0 : index
    %c0_79 = arith.constant 0 : index
    %125 = vector.load %arg3[%c2_77, %c0_78, %c0_79] : memref<9x4x12xf32, #tpu.memory_space<vmem>>, vector<1x4x12xf32>
    %126 = vector.shape_cast %125 : vector<1x4x12xf32> to vector<4x12xf32>
    %cst_80 = arith.constant dense<0.000000e+00> : vector<4x256xf32>
    %127 = tpu.matmul %126, %124, %cst_80 {dimension_numbers = #tpu.dot_dimension_numbers<[1], [0], [0], [1], [0, 0, 1, 1], [], []>} : vector<4x12xf32>, vector<12x256xf32>, vector<4x256xf32> -> vector<4x256xf32>
    %128 = arith.addf %119, %127 : vector<4x256xf32>
    %c0_81 = arith.constant 0 : index
    %c127_82 = arith.constant 127 : index
    %129 = vector.load %arg13[%c0_81, %c127_82] : memref<24x512xf32, #tpu.memory_space<vmem>>, vector<12x256xf32>
    %cst_83 = arith.constant 0.000000e+00 : f32
    %130 = vector.shape_cast %23 : vector<1x256xi1> to vector<1x256xi1>
    %131 = vector.broadcast %130 : vector<1x256xi1> to vector<12x256xi1>
    %132 = vector.broadcast %cst_83 : f32 to vector<12x256xf32>
    %133 = arith.select %131, %129, %132 : vector<12x256xi1>, vector<12x256xf32>
    %c3_84 = arith.constant 3 : index
    %c0_85 = arith.constant 0 : index
    %c0_86 = arith.constant 0 : index
    %134 = vector.load %arg3[%c3_84, %c0_85, %c0_86] : memref<9x4x12xf32, #tpu.memory_space<vmem>>, vector<1x4x12xf32>
    %135 = vector.shape_cast %134 : vector<1x4x12xf32> to vector<4x12xf32>
    %cst_87 = arith.constant dense<0.000000e+00> : vector<4x256xf32>
    %136 = tpu.matmul %135, %133, %cst_87 {dimension_numbers = #tpu.dot_dimension_numbers<[1], [0], [0], [1], [0, 0, 1, 1], [], []>} : vector<4x12xf32>, vector<12x256xf32>, vector<4x256xf32> -> vector<4x256xf32>
    %137 = arith.addf %128, %136 : vector<4x256xf32>
    %c0_88 = arith.constant 0 : index
    %c128_89 = arith.constant 128 : index
    %138 = vector.load %arg13[%c0_88, %c128_89] : memref<24x512xf32, #tpu.memory_space<vmem>>, vector<12x256xf32>
    %c4_90 = arith.constant 4 : index
    %c0_91 = arith.constant 0 : index
    %c0_92 = arith.constant 0 : index
    %139 = vector.load %arg3[%c4_90, %c0_91, %c0_92] : memref<9x4x12xf32, #tpu.memory_space<vmem>>, vector<1x4x12xf32>
    %140 = vector.shape_cast %139 : vector<1x4x12xf32> to vector<4x12xf32>
    %cst_93 = arith.constant dense<0.000000e+00> : vector<4x256xf32>
    %141 = tpu.matmul %140, %138, %cst_93 {dimension_numbers = #tpu.dot_dimension_numbers<[1], [0], [0], [1], [0, 0, 1, 1], [], []>} : vector<4x12xf32>, vector<12x256xf32>, vector<4x256xf32> -> vector<4x256xf32>
    %142 = arith.addf %137, %141 : vector<4x256xf32>
    %c0_94 = arith.constant 0 : index
    %c129_95 = arith.constant 129 : index
    %143 = vector.load %arg13[%c0_94, %c129_95] : memref<24x512xf32, #tpu.memory_space<vmem>>, vector<12x256xf32>
    %cst_96 = arith.constant 0.000000e+00 : f32
    %144 = vector.shape_cast %25 : vector<1x256xi1> to vector<1x256xi1>
    %145 = vector.broadcast %144 : vector<1x256xi1> to vector<12x256xi1>
    %146 = vector.broadcast %cst_96 : f32 to vector<12x256xf32>
    %147 = arith.select %145, %143, %146 : vector<12x256xi1>, vector<12x256xf32>
    %c5_97 = arith.constant 5 : index
    %c0_98 = arith.constant 0 : index
    %c0_99 = arith.constant 0 : index
    %148 = vector.load %arg3[%c5_97, %c0_98, %c0_99] : memref<9x4x12xf32, #tpu.memory_space<vmem>>, vector<1x4x12xf32>
    %149 = vector.shape_cast %148 : vector<1x4x12xf32> to vector<4x12xf32>
    %cst_100 = arith.constant dense<0.000000e+00> : vector<4x256xf32>
    %150 = tpu.matmul %149, %147, %cst_100 {dimension_numbers = #tpu.dot_dimension_numbers<[1], [0], [0], [1], [0, 0, 1, 1], [], []>} : vector<4x12xf32>, vector<12x256xf32>, vector<4x256xf32> -> vector<4x256xf32>
    %151 = arith.addf %142, %150 : vector<4x256xf32>
    %c0_101 = arith.constant 0 : index
    %c143_102 = arith.constant 143 : index
    %152 = vector.load %arg13[%c0_101, %c143_102] : memref<24x512xf32, #tpu.memory_space<vmem>>, vector<12x256xf32>
    %cst_103 = arith.constant 0.000000e+00 : f32
    %153 = vector.shape_cast %23 : vector<1x256xi1> to vector<1x256xi1>
    %154 = vector.broadcast %153 : vector<1x256xi1> to vector<12x256xi1>
    %155 = vector.broadcast %cst_103 : f32 to vector<12x256xf32>
    %156 = arith.select %154, %152, %155 : vector<12x256xi1>, vector<12x256xf32>
    %c6_104 = arith.constant 6 : index
    %c0_105 = arith.constant 0 : index
    %c0_106 = arith.constant 0 : index
    %157 = vector.load %arg3[%c6_104, %c0_105, %c0_106] : memref<9x4x12xf32, #tpu.memory_space<vmem>>, vector<1x4x12xf32>
    %158 = vector.shape_cast %157 : vector<1x4x12xf32> to vector<4x12xf32>
    %cst_107 = arith.constant dense<0.000000e+00> : vector<4x256xf32>
    %159 = tpu.matmul %158, %156, %cst_107 {dimension_numbers = #tpu.dot_dimension_numbers<[1], [0], [0], [1], [0, 0, 1, 1], [], []>} : vector<4x12xf32>, vector<12x256xf32>, vector<4x256xf32> -> vector<4x256xf32>
    %160 = arith.addf %151, %159 : vector<4x256xf32>
    %c0_108 = arith.constant 0 : index
    %c144_109 = arith.constant 144 : index
    %161 = vector.load %arg13[%c0_108, %c144_109] : memref<24x512xf32, #tpu.memory_space<vmem>>, vector<12x256xf32>
    %c7_110 = arith.constant 7 : index
    %c0_111 = arith.constant 0 : index
    %c0_112 = arith.constant 0 : index
    %162 = vector.load %arg3[%c7_110, %c0_111, %c0_112] : memref<9x4x12xf32, #tpu.memory_space<vmem>>, vector<1x4x12xf32>
    %163 = vector.shape_cast %162 : vector<1x4x12xf32> to vector<4x12xf32>
    %cst_113 = arith.constant dense<0.000000e+00> : vector<4x256xf32>
    %164 = tpu.matmul %163, %161, %cst_113 {dimension_numbers = #tpu.dot_dimension_numbers<[1], [0], [0], [1], [0, 0, 1, 1], [], []>} : vector<4x12xf32>, vector<12x256xf32>, vector<4x256xf32> -> vector<4x256xf32>
    %165 = arith.addf %160, %164 : vector<4x256xf32>
    %c0_114 = arith.constant 0 : index
    %c145_115 = arith.constant 145 : index
    %166 = vector.load %arg13[%c0_114, %c145_115] : memref<24x512xf32, #tpu.memory_space<vmem>>, vector<12x256xf32>
    %cst_116 = arith.constant 0.000000e+00 : f32
    %167 = vector.shape_cast %25 : vector<1x256xi1> to vector<1x256xi1>
    %168 = vector.broadcast %167 : vector<1x256xi1> to vector<12x256xi1>
    %169 = vector.broadcast %cst_116 : f32 to vector<12x256xf32>
    %170 = arith.select %168, %166, %169 : vector<12x256xi1>, vector<12x256xf32>
    %c8_117 = arith.constant 8 : index
    %c0_118 = arith.constant 0 : index
    %c0_119 = arith.constant 0 : index
    %171 = vector.load %arg3[%c8_117, %c0_118, %c0_119] : memref<9x4x12xf32, #tpu.memory_space<vmem>>, vector<1x4x12xf32>
    %172 = vector.shape_cast %171 : vector<1x4x12xf32> to vector<4x12xf32>
    %cst_120 = arith.constant dense<0.000000e+00> : vector<4x256xf32>
    %173 = tpu.matmul %172, %170, %cst_120 {dimension_numbers = #tpu.dot_dimension_numbers<[1], [0], [0], [1], [0, 0, 1, 1], [], []>} : vector<4x12xf32>, vector<12x256xf32>, vector<4x256xf32> -> vector<4x256xf32>
    %174 = arith.addf %165, %173 : vector<4x256xf32>
    %c0_121 = arith.constant 0 : index
    %c0_122 = arith.constant 0 : index
    %175 = vector.load %arg8[%c0_121, %c0_122] : memref<4x1xf32, #tpu.memory_space<vmem>>, vector<4x1xf32>
    %176 = vector.broadcast %175 : vector<4x1xf32> to vector<4x256xf32>
    %177 = arith.addf %174, %176 : vector<4x256xf32>
    %cst_123 = arith.constant 0.000000e+00 : f32
    %178 = vector.broadcast %cst_123 : f32 to vector<4x256xf32>
    %179 = arith.cmpf oge, %177, %178 : vector<4x256xf32>
    %cst_124 = arith.constant 2.000000e-01 : f32
    %180 = vector.broadcast %cst_124 : f32 to vector<4x256xf32>
    %181 = arith.mulf %180, %177 : vector<4x256xf32>
    %182 = arith.select %179, %177, %181 : vector<4x256xi1>, vector<4x256xf32>
    %c12 = arith.constant 12 : index
    %c128_125 = arith.constant 128 : index
    %183 = vector.load %arg13[%c12, %c128_125] : memref<24x512xf32, #tpu.memory_space<vmem>>, vector<4x256xf32>
    tpu.vector_store %arg13[%c12, %c128_125], %182 {strides = array<i32>} : memref<24x512xf32, #tpu.memory_space<vmem>>, vector<4x256xf32>,
    %cst_126 = arith.constant 0.000000e+00 : f32
    %184 = vector.broadcast %cst_126 : f32 to vector<4x256xf32>
    %c0_127 = arith.constant 0 : index
    %c111_128 = arith.constant 111 : index
    %185 = vector.load %arg13[%c0_127, %c111_128] : memref<24x512xf32, #tpu.memory_space<vmem>>, vector<16x256xf32>
    %cst_129 = arith.constant 0.000000e+00 : f32
    %186 = vector.shape_cast %23 : vector<1x256xi1> to vector<1x256xi1>
    %187 = vector.broadcast %186 : vector<1x256xi1> to vector<16x256xi1>
    %188 = vector.broadcast %cst_129 : f32 to vector<16x256xf32>
    %189 = arith.select %187, %185, %188 : vector<16x256xi1>, vector<16x256xf32>
    %c0_130 = arith.constant 0 : index
    %c0_131 = arith.constant 0 : index
    %c0_132 = arith.constant 0 : index
    %190 = vector.load %arg4[%c0_130, %c0_131, %c0_132] : memref<9x4x16xf32, #tpu.memory_space<vmem>>, vector<1x4x16xf32>
    %191 = vector.shape_cast %190 : vector<1x4x16xf32> to vector<4x16xf32>
    %cst_133 = arith.constant dense<0.000000e+00> : vector<4x256xf32>
    %192 = tpu.matmul %191, %189, %cst_133 {dimension_numbers = #tpu.dot_dimension_numbers<[1], [0], [0], [1], [0, 0, 1, 1], [], []>} : vector<4x16xf32>, vector<16x256xf32>, vector<4x256xf32> -> vector<4x256xf32>
    %193 = arith.addf %184, %192 : vector<4x256xf32>
    %c0_134 = arith.constant 0 : index
    %c112_135 = arith.constant 112 : index
    %194 = vector.load %arg13[%c0_134, %c112_135] : memref<24x512xf32, #tpu.memory_space<vmem>>, vector<16x256xf32>
    %c1_136 = arith.constant 1 : index
    %c0_137 = arith.constant 0 : index
    %c0_138 = arith.constant 0 : index
    %195 = vector.load %arg4[%c1_136, %c0_137, %c0_138] : memref<9x4x16xf32, #tpu.memory_space<vmem>>, vector<1x4x16xf32>
    %196 = vector.shape_cast %195 : vector<1x4x16xf32> to vector<4x16xf32>
    %cst_139 = arith.constant dense<0.000000e+00> : vector<4x256xf32>
    %197 = tpu.matmul %196, %194, %cst_139 {dimension_numbers = #tpu.dot_dimension_numbers<[1], [0], [0], [1], [0, 0, 1, 1], [], []>} : vector<4x16xf32>, vector<16x256xf32>, vector<4x256xf32> -> vector<4x256xf32>
    %198 = arith.addf %193, %197 : vector<4x256xf32>
    %c0_140 = arith.constant 0 : index
    %c113_141 = arith.constant 113 : index
    %199 = vector.load %arg13[%c0_140, %c113_141] : memref<24x512xf32, #tpu.memory_space<vmem>>, vector<16x256xf32>
    %cst_142 = arith.constant 0.000000e+00 : f32
    %200 = vector.shape_cast %25 : vector<1x256xi1> to vector<1x256xi1>
    %201 = vector.broadcast %200 : vector<1x256xi1> to vector<16x256xi1>
    %202 = vector.broadcast %cst_142 : f32 to vector<16x256xf32>
    %203 = arith.select %201, %199, %202 : vector<16x256xi1>, vector<16x256xf32>
    %c2_143 = arith.constant 2 : index
    %c0_144 = arith.constant 0 : index
    %c0_145 = arith.constant 0 : index
    %204 = vector.load %arg4[%c2_143, %c0_144, %c0_145] : memref<9x4x16xf32, #tpu.memory_space<vmem>>, vector<1x4x16xf32>
    %205 = vector.shape_cast %204 : vector<1x4x16xf32> to vector<4x16xf32>
    %cst_146 = arith.constant dense<0.000000e+00> : vector<4x256xf32>
    %206 = tpu.matmul %205, %203, %cst_146 {dimension_numbers = #tpu.dot_dimension_numbers<[1], [0], [0], [1], [0, 0, 1, 1], [], []>} : vector<4x16xf32>, vector<16x256xf32>, vector<4x256xf32> -> vector<4x256xf32>
    %207 = arith.addf %198, %206 : vector<4x256xf32>
    %c0_147 = arith.constant 0 : index
    %c127_148 = arith.constant 127 : index
    %208 = vector.load %arg13[%c0_147, %c127_148] : memref<24x512xf32, #tpu.memory_space<vmem>>, vector<16x256xf32>
    %cst_149 = arith.constant 0.000000e+00 : f32
    %209 = vector.shape_cast %23 : vector<1x256xi1> to vector<1x256xi1>
    %210 = vector.broadcast %209 : vector<1x256xi1> to vector<16x256xi1>
    %211 = vector.broadcast %cst_149 : f32 to vector<16x256xf32>
    %212 = arith.select %210, %208, %211 : vector<16x256xi1>, vector<16x256xf32>
    %c3_150 = arith.constant 3 : index
    %c0_151 = arith.constant 0 : index
    %c0_152 = arith.constant 0 : index
    %213 = vector.load %arg4[%c3_150, %c0_151, %c0_152] : memref<9x4x16xf32, #tpu.memory_space<vmem>>, vector<1x4x16xf32>
    %214 = vector.shape_cast %213 : vector<1x4x16xf32> to vector<4x16xf32>
    %cst_153 = arith.constant dense<0.000000e+00> : vector<4x256xf32>
    %215 = tpu.matmul %214, %212, %cst_153 {dimension_numbers = #tpu.dot_dimension_numbers<[1], [0], [0], [1], [0, 0, 1, 1], [], []>} : vector<4x16xf32>, vector<16x256xf32>, vector<4x256xf32> -> vector<4x256xf32>
    %216 = arith.addf %207, %215 : vector<4x256xf32>
    %c0_154 = arith.constant 0 : index
    %c128_155 = arith.constant 128 : index
    %217 = vector.load %arg13[%c0_154, %c128_155] : memref<24x512xf32, #tpu.memory_space<vmem>>, vector<16x256xf32>
    %c4_156 = arith.constant 4 : index
    %c0_157 = arith.constant 0 : index
    %c0_158 = arith.constant 0 : index
    %218 = vector.load %arg4[%c4_156, %c0_157, %c0_158] : memref<9x4x16xf32, #tpu.memory_space<vmem>>, vector<1x4x16xf32>
    %219 = vector.shape_cast %218 : vector<1x4x16xf32> to vector<4x16xf32>
    %cst_159 = arith.constant dense<0.000000e+00> : vector<4x256xf32>
    %220 = tpu.matmul %219, %217, %cst_159 {dimension_numbers = #tpu.dot_dimension_numbers<[1], [0], [0], [1], [0, 0, 1, 1], [], []>} : vector<4x16xf32>, vector<16x256xf32>, vector<4x256xf32> -> vector<4x256xf32>
    %221 = arith.addf %216, %220 : vector<4x256xf32>
    %c0_160 = arith.constant 0 : index
    %c129_161 = arith.constant 129 : index
    %222 = vector.load %arg13[%c0_160, %c129_161] : memref<24x512xf32, #tpu.memory_space<vmem>>, vector<16x256xf32>
    %cst_162 = arith.constant 0.000000e+00 : f32
    %223 = vector.shape_cast %25 : vector<1x256xi1> to vector<1x256xi1>
    %224 = vector.broadcast %223 : vector<1x256xi1> to vector<16x256xi1>
    %225 = vector.broadcast %cst_162 : f32 to vector<16x256xf32>
    %226 = arith.select %224, %222, %225 : vector<16x256xi1>, vector<16x256xf32>
    %c5_163 = arith.constant 5 : index
    %c0_164 = arith.constant 0 : index
    %c0_165 = arith.constant 0 : index
    %227 = vector.load %arg4[%c5_163, %c0_164, %c0_165] : memref<9x4x16xf32, #tpu.memory_space<vmem>>, vector<1x4x16xf32>
    %228 = vector.shape_cast %227 : vector<1x4x16xf32> to vector<4x16xf32>
    %cst_166 = arith.constant dense<0.000000e+00> : vector<4x256xf32>
    %229 = tpu.matmul %228, %226, %cst_166 {dimension_numbers = #tpu.dot_dimension_numbers<[1], [0], [0], [1], [0, 0, 1, 1], [], []>} : vector<4x16xf32>, vector<16x256xf32>, vector<4x256xf32> -> vector<4x256xf32>
    %230 = arith.addf %221, %229 : vector<4x256xf32>
    %c0_167 = arith.constant 0 : index
    %c143_168 = arith.constant 143 : index
    %231 = vector.load %arg13[%c0_167, %c143_168] : memref<24x512xf32, #tpu.memory_space<vmem>>, vector<16x256xf32>
    %cst_169 = arith.constant 0.000000e+00 : f32
    %232 = vector.shape_cast %23 : vector<1x256xi1> to vector<1x256xi1>
    %233 = vector.broadcast %232 : vector<1x256xi1> to vector<16x256xi1>
    %234 = vector.broadcast %cst_169 : f32 to vector<16x256xf32>
    %235 = arith.select %233, %231, %234 : vector<16x256xi1>, vector<16x256xf32>
    %c6_170 = arith.constant 6 : index
    %c0_171 = arith.constant 0 : index
    %c0_172 = arith.constant 0 : index
    %236 = vector.load %arg4[%c6_170, %c0_171, %c0_172] : memref<9x4x16xf32, #tpu.memory_space<vmem>>, vector<1x4x16xf32>
    %237 = vector.shape_cast %236 : vector<1x4x16xf32> to vector<4x16xf32>
    %cst_173 = arith.constant dense<0.000000e+00> : vector<4x256xf32>
    %238 = tpu.matmul %237, %235, %cst_173 {dimension_numbers = #tpu.dot_dimension_numbers<[1], [0], [0], [1], [0, 0, 1, 1], [], []>} : vector<4x16xf32>, vector<16x256xf32>, vector<4x256xf32> -> vector<4x256xf32>
    %239 = arith.addf %230, %238 : vector<4x256xf32>
    %c0_174 = arith.constant 0 : index
    %c144_175 = arith.constant 144 : index
    %240 = vector.load %arg13[%c0_174, %c144_175] : memref<24x512xf32, #tpu.memory_space<vmem>>, vector<16x256xf32>
    %c7_176 = arith.constant 7 : index
    %c0_177 = arith.constant 0 : index
    %c0_178 = arith.constant 0 : index
    %241 = vector.load %arg4[%c7_176, %c0_177, %c0_178] : memref<9x4x16xf32, #tpu.memory_space<vmem>>, vector<1x4x16xf32>
    %242 = vector.shape_cast %241 : vector<1x4x16xf32> to vector<4x16xf32>
    %cst_179 = arith.constant dense<0.000000e+00> : vector<4x256xf32>
    %243 = tpu.matmul %242, %240, %cst_179 {dimension_numbers = #tpu.dot_dimension_numbers<[1], [0], [0], [1], [0, 0, 1, 1], [], []>} : vector<4x16xf32>, vector<16x256xf32>, vector<4x256xf32> -> vector<4x256xf32>
    %244 = arith.addf %239, %243 : vector<4x256xf32>
    %c0_180 = arith.constant 0 : index
    %c145_181 = arith.constant 145 : index
    %245 = vector.load %arg13[%c0_180, %c145_181] : memref<24x512xf32, #tpu.memory_space<vmem>>, vector<16x256xf32>
    %cst_182 = arith.constant 0.000000e+00 : f32
    %246 = vector.shape_cast %25 : vector<1x256xi1> to vector<1x256xi1>
    %247 = vector.broadcast %246 : vector<1x256xi1> to vector<16x256xi1>
    %248 = vector.broadcast %cst_182 : f32 to vector<16x256xf32>
    %249 = arith.select %247, %245, %248 : vector<16x256xi1>, vector<16x256xf32>
    %c8_183 = arith.constant 8 : index
    %c0_184 = arith.constant 0 : index
    %c0_185 = arith.constant 0 : index
    %250 = vector.load %arg4[%c8_183, %c0_184, %c0_185] : memref<9x4x16xf32, #tpu.memory_space<vmem>>, vector<1x4x16xf32>
    %251 = vector.shape_cast %250 : vector<1x4x16xf32> to vector<4x16xf32>
    %cst_186 = arith.constant dense<0.000000e+00> : vector<4x256xf32>
    %252 = tpu.matmul %251, %249, %cst_186 {dimension_numbers = #tpu.dot_dimension_numbers<[1], [0], [0], [1], [0, 0, 1, 1], [], []>} : vector<4x16xf32>, vector<16x256xf32>, vector<4x256xf32> -> vector<4x256xf32>
    %253 = arith.addf %244, %252 : vector<4x256xf32>
    %c0_187 = arith.constant 0 : index
    %c0_188 = arith.constant 0 : index
    %254 = vector.load %arg9[%c0_187, %c0_188] : memref<4x1xf32, #tpu.memory_space<vmem>>, vector<4x1xf32>
    %255 = vector.broadcast %254 : vector<4x1xf32> to vector<4x256xf32>
    %256 = arith.addf %253, %255 : vector<4x256xf32>
    %cst_189 = arith.constant 0.000000e+00 : f32
    %257 = vector.broadcast %cst_189 : f32 to vector<4x256xf32>
    %258 = arith.cmpf oge, %256, %257 : vector<4x256xf32>
    %cst_190 = arith.constant 2.000000e-01 : f32
    %259 = vector.broadcast %cst_190 : f32 to vector<4x256xf32>
    %260 = arith.mulf %259, %256 : vector<4x256xf32>
    %261 = arith.select %258, %256, %260 : vector<4x256xi1>, vector<4x256xf32>
    %c16 = arith.constant 16 : index
    %c128_191 = arith.constant 128 : index
    %262 = vector.load %arg13[%c16, %c128_191] : memref<24x512xf32, #tpu.memory_space<vmem>>, vector<4x256xf32>
    tpu.vector_store %arg13[%c16, %c128_191], %261 {strides = array<i32>} : memref<24x512xf32, #tpu.memory_space<vmem>>, vector<4x256xf32>,
    %cst_192 = arith.constant 0.000000e+00 : f32
    %263 = vector.broadcast %cst_192 : f32 to vector<4x256xf32>
    %c0_193 = arith.constant 0 : index
    %c111_194 = arith.constant 111 : index
    %264 = vector.load %arg13[%c0_193, %c111_194] : memref<24x512xf32, #tpu.memory_space<vmem>>, vector<20x256xf32>
    %cst_195 = arith.constant 0.000000e+00 : f32
    %265 = vector.shape_cast %23 : vector<1x256xi1> to vector<1x256xi1>
    %266 = vector.broadcast %265 : vector<1x256xi1> to vector<20x256xi1>
    %267 = vector.broadcast %cst_195 : f32 to vector<20x256xf32>
    %268 = arith.select %266, %264, %267 : vector<20x256xi1>, vector<20x256xf32>
    %c0_196 = arith.constant 0 : index
    %c0_197 = arith.constant 0 : index
    %c0_198 = arith.constant 0 : index
    %269 = vector.load %arg5[%c0_196, %c0_197, %c0_198] : memref<9x4x20xf32, #tpu.memory_space<vmem>>, vector<1x4x20xf32>
    %270 = vector.shape_cast %269 : vector<1x4x20xf32> to vector<4x20xf32>
    %cst_199 = arith.constant dense<0.000000e+00> : vector<4x256xf32>
    %271 = tpu.matmul %270, %268, %cst_199 {dimension_numbers = #tpu.dot_dimension_numbers<[1], [0], [0], [1], [0, 0, 1, 1], [], []>} : vector<4x20xf32>, vector<20x256xf32>, vector<4x256xf32> -> vector<4x256xf32>
    %272 = arith.addf %263, %271 : vector<4x256xf32>
    %c0_200 = arith.constant 0 : index
    %c112_201 = arith.constant 112 : index
    %273 = vector.load %arg13[%c0_200, %c112_201] : memref<24x512xf32, #tpu.memory_space<vmem>>, vector<20x256xf32>
    %c1_202 = arith.constant 1 : index
    %c0_203 = arith.constant 0 : index
    %c0_204 = arith.constant 0 : index
    %274 = vector.load %arg5[%c1_202, %c0_203, %c0_204] : memref<9x4x20xf32, #tpu.memory_space<vmem>>, vector<1x4x20xf32>
    %275 = vector.shape_cast %274 : vector<1x4x20xf32> to vector<4x20xf32>
    %cst_205 = arith.constant dense<0.000000e+00> : vector<4x256xf32>
    %276 = tpu.matmul %275, %273, %cst_205 {dimension_numbers = #tpu.dot_dimension_numbers<[1], [0], [0], [1], [0, 0, 1, 1], [], []>} : vector<4x20xf32>, vector<20x256xf32>, vector<4x256xf32> -> vector<4x256xf32>
    %277 = arith.addf %272, %276 : vector<4x256xf32>
    %c0_206 = arith.constant 0 : index
    %c113_207 = arith.constant 113 : index
    %278 = vector.load %arg13[%c0_206, %c113_207] : memref<24x512xf32, #tpu.memory_space<vmem>>, vector<20x256xf32>
    %cst_208 = arith.constant 0.000000e+00 : f32
    %279 = vector.shape_cast %25 : vector<1x256xi1> to vector<1x256xi1>
    %280 = vector.broadcast %279 : vector<1x256xi1> to vector<20x256xi1>
    %281 = vector.broadcast %cst_208 : f32 to vector<20x256xf32>
    %282 = arith.select %280, %278, %281 : vector<20x256xi1>, vector<20x256xf32>
    %c2_209 = arith.constant 2 : index
    %c0_210 = arith.constant 0 : index
    %c0_211 = arith.constant 0 : index
    %283 = vector.load %arg5[%c2_209, %c0_210, %c0_211] : memref<9x4x20xf32, #tpu.memory_space<vmem>>, vector<1x4x20xf32>
    %284 = vector.shape_cast %283 : vector<1x4x20xf32> to vector<4x20xf32>
    %cst_212 = arith.constant dense<0.000000e+00> : vector<4x256xf32>
    %285 = tpu.matmul %284, %282, %cst_212 {dimension_numbers = #tpu.dot_dimension_numbers<[1], [0], [0], [1], [0, 0, 1, 1], [], []>} : vector<4x20xf32>, vector<20x256xf32>, vector<4x256xf32> -> vector<4x256xf32>
    %286 = arith.addf %277, %285 : vector<4x256xf32>
    %c0_213 = arith.constant 0 : index
    %c127_214 = arith.constant 127 : index
    %287 = vector.load %arg13[%c0_213, %c127_214] : memref<24x512xf32, #tpu.memory_space<vmem>>, vector<20x256xf32>
    %cst_215 = arith.constant 0.000000e+00 : f32
    %288 = vector.shape_cast %23 : vector<1x256xi1> to vector<1x256xi1>
    %289 = vector.broadcast %288 : vector<1x256xi1> to vector<20x256xi1>
    %290 = vector.broadcast %cst_215 : f32 to vector<20x256xf32>
    %291 = arith.select %289, %287, %290 : vector<20x256xi1>, vector<20x256xf32>
    %c3_216 = arith.constant 3 : index
    %c0_217 = arith.constant 0 : index
    %c0_218 = arith.constant 0 : index
    %292 = vector.load %arg5[%c3_216, %c0_217, %c0_218] : memref<9x4x20xf32, #tpu.memory_space<vmem>>, vector<1x4x20xf32>
    %293 = vector.shape_cast %292 : vector<1x4x20xf32> to vector<4x20xf32>
    %cst_219 = arith.constant dense<0.000000e+00> : vector<4x256xf32>
    %294 = tpu.matmul %293, %291, %cst_219 {dimension_numbers = #tpu.dot_dimension_numbers<[1], [0], [0], [1], [0, 0, 1, 1], [], []>} : vector<4x20xf32>, vector<20x256xf32>, vector<4x256xf32> -> vector<4x256xf32>
    %295 = arith.addf %286, %294 : vector<4x256xf32>
    %c0_220 = arith.constant 0 : index
    %c128_221 = arith.constant 128 : index
    %296 = vector.load %arg13[%c0_220, %c128_221] : memref<24x512xf32, #tpu.memory_space<vmem>>, vector<20x256xf32>
    %c4_222 = arith.constant 4 : index
    %c0_223 = arith.constant 0 : index
    %c0_224 = arith.constant 0 : index
    %297 = vector.load %arg5[%c4_222, %c0_223, %c0_224] : memref<9x4x20xf32, #tpu.memory_space<vmem>>, vector<1x4x20xf32>
    %298 = vector.shape_cast %297 : vector<1x4x20xf32> to vector<4x20xf32>
    %cst_225 = arith.constant dense<0.000000e+00> : vector<4x256xf32>
    %299 = tpu.matmul %298, %296, %cst_225 {dimension_numbers = #tpu.dot_dimension_numbers<[1], [0], [0], [1], [0, 0, 1, 1], [], []>} : vector<4x20xf32>, vector<20x256xf32>, vector<4x256xf32> -> vector<4x256xf32>
    %300 = arith.addf %295, %299 : vector<4x256xf32>
    %c0_226 = arith.constant 0 : index
    %c129_227 = arith.constant 129 : index
    %301 = vector.load %arg13[%c0_226, %c129_227] : memref<24x512xf32, #tpu.memory_space<vmem>>, vector<20x256xf32>
    %cst_228 = arith.constant 0.000000e+00 : f32
    %302 = vector.shape_cast %25 : vector<1x256xi1> to vector<1x256xi1>
    %303 = vector.broadcast %302 : vector<1x256xi1> to vector<20x256xi1>
    %304 = vector.broadcast %cst_228 : f32 to vector<20x256xf32>
    %305 = arith.select %303, %301, %304 : vector<20x256xi1>, vector<20x256xf32>
    %c5_229 = arith.constant 5 : index
    %c0_230 = arith.constant 0 : index
    %c0_231 = arith.constant 0 : index
    %306 = vector.load %arg5[%c5_229, %c0_230, %c0_231] : memref<9x4x20xf32, #tpu.memory_space<vmem>>, vector<1x4x20xf32>
    %307 = vector.shape_cast %306 : vector<1x4x20xf32> to vector<4x20xf32>
    %cst_232 = arith.constant dense<0.000000e+00> : vector<4x256xf32>
    %308 = tpu.matmul %307, %305, %cst_232 {dimension_numbers = #tpu.dot_dimension_numbers<[1], [0], [0], [1], [0, 0, 1, 1], [], []>} : vector<4x20xf32>, vector<20x256xf32>, vector<4x256xf32> -> vector<4x256xf32>
    %309 = arith.addf %300, %308 : vector<4x256xf32>
    %c0_233 = arith.constant 0 : index
    %c143_234 = arith.constant 143 : index
    %310 = vector.load %arg13[%c0_233, %c143_234] : memref<24x512xf32, #tpu.memory_space<vmem>>, vector<20x256xf32>
    %cst_235 = arith.constant 0.000000e+00 : f32
    %311 = vector.shape_cast %23 : vector<1x256xi1> to vector<1x256xi1>
    %312 = vector.broadcast %311 : vector<1x256xi1> to vector<20x256xi1>
    %313 = vector.broadcast %cst_235 : f32 to vector<20x256xf32>
    %314 = arith.select %312, %310, %313 : vector<20x256xi1>, vector<20x256xf32>
    %c6_236 = arith.constant 6 : index
    %c0_237 = arith.constant 0 : index
    %c0_238 = arith.constant 0 : index
    %315 = vector.load %arg5[%c6_236, %c0_237, %c0_238] : memref<9x4x20xf32, #tpu.memory_space<vmem>>, vector<1x4x20xf32>
    %316 = vector.shape_cast %315 : vector<1x4x20xf32> to vector<4x20xf32>
    %cst_239 = arith.constant dense<0.000000e+00> : vector<4x256xf32>
    %317 = tpu.matmul %316, %314, %cst_239 {dimension_numbers = #tpu.dot_dimension_numbers<[1], [0], [0], [1], [0, 0, 1, 1], [], []>} : vector<4x20xf32>, vector<20x256xf32>, vector<4x256xf32> -> vector<4x256xf32>
    %318 = arith.addf %309, %317 : vector<4x256xf32>
    %c0_240 = arith.constant 0 : index
    %c144_241 = arith.constant 144 : index
    %319 = vector.load %arg13[%c0_240, %c144_241] : memref<24x512xf32, #tpu.memory_space<vmem>>, vector<20x256xf32>
    %c7_242 = arith.constant 7 : index
    %c0_243 = arith.constant 0 : index
    %c0_244 = arith.constant 0 : index
    %320 = vector.load %arg5[%c7_242, %c0_243, %c0_244] : memref<9x4x20xf32, #tpu.memory_space<vmem>>, vector<1x4x20xf32>
    %321 = vector.shape_cast %320 : vector<1x4x20xf32> to vector<4x20xf32>
    %cst_245 = arith.constant dense<0.000000e+00> : vector<4x256xf32>
    %322 = tpu.matmul %321, %319, %cst_245 {dimension_numbers = #tpu.dot_dimension_numbers<[1], [0], [0], [1], [0, 0, 1, 1], [], []>} : vector<4x20xf32>, vector<20x256xf32>, vector<4x256xf32> -> vector<4x256xf32>
    %323 = arith.addf %318, %322 : vector<4x256xf32>
    %c0_246 = arith.constant 0 : index
    %c145_247 = arith.constant 145 : index
    %324 = vector.load %arg13[%c0_246, %c145_247] : memref<24x512xf32, #tpu.memory_space<vmem>>, vector<20x256xf32>
    %cst_248 = arith.constant 0.000000e+00 : f32
    %325 = vector.shape_cast %25 : vector<1x256xi1> to vector<1x256xi1>
    %326 = vector.broadcast %325 : vector<1x256xi1> to vector<20x256xi1>
    %327 = vector.broadcast %cst_248 : f32 to vector<20x256xf32>
    %328 = arith.select %326, %324, %327 : vector<20x256xi1>, vector<20x256xf32>
    %c8_249 = arith.constant 8 : index
    %c0_250 = arith.constant 0 : index
    %c0_251 = arith.constant 0 : index
    %329 = vector.load %arg5[%c8_249, %c0_250, %c0_251] : memref<9x4x20xf32, #tpu.memory_space<vmem>>, vector<1x4x20xf32>
    %330 = vector.shape_cast %329 : vector<1x4x20xf32> to vector<4x20xf32>
    %cst_252 = arith.constant dense<0.000000e+00> : vector<4x256xf32>
    %331 = tpu.matmul %330, %328, %cst_252 {dimension_numbers = #tpu.dot_dimension_numbers<[1], [0], [0], [1], [0, 0, 1, 1], [], []>} : vector<4x20xf32>, vector<20x256xf32>, vector<4x256xf32> -> vector<4x256xf32>
    %332 = arith.addf %323, %331 : vector<4x256xf32>
    %c0_253 = arith.constant 0 : index
    %c0_254 = arith.constant 0 : index
    %333 = vector.load %arg10[%c0_253, %c0_254] : memref<4x1xf32, #tpu.memory_space<vmem>>, vector<4x1xf32>
    %334 = vector.broadcast %333 : vector<4x1xf32> to vector<4x256xf32>
    %335 = arith.addf %332, %334 : vector<4x256xf32>
    %cst_255 = arith.constant 0.000000e+00 : f32
    %336 = vector.broadcast %cst_255 : f32 to vector<4x256xf32>
    %337 = arith.cmpf oge, %335, %336 : vector<4x256xf32>
    %cst_256 = arith.constant 2.000000e-01 : f32
    %338 = vector.broadcast %cst_256 : f32 to vector<4x256xf32>
    %339 = arith.mulf %338, %335 : vector<4x256xf32>
    %340 = arith.select %337, %335, %339 : vector<4x256xi1>, vector<4x256xf32>
    %c20 = arith.constant 20 : index
    %c128_257 = arith.constant 128 : index
    %341 = vector.load %arg13[%c20, %c128_257] : memref<24x512xf32, #tpu.memory_space<vmem>>, vector<4x256xf32>
    tpu.vector_store %arg13[%c20, %c128_257], %340 {strides = array<i32>} : memref<24x512xf32, #tpu.memory_space<vmem>>, vector<4x256xf32>,
    %cst_258 = arith.constant 0.000000e+00 : f32
    %342 = vector.broadcast %cst_258 : f32 to vector<8x256xf32>
    %c0_259 = arith.constant 0 : index
    %c111_260 = arith.constant 111 : index
    %343 = vector.load %arg13[%c0_259, %c111_260] : memref<24x512xf32, #tpu.memory_space<vmem>>, vector<24x256xf32>
    %cst_261 = arith.constant 0.000000e+00 : f32
    %344 = vector.shape_cast %23 : vector<1x256xi1> to vector<1x256xi1>
    %345 = vector.broadcast %344 : vector<1x256xi1> to vector<24x256xi1>
    %346 = vector.broadcast %cst_261 : f32 to vector<24x256xf32>
    %347 = arith.select %345, %343, %346 : vector<24x256xi1>, vector<24x256xf32>
    %c0_262 = arith.constant 0 : index
    %c0_263 = arith.constant 0 : index
    %c0_264 = arith.constant 0 : index
    %348 = vector.load %arg6[%c0_262, %c0_263, %c0_264] : memref<9x8x24xf32, #tpu.memory_space<vmem>>, vector<1x8x24xf32>
    %349 = vector.shape_cast %348 : vector<1x8x24xf32> to vector<8x24xf32>
    %cst_265 = arith.constant dense<0.000000e+00> : vector<8x256xf32>
    %350 = tpu.matmul %349, %347, %cst_265 {dimension_numbers = #tpu.dot_dimension_numbers<[1], [0], [0], [1], [0, 0, 1, 1], [], []>} : vector<8x24xf32>, vector<24x256xf32>, vector<8x256xf32> -> vector<8x256xf32>
    %351 = arith.addf %342, %350 : vector<8x256xf32>
    %c0_266 = arith.constant 0 : index
    %c112_267 = arith.constant 112 : index
    %352 = vector.load %arg13[%c0_266, %c112_267] : memref<24x512xf32, #tpu.memory_space<vmem>>, vector<24x256xf32>
    %c1_268 = arith.constant 1 : index
    %c0_269 = arith.constant 0 : index
    %c0_270 = arith.constant 0 : index
    %353 = vector.load %arg6[%c1_268, %c0_269, %c0_270] : memref<9x8x24xf32, #tpu.memory_space<vmem>>, vector<1x8x24xf32>
    %354 = vector.shape_cast %353 : vector<1x8x24xf32> to vector<8x24xf32>
    %cst_271 = arith.constant dense<0.000000e+00> : vector<8x256xf32>
    %355 = tpu.matmul %354, %352, %cst_271 {dimension_numbers = #tpu.dot_dimension_numbers<[1], [0], [0], [1], [0, 0, 1, 1], [], []>} : vector<8x24xf32>, vector<24x256xf32>, vector<8x256xf32> -> vector<8x256xf32>
    %356 = arith.addf %351, %355 : vector<8x256xf32>
    %c0_272 = arith.constant 0 : index
    %c113_273 = arith.constant 113 : index
    %357 = vector.load %arg13[%c0_272, %c113_273] : memref<24x512xf32, #tpu.memory_space<vmem>>, vector<24x256xf32>
    %cst_274 = arith.constant 0.000000e+00 : f32
    %358 = vector.shape_cast %25 : vector<1x256xi1> to vector<1x256xi1>
    %359 = vector.broadcast %358 : vector<1x256xi1> to vector<24x256xi1>
    %360 = vector.broadcast %cst_274 : f32 to vector<24x256xf32>
    %361 = arith.select %359, %357, %360 : vector<24x256xi1>, vector<24x256xf32>
    %c2_275 = arith.constant 2 : index
    %c0_276 = arith.constant 0 : index
    %c0_277 = arith.constant 0 : index
    %362 = vector.load %arg6[%c2_275, %c0_276, %c0_277] : memref<9x8x24xf32, #tpu.memory_space<vmem>>, vector<1x8x24xf32>
    %363 = vector.shape_cast %362 : vector<1x8x24xf32> to vector<8x24xf32>
    %cst_278 = arith.constant dense<0.000000e+00> : vector<8x256xf32>
    %364 = tpu.matmul %363, %361, %cst_278 {dimension_numbers = #tpu.dot_dimension_numbers<[1], [0], [0], [1], [0, 0, 1, 1], [], []>} : vector<8x24xf32>, vector<24x256xf32>, vector<8x256xf32> -> vector<8x256xf32>
    %365 = arith.addf %356, %364 : vector<8x256xf32>
    %c0_279 = arith.constant 0 : index
    %c127_280 = arith.constant 127 : index
    %366 = vector.load %arg13[%c0_279, %c127_280] : memref<24x512xf32, #tpu.memory_space<vmem>>, vector<24x256xf32>
    %cst_281 = arith.constant 0.000000e+00 : f32
    %367 = vector.shape_cast %23 : vector<1x256xi1> to vector<1x256xi1>
    %368 = vector.broadcast %367 : vector<1x256xi1> to vector<24x256xi1>
    %369 = vector.broadcast %cst_281 : f32 to vector<24x256xf32>
    %370 = arith.select %368, %366, %369 : vector<24x256xi1>, vector<24x256xf32>
    %c3_282 = arith.constant 3 : index
    %c0_283 = arith.constant 0 : index
    %c0_284 = arith.constant 0 : index
    %371 = vector.load %arg6[%c3_282, %c0_283, %c0_284] : memref<9x8x24xf32, #tpu.memory_space<vmem>>, vector<1x8x24xf32>
    %372 = vector.shape_cast %371 : vector<1x8x24xf32> to vector<8x24xf32>
    %cst_285 = arith.constant dense<0.000000e+00> : vector<8x256xf32>
    %373 = tpu.matmul %372, %370, %cst_285 {dimension_numbers = #tpu.dot_dimension_numbers<[1], [0], [0], [1], [0, 0, 1, 1], [], []>} : vector<8x24xf32>, vector<24x256xf32>, vector<8x256xf32> -> vector<8x256xf32>
    %374 = arith.addf %365, %373 : vector<8x256xf32>
    %c0_286 = arith.constant 0 : index
    %c128_287 = arith.constant 128 : index
    %375 = vector.load %arg13[%c0_286, %c128_287] : memref<24x512xf32, #tpu.memory_space<vmem>>, vector<24x256xf32>
    %c4_288 = arith.constant 4 : index
    %c0_289 = arith.constant 0 : index
    %c0_290 = arith.constant 0 : index
    %376 = vector.load %arg6[%c4_288, %c0_289, %c0_290] : memref<9x8x24xf32, #tpu.memory_space<vmem>>, vector<1x8x24xf32>
    %377 = vector.shape_cast %376 : vector<1x8x24xf32> to vector<8x24xf32>
    %cst_291 = arith.constant dense<0.000000e+00> : vector<8x256xf32>
    %378 = tpu.matmul %377, %375, %cst_291 {dimension_numbers = #tpu.dot_dimension_numbers<[1], [0], [0], [1], [0, 0, 1, 1], [], []>} : vector<8x24xf32>, vector<24x256xf32>, vector<8x256xf32> -> vector<8x256xf32>
    %379 = arith.addf %374, %378 : vector<8x256xf32>
    %c0_292 = arith.constant 0 : index
    %c129_293 = arith.constant 129 : index
    %380 = vector.load %arg13[%c0_292, %c129_293] : memref<24x512xf32, #tpu.memory_space<vmem>>, vector<24x256xf32>
    %cst_294 = arith.constant 0.000000e+00 : f32
    %381 = vector.shape_cast %25 : vector<1x256xi1> to vector<1x256xi1>
    %382 = vector.broadcast %381 : vector<1x256xi1> to vector<24x256xi1>
    %383 = vector.broadcast %cst_294 : f32 to vector<24x256xf32>
    %384 = arith.select %382, %380, %383 : vector<24x256xi1>, vector<24x256xf32>
    %c5_295 = arith.constant 5 : index
    %c0_296 = arith.constant 0 : index
    %c0_297 = arith.constant 0 : index
    %385 = vector.load %arg6[%c5_295, %c0_296, %c0_297] : memref<9x8x24xf32, #tpu.memory_space<vmem>>, vector<1x8x24xf32>
    %386 = vector.shape_cast %385 : vector<1x8x24xf32> to vector<8x24xf32>
    %cst_298 = arith.constant dense<0.000000e+00> : vector<8x256xf32>
    %387 = tpu.matmul %386, %384, %cst_298 {dimension_numbers = #tpu.dot_dimension_numbers<[1], [0], [0], [1], [0, 0, 1, 1], [], []>} : vector<8x24xf32>, vector<24x256xf32>, vector<8x256xf32> -> vector<8x256xf32>
    %388 = arith.addf %379, %387 : vector<8x256xf32>
    %c0_299 = arith.constant 0 : index
    %c143_300 = arith.constant 143 : index
    %389 = vector.load %arg13[%c0_299, %c143_300] : memref<24x512xf32, #tpu.memory_space<vmem>>, vector<24x256xf32>
    %cst_301 = arith.constant 0.000000e+00 : f32
    %390 = vector.shape_cast %23 : vector<1x256xi1> to vector<1x256xi1>
    %391 = vector.broadcast %390 : vector<1x256xi1> to vector<24x256xi1>
    %392 = vector.broadcast %cst_301 : f32 to vector<24x256xf32>
    %393 = arith.select %391, %389, %392 : vector<24x256xi1>, vector<24x256xf32>
    %c6_302 = arith.constant 6 : index
    %c0_303 = arith.constant 0 : index
    %c0_304 = arith.constant 0 : index
    %394 = vector.load %arg6[%c6_302, %c0_303, %c0_304] : memref<9x8x24xf32, #tpu.memory_space<vmem>>, vector<1x8x24xf32>
    %395 = vector.shape_cast %394 : vector<1x8x24xf32> to vector<8x24xf32>
    %cst_305 = arith.constant dense<0.000000e+00> : vector<8x256xf32>
    %396 = tpu.matmul %395, %393, %cst_305 {dimension_numbers = #tpu.dot_dimension_numbers<[1], [0], [0], [1], [0, 0, 1, 1], [], []>} : vector<8x24xf32>, vector<24x256xf32>, vector<8x256xf32> -> vector<8x256xf32>
    %397 = arith.addf %388, %396 : vector<8x256xf32>
    %c0_306 = arith.constant 0 : index
    %c144_307 = arith.constant 144 : index
    %398 = vector.load %arg13[%c0_306, %c144_307] : memref<24x512xf32, #tpu.memory_space<vmem>>, vector<24x256xf32>
    %c7_308 = arith.constant 7 : index
    %c0_309 = arith.constant 0 : index
    %c0_310 = arith.constant 0 : index
    %399 = vector.load %arg6[%c7_308, %c0_309, %c0_310] : memref<9x8x24xf32, #tpu.memory_space<vmem>>, vector<1x8x24xf32>
    %400 = vector.shape_cast %399 : vector<1x8x24xf32> to vector<8x24xf32>
    %cst_311 = arith.constant dense<0.000000e+00> : vector<8x256xf32>
    %401 = tpu.matmul %400, %398, %cst_311 {dimension_numbers = #tpu.dot_dimension_numbers<[1], [0], [0], [1], [0, 0, 1, 1], [], []>} : vector<8x24xf32>, vector<24x256xf32>, vector<8x256xf32> -> vector<8x256xf32>
    %402 = arith.addf %397, %401 : vector<8x256xf32>
    %c0_312 = arith.constant 0 : index
    %c145_313 = arith.constant 145 : index
    %403 = vector.load %arg13[%c0_312, %c145_313] : memref<24x512xf32, #tpu.memory_space<vmem>>, vector<24x256xf32>
    %cst_314 = arith.constant 0.000000e+00 : f32
    %404 = vector.shape_cast %25 : vector<1x256xi1> to vector<1x256xi1>
    %405 = vector.broadcast %404 : vector<1x256xi1> to vector<24x256xi1>
    %406 = vector.broadcast %cst_314 : f32 to vector<24x256xf32>
    %407 = arith.select %405, %403, %406 : vector<24x256xi1>, vector<24x256xf32>
    %c8_315 = arith.constant 8 : index
    %c0_316 = arith.constant 0 : index
    %c0_317 = arith.constant 0 : index
    %408 = vector.load %arg6[%c8_315, %c0_316, %c0_317] : memref<9x8x24xf32, #tpu.memory_space<vmem>>, vector<1x8x24xf32>
    %409 = vector.shape_cast %408 : vector<1x8x24xf32> to vector<8x24xf32>
    %cst_318 = arith.constant dense<0.000000e+00> : vector<8x256xf32>
    %410 = tpu.matmul %409, %407, %cst_318 {dimension_numbers = #tpu.dot_dimension_numbers<[1], [0], [0], [1], [0, 0, 1, 1], [], []>} : vector<8x24xf32>, vector<24x256xf32>, vector<8x256xf32> -> vector<8x256xf32>
    %411 = arith.addf %402, %410 : vector<8x256xf32>
    %c0_319 = arith.constant 0 : index
    %c0_320 = arith.constant 0 : index
    %412 = vector.load %arg11[%c0_319, %c0_320] : memref<8x1xf32, #tpu.memory_space<vmem>>, vector<8x1xf32>
    %413 = vector.broadcast %412 : vector<8x1xf32> to vector<8x256xf32>
    %414 = arith.addf %411, %413 : vector<8x256xf32>
    %cst_321 = arith.constant 2.000000e-01 : f32
    %415 = vector.broadcast %cst_321 : f32 to vector<8x256xf32>
    %416 = arith.mulf %414, %415 : vector<8x256xf32>
    %c0_322 = arith.constant 0 : index
    %c128_323 = arith.constant 128 : index
    %417 = vector.load %arg13[%c0_322, %c128_323] : memref<24x512xf32, #tpu.memory_space<vmem>>, vector<8x256xf32>
    %418 = arith.addf %416, %417 : vector<8x256xf32>
    %c0_324 = arith.constant 0 : index
    %c0_325 = arith.constant 0 : index
    %c0_326 = arith.constant 0 : index
    %419 = vector.load %arg12[%c0_324, %c0_325, %c0_326] : memref<1x8x256xf32, #tpu.memory_space<vmem>>, vector<1x8x256xf32>
    %420 = vector.shape_cast %419 : vector<1x8x256xf32> to vector<8x256xf32>
    %421 = vector.shape_cast %418 : vector<8x256xf32> to vector<1x8x256xf32>
    tpu.vector_store %arg12[%c0_324, %c0_325, %c0_326], %421 {strides = array<i32>} : memref<1x8x256xf32, #tpu.memory_space<vmem>>, vector<1x8x256xf32>,
    return
  }
  func.func @transform_0(%arg0: i32) -> (i32, i32, i32) {
    %c0_i32 = arith.constant 0 : i32
    %c0_i32_0 = arith.constant 0 : i32
    %c0_i32_1 = arith.constant 0 : i32
    return %arg0, %c0_i32, %c0_i32_0 : i32, i32, i32
  }
  func.func @transform_1(%arg0: i32) -> (i32, i32, i32) {
    %c0_i32 = arith.constant 0 : i32
    %c0_i32_0 = arith.constant 0 : i32
    %c0_i32_1 = arith.constant 0 : i32
    %c0_i32_2 = arith.constant 0 : i32
    return %c0_i32, %c0_i32_0, %c0_i32_1 : i32, i32, i32
  }
  func.func @transform_2(%arg0: i32) -> (i32, i32, i32) {
    %c0_i32 = arith.constant 0 : i32
    %c0_i32_0 = arith.constant 0 : i32
    %c0_i32_1 = arith.constant 0 : i32
    %c0_i32_2 = arith.constant 0 : i32
    return %c0_i32, %c0_i32_0, %c0_i32_1 : i32, i32, i32
  }
  func.func @transform_3(%arg0: i32) -> (i32, i32, i32) {
    %c0_i32 = arith.constant 0 : i32
    %c0_i32_0 = arith.constant 0 : i32
    %c0_i32_1 = arith.constant 0 : i32
    %c0_i32_2 = arith.constant 0 : i32
    return %c0_i32, %c0_i32_0, %c0_i32_1 : i32, i32, i32
  }
  func.func @transform_4(%arg0: i32) -> (i32, i32, i32) {
    %c0_i32 = arith.constant 0 : i32
    %c0_i32_0 = arith.constant 0 : i32
    %c0_i32_1 = arith.constant 0 : i32
    %c0_i32_2 = arith.constant 0 : i32
    return %c0_i32, %c0_i32_0, %c0_i32_1 : i32, i32, i32
  }
  func.func @transform_5(%arg0: i32) -> (i32, i32, i32) {
    %c0_i32 = arith.constant 0 : i32
    %c0_i32_0 = arith.constant 0 : i32
    %c0_i32_1 = arith.constant 0 : i32
    %c0_i32_2 = arith.constant 0 : i32
    return %c0_i32, %c0_i32_0, %c0_i32_1 : i32, i32, i32
  }
  func.func @transform_6(%arg0: i32) -> (i32, i32) {
    %c0_i32 = arith.constant 0 : i32
    %c0_i32_0 = arith.constant 0 : i32
    %c0_i32_1 = arith.constant 0 : i32
    return %c0_i32, %c0_i32_0 : i32, i32
  }
  func.func @transform_7(%arg0: i32) -> (i32, i32) {
    %c0_i32 = arith.constant 0 : i32
    %c0_i32_0 = arith.constant 0 : i32
    %c0_i32_1 = arith.constant 0 : i32
    return %c0_i32, %c0_i32_0 : i32, i32
  }
  func.func @transform_8(%arg0: i32) -> (i32, i32) {
    %c0_i32 = arith.constant 0 : i32
    %c0_i32_0 = arith.constant 0 : i32
    %c0_i32_1 = arith.constant 0 : i32
    return %c0_i32, %c0_i32_0 : i32, i32
  }
  func.func @transform_9(%arg0: i32) -> (i32, i32) {
    %c0_i32 = arith.constant 0 : i32
    %c0_i32_0 = arith.constant 0 : i32
    %c0_i32_1 = arith.constant 0 : i32
    return %c0_i32, %c0_i32_0 : i32, i32
  }
  func.func @transform_10(%arg0: i32) -> (i32, i32) {
    %c0_i32 = arith.constant 0 : i32
    %c0_i32_0 = arith.constant 0 : i32
    %c0_i32_1 = arith.constant 0 : i32
    return %c0_i32, %c0_i32_0 : i32, i32
  }
  func.func @transform_11(%arg0: i32) -> (i32, i32, i32) {
    %c0_i32 = arith.constant 0 : i32
    %c0_i32_0 = arith.constant 0 : i32
    %c0_i32_1 = arith.constant 0 : i32
    return %arg0, %c0_i32, %c0_i32_0 : i32, i32, i32
  }
}

</mosaic_0001>

<llo_original>
// kernel: rdb_forward.1
$region0: #{rdb_forward.1}
  #allocation0 [shape = 'u32[]', space=smem, size = 0x4, offset = 0x4, fixed_abs, tag = 'smem constant byte address 0x4 - core index']
  #allocation1 [shape = 'u32[144,128]{1,0:T(1,128)}', space=vmem, size = 0x12000, scoped, tag = 'internal scratch']
  #allocation2 [shape = 'f32[24,512]{1,0:T(8,128)}', space=vmem, size = 0xc000, scoped, tag = 'scratch operand']
  %s0 = inlined_call_operand.vmem [shape: f32[2,8,256], index: 0, kind: input, shape index: {}]
  %s1 = inlined_call_operand.vmem [shape: f32[9,4,8], index: 1, kind: input, shape index: {}]
  %s2 = inlined_call_operand.vmem [shape: f32[9,4,12], index: 2, kind: input, shape index: {}]
  %s3 = inlined_call_operand.vmem [shape: f32[9,4,16], index: 3, kind: input, shape index: {}]
  %s4 = inlined_call_operand.vmem [shape: f32[9,4,20], index: 4, kind: input, shape index: {}]
  %s5 = inlined_call_operand.vmem [shape: f32[9,8,24], index: 5, kind: input, shape index: {}]
  %s6 = inlined_call_operand.vmem [shape: f32[4,1], index: 6, kind: input, shape index: {}]
  %s7 = inlined_call_operand.vmem [shape: f32[4,1], index: 7, kind: input, shape index: {}]
  %s8 = inlined_call_operand.vmem [shape: f32[4,1], index: 8, kind: input, shape index: {}]
  %s9 = inlined_call_operand.vmem [shape: f32[4,1], index: 9, kind: input, shape index: {}]
  %s10 = inlined_call_operand.vmem [shape: f32[8,1], index: 10, kind: input, shape index: {}]
  %s11 = inlined_call_operand.vmem [shape: f32[2,8,256], index: 11, kind: output, shape index: {}]
  %s12 = sld [smem:[#allocation0]]
  $region77: #{rdb_forward.1} parent=0
    _
  %s14 = ssub.s32 1, %s12
  %s15 = scalar_select 0, %s14, %s12
  loop: start=0, step=1, limit=4
  $region2: #{rdb_forward.1} parent=0 // loop_pre_header
    _
  $region3: #{rdb_forward.1} parent=0 // loop_header
    %s17 = sphi 0, %s21
    %p18 = scmp.ge.s32.totalorder %s17, 4
    %s27 = sphi 0, %s29
    %s30 = sphi 0, %s27
    %s31 = sphi 0, %s30
    %s47 = sphi 0, %s31
    %s51 = sphi 0, %s51
    %s53 = sphi 0, %s51
    %s54 = sphi 0, %s53
    %s68 = sphi 0, %s54
    %s72 = sphi 0, %s72
    %s74 = sphi 0, %s72
    %s75 = sphi 0, %s74
    %s89 = sphi 0, %s75
    %s93 = sphi 0, %s93
    %s95 = sphi 0, %s93
    %s96 = sphi 0, %s95
    %s110 = sphi 0, %s96
    %s114 = sphi 0, %s114
    %s116 = sphi 0, %s114
    %s117 = sphi 0, %s116
    %s131 = sphi 0, %s117
    %s135 = sphi 0, %s135
    %s137 = sphi 0, %s135
    %s138 = sphi 0, %s137
    %s152 = sphi 0, %s138
    %s156 = sphi 0, %s156
    %s158 = sphi 0, %s156
    %s159 = sphi 0, %s158
    %s173 = sphi 0, %s159
    %s177 = sphi 0, %s177
    %s179 = sphi 0, %s177
    %s180 = sphi 0, %s179
    %s194 = sphi 0, %s180
    %s198 = sphi 0, %s198
    %s200 = sphi 0, %s198
    %s201 = sphi 0, %s200
    %s215 = sphi 0, %s201
    %s219 = sphi 0, %s219
    %s221 = sphi 0, %s219
    %s222 = sphi 0, %s221
    %s236 = sphi 0, %s222
    %s240 = sphi 0, %s240
    %s242 = sphi 0, %s240
    %s243 = sphi 0, %s242
    %s257 = sphi 0, %s243
    %s263 = sphi 0, %s265
    %s266 = sphi 0, %s263
    %s267 = sphi 0, %s266
    %s283 = sphi 0, %s267
  $region4: #{rdb_forward.1} parent=0 // loop_header_branch
    %20 = sbr.rel (%p18) target = $region8
  $region5: #{rdb_forward.1} parent=0 // loop_body
    %s22 = ssub.s32 %s17, 1
    %s23 = ssub.s32 %s17, 2
    %s24 = sadd.s32 %s17, 1
    %s25 = ssub.s32 %s17, %s24
    %p26 = scmp.eq.s32.totalorder %s25, 0
    %s28 = sadd.s32 %s27, 1
    %s29 = scalar_select %p26, %s27, %s28
    %p32 = pneg %p26
    %p33 = scmp.eq.s32.totalorder %s17, 1
    %p34 = por %p32, %p33
    %p35 = scmp.ne.s32.totalorder %s27, %s30
    %p36 = scmp.eq.s32.totalorder %s17, 0
    %p37 = por %p35, %p36
    %p38 = scmp.ne.s32.totalorder %s27, %s30
    %p39 = scmp.eq.s32.totalorder %s22, 1
    %p40 = por %p38, %p39
    %p41 = scmp.ne.s32.totalorder %s30, %s31
    %p42 = scmp.eq.s32.totalorder %s22, 0
    %p43 = por %p41, %p42
    %p44 = scmp.ne.s32.totalorder %s30, %s31
    %p45 = scmp.eq.s32.totalorder %s23, 1
    %p46 = por %p44, %p45
    %p48 = scmp.ne.s32.totalorder %s31, %s47
    %p49 = scmp.eq.s32.totalorder %s23, 0
    %p50 = por %p48, %p49
    %s52 = sadd.s32 %s51, 1
    %p55 = scmp.eq.s32.totalorder %s17, 1
    %p56 = scmp.ne.s32.totalorder %s51, %s53
    %p57 = scmp.eq.s32.totalorder %s17, 0
    %p58 = por %p56, %p57
    %p59 = scmp.ne.s32.totalorder %s51, %s53
    %p60 = scmp.eq.s32.totalorder %s22, 1
    %p61 = por %p59, %p60
    %p62 = scmp.ne.s32.totalorder %s53, %s54
    %p63 = scmp.eq.s32.totalorder %s22, 0
    %p64 = por %p62, %p63
    %p65 = scmp.ne.s32.totalorder %s53, %s54
    %p66 = scmp.eq.s32.totalorder %s23, 1
    %p67 = por %p65, %p66
    %p69 = scmp.ne.s32.totalorder %s54, %s68
    %p70 = scmp.eq.s32.totalorder %s23, 0
    %p71 = por %p69, %p70
    %s73 = sadd.s32 %s72, 1
    %p76 = scmp.eq.s32.totalorder %s17, 1
    %p77 = scmp.ne.s32.totalorder %s72, %s74
    %p78 = scmp.eq.s32.totalorder %s17, 0
    %p79 = por %p77, %p78
    %p80 = scmp.ne.s32.totalorder %s72, %s74
    %p81 = scmp.eq.s32.totalorder %s22, 1
    %p82 = por %p80, %p81
    %p83 = scmp.ne.s32.totalorder %s74, %s75
    %p84 = scmp.eq.s32.totalorder %s22, 0
    %p85 = por %p83, %p84
    %p86 = scmp.ne.s32.totalorder %s74, %s75
    %p87 = scmp.eq.s32.totalorder %s23, 1
    %p88 = por %p86, %p87
    %p90 = scmp.ne.s32.totalorder %s75, %s89
    %p91 = scmp.eq.s32.totalorder %s23, 0
    %p92 = por %p90, %p91
    %s94 = sadd.s32 %s93, 1
    %p97 = scmp.eq.s32.totalorder %s17, 1
    %p98 = scmp.ne.s32.totalorder %s93, %s95
    %p99 = scmp.eq.s32.totalorder %s17, 0
    %p100 = por %p98, %p99
    %p101 = scmp.ne.s32.totalorder %s93, %s95
    %p102 = scmp.eq.s32.totalorder %s22, 1
    %p103 = por %p101, %p102
    %p104 = scmp.ne.s32.totalorder %s95, %s96
    %p105 = scmp.eq.s32.totalorder %s22, 0
    %p106 = por %p104, %p105
    %p107 = scmp.ne.s32.totalorder %s95, %s96
    %p108 = scmp.eq.s32.totalorder %s23, 1
    %p109 = por %p107, %p108
    %p111 = scmp.ne.s32.totalorder %s96, %s110
    %p112 = scmp.eq.s32.totalorder %s23, 0
    %p113 = por %p111, %p112
    %s115 = sadd.s32 %s114, 1
    %p118 = scmp.eq.s32.totalorder %s17, 1
    %p119 = scmp.ne.s32.totalorder %s114, %s116
    %p120 = scmp.eq.s32.totalorder %s17, 0
    %p121 = por %p119, %p120
    %p122 = scmp.ne.s32.totalorder %s114, %s116
    %p123 = scmp.eq.s32.totalorder %s22, 1
    %p124 = por %p122, %p123
    %p125 = scmp.ne.s32.totalorder %s116, %s117
    %p126 = scmp.eq.s32.totalorder %s22, 0
    %p127 = por %p125, %p126
    %p128 = scmp.ne.s32.totalorder %s116, %s117
    %p129 = scmp.eq.s32.totalorder %s23, 1
    %p130 = por %p128, %p129
    %p132 = scmp.ne.s32.totalorder %s117, %s131
    %p133 = scmp.eq.s32.totalorder %s23, 0
    %p134 = por %p132, %p133
    %s136 = sadd.s32 %s135, 1
    %p139 = scmp.eq.s32.totalorder %s17, 1
    %p140 = scmp.ne.s32.totalorder %s135, %s137
    %p141 = scmp.eq.s32.totalorder %s17, 0
    %p142 = por %p140, %p141
    %p143 = scmp.ne.s32.totalorder %s135, %s137
    %p144 = scmp.eq.s32.totalorder %s22, 1
    %p145 = por %p143, %p144
    %p146 = scmp.ne.s32.totalorder %s137, %s138
    %p147 = scmp.eq.s32.totalorder %s22, 0
    %p148 = por %p146, %p147
    %p149 = scmp.ne.s32.totalorder %s137, %s138
    %p150 = scmp.eq.s32.totalorder %s23, 1
    %p151 = por %p149, %p150
    %p153 = scmp.ne.s32.totalorder %s138, %s152
    %p154 = scmp.eq.s32.totalorder %s23, 0
    %p155 = por %p153, %p154
    %s157 = sadd.s32 %s156, 1
    %p160 = scmp.eq.s32.totalorder %s17, 1
    %p161 = scmp.ne.s32.totalorder %s156, %s158
    %p162 = scmp.eq.s32.totalorder %s17, 0
    %p163 = por %p161, %p162
    %p164 = scmp.ne.s32.totalorder %s156, %s158
    %p165 = scmp.eq.s32.totalorder %s22, 1
    %p166 = por %p164, %p165
    %p167 = scmp.ne.s32.totalorder %s158, %s159
    %p168 = scmp.eq.s32.totalorder %s22, 0
    %p169 = por %p167, %p168
    %p170 = scmp.ne.s32.totalorder %s158, %s159
    %p171 = scmp.eq.s32.totalorder %s23, 1
    %p172 = por %p170, %p171
    %p174 = scmp.ne.s32.totalorder %s159, %s173
    %p175 = scmp.eq.s32.totalorder %s23, 0
    %p176 = por %p174, %p175
    %s178 = sadd.s32 %s177, 1
    %p181 = scmp.eq.s32.totalorder %s17, 1
    %p182 = scmp.ne.s32.totalorder %s177, %s179
    %p183 = scmp.eq.s32.totalorder %s17, 0
    %p184 = por %p182, %p183
    %p185 = scmp.ne.s32.totalorder %s177, %s179
    %p186 = scmp.eq.s32.totalorder %s22, 1
    %p187 = por %p185, %p186
    %p188 = scmp.ne.s32.totalorder %s179, %s180
    %p189 = scmp.eq.s32.totalorder %s22, 0
    %p190 = por %p188, %p189
    %p191 = scmp.ne.s32.totalorder %s179, %s180
    %p192 = scmp.eq.s32.totalorder %s23, 1
    %p193 = por %p191, %p192
    %p195 = scmp.ne.s32.totalorder %s180, %s194
    %p196 = scmp.eq.s32.totalorder %s23, 0
    %p197 = por %p195, %p196
    %s199 = sadd.s32 %s198, 1
    %p202 = scmp.eq.s32.totalorder %s17, 1
    %p203 = scmp.ne.s32.totalorder %s198, %s200
    %p204 = scmp.eq.s32.totalorder %s17, 0
    %p205 = por %p203, %p204
    %p206 = scmp.ne.s32.totalorder %s198, %s200
    %p207 = scmp.eq.s32.totalorder %s22, 1
    %p208 = por %p206, %p207
    %p209 = scmp.ne.s32.totalorder %s200, %s201
    %p210 = scmp.eq.s32.totalorder %s22, 0
    %p211 = por %p209, %p210
    %p212 = scmp.ne.s32.totalorder %s200, %s201
    %p213 = scmp.eq.s32.totalorder %s23, 1
    %p214 = por %p212, %p213
    %p216 = scmp.ne.s32.totalorder %s201, %s215
    %p217 = scmp.eq.s32.totalorder %s23, 0
    %p218 = por %p216, %p217
    %s220 = sadd.s32 %s219, 1
    %p223 = scmp.eq.s32.totalorder %s17, 1
    %p224 = scmp.ne.s32.totalorder %s219, %s221
    %p225 = scmp.eq.s32.totalorder %s17, 0
    %p226 = por %p224, %p225
    %p227 = scmp.ne.s32.totalorder %s219, %s221
    %p228 = scmp.eq.s32.totalorder %s22, 1
    %p229 = por %p227, %p228
    %p230 = scmp.ne.s32.totalorder %s221, %s222
    %p231 = scmp.eq.s32.totalorder %s22, 0
    %p232 = por %p230, %p231
    %p233 = scmp.ne.s32.totalorder %s221, %s222
    %p234 = scmp.eq.s32.totalorder %s23, 1
    %p235 = por %p233, %p234
    %p237 = scmp.ne.s32.totalorder %s222, %s236
    %p238 = scmp.eq.s32.totalorder %s23, 0
    %p239 = por %p237, %p238
    %s241 = sadd.s32 %s240, 1
    %p244 = scmp.eq.s32.totalorder %s17, 1
    %p245 = scmp.ne.s32.totalorder %s240, %s242
    %p246 = scmp.eq.s32.totalorder %s17, 0
    %p247 = por %p245, %p246
    %p248 = scmp.ne.s32.totalorder %s240, %s242
    %p249 = scmp.eq.s32.totalorder %s22, 1
    %p250 = por %p248, %p249
    %p251 = scmp.ne.s32.totalorder %s242, %s243
    %p252 = scmp.eq.s32.totalorder %s22, 0
    %p253 = por %p251, %p252
    %p254 = scmp.ne.s32.totalorder %s242, %s243
    %p255 = scmp.eq.s32.totalorder %s23, 1
    %p256 = por %p254, %p255
    %p258 = scmp.ne.s32.totalorder %s243, %s257
    %p259 = scmp.eq.s32.totalorder %s23, 0
    %p260 = por %p258, %p259
    %s261 = ssub.s32 %s17, %s24
    %p262 = scmp.eq.s32.totalorder %s261, 0
    %s264 = sadd.s32 %s263, 1
    %s265 = scalar_select %p262, %s263, %s264
    %p268 = pneg %p262
    %p269 = scmp.eq.s32.totalorder %s17, 1
    %p270 = por %p268, %p269
    %p271 = scmp.ne.s32.totalorder %s263, %s266
    %p272 = scmp.eq.s32.totalorder %s17, 0
    %p273 = por %p271, %p272
    %p274 = scmp.ne.s32.totalorder %s263, %s266
    %p275 = scmp.eq.s32.totalorder %s22, 1
    %p276 = por %p274, %p275
    %p277 = scmp.ne.s32.totalorder %s266, %s267
    %p278 = scmp.eq.s32.totalorder %s22, 0
    %p279 = por %p277, %p278
    %p280 = scmp.ne.s32.totalorder %s266, %s267
    %p281 = scmp.eq.s32.totalorder %s23, 1
    %p282 = por %p280, %p281
    %p284 = scmp.ne.s32.totalorder %s267, %s283
    %p285 = scmp.eq.s32.totalorder %s23, 0
    %p286 = por %p284, %p285
    %p287 = scmp.le.s32.totalorder 1, %s17
    %p288 = scmp.lt.s32.totalorder %s17, 3
    %p289 = pnand %p287, %p288
    %p290 = pneg %p289
    // Predicated region
    $region9: #{rdb_forward.1} parent=5 // pred_check
      _
    $region10: #{rdb_forward.1} parent=5 // pred_check_branch
      %292 = sbr.rel (%p289) target = $region12
    $region11: #{rdb_forward.1} parent=5 // pred_region
      %s293 = ssub.s32 %s17, 1
      // Predicated region
      $region13: #{rdb_forward.1} parent=11 // pred_check
        %p294 = pneg %p64
      $region14: #{rdb_forward.1} parent=11 // pred_check_branch
        %296 = sbr.rel (%p294) target = $region16
      $region15: #{rdb_forward.1} parent=11 // pred_region
        _
      $region16: #{rdb_forward.1} parent=11 // pred_fallthru
        _
      // Predicated region
      $region17: #{rdb_forward.1} parent=11 // pred_check
        %p297 = pneg %p85
      $region18: #{rdb_forward.1} parent=11 // pred_check_branch
        %299 = sbr.rel (%p297) target = $region20
      $region19: #{rdb_forward.1} parent=11 // pred_region
        _
      $region20: #{rdb_forward.1} parent=11 // pred_fallthru
        _
      // Predicated region
      $region21: #{rdb_forward.1} parent=11 // pred_check
        %p300 = pneg %p106
      $region22: #{rdb_forward.1} parent=11 // pred_check_branch
        %302 = sbr.rel (%p300) target = $region24
      $region23: #{rdb_forward.1} parent=11 // pred_region
        _
      $region24: #{rdb_forward.1} parent=11 // pred_fallthru
        _
      // Predicated region
      $region25: #{rdb_forward.1} parent=11 // pred_check
        %p303 = pneg %p127
      $region26: #{rdb_forward.1} parent=11 // pred_check_branch
        %305 = sbr.rel (%p303) target = $region28
      $region27: #{rdb_forward.1} parent=11 // pred_region
        _
      $region28: #{rdb_forward.1} parent=11 // pred_fallthru
        _
      // Predicated region
      $region29: #{rdb_forward.1} parent=11 // pred_check
        %p306 = pneg %p148
      $region30: #{rdb_forward.1} parent=11 // pred_check_branch
        %308 = sbr.rel (%p306) target = $region32
      $region31: #{rdb_forward.1} parent=11 // pred_region
        _
      $region32: #{rdb_forward.1} parent=11 // pred_fallthru
        _
      // Predicated region
      $region33: #{rdb_forward.1} parent=11 // pred_check
        %p309 = pneg %p169
      $region34: #{rdb_forward.1} parent=11 // pred_check_branch
        %311 = sbr.rel (%p309) target = $region36
      $region35: #{rdb_forward.1} parent=11 // pred_region
        _
      $region36: #{rdb_forward.1} parent=11 // pred_fallthru
        _
      // Predicated region
      $region37: #{rdb_forward.1} parent=11 // pred_check
        %p312 = pneg %p190
      $region38: #{rdb_forward.1} parent=11 // pred_check_branch
        %314 = sbr.rel (%p312) target = $region40
      $region39: #{rdb_forward.1} parent=11 // pred_region
        _
      $region40: #{rdb_forward.1} parent=11 // pred_fallthru
        _
      // Predicated region
      $region41: #{rdb_forward.1} parent=11 // pred_check
        %p315 = pneg %p211
      $region42: #{rdb_forward.1} parent=11 // pred_check_branch
        %317 = sbr.rel (%p315) target = $region44
      $region43: #{rdb_forward.1} parent=11 // pred_region
        _
      $region44: #{rdb_forward.1} parent=11 // pred_fallthru
        _
      // Predicated region
      $region45: #{rdb_forward.1} parent=11 // pred_check
        %p318 = pneg %p232
      $region46: #{rdb_forward.1} parent=11 // pred_check_branch
        %320 = sbr.rel (%p318) target = $region48
      $region47: #{rdb_forward.1} parent=11 // pred_region
        _
      $region48: #{rdb_forward.1} parent=11 // pred_fallthru
        _
      // Predicated region
      $region49: #{rdb_forward.1} parent=11 // pred_check
        %p321 = pneg %p253
      $region50: #{rdb_forward.1} parent=11 // pred_check_branch
        %323 = sbr.rel (%p321) target = $region52
      $region51: #{rdb_forward.1} parent=11 // pred_region
        _
      $region52: #{rdb_forward.1} parent=11 // pred_fallthru
        _
    $region12: #{rdb_forward.1} parent=5 // pred_fallthru
      _
    %p324 = scmp.lt.s32.totalorder %s17, 2
    // Predicated region
    $region53: #{rdb_forward.1} parent=5 // pred_check
      %p325 = pneg %p324
    $region54: #{rdb_forward.1} parent=5 // pred_check_branch
      %327 = sbr.rel (%p325) target = $region56
    $region55: #{rdb_forward.1} parent=5 // pred_region
      // Predicated region
      $region57: #{rdb_forward.1} parent=55 // pred_check
        %p328 = pneg %p37
      $region58: #{rdb_forward.1} parent=55 // pred_check_branch
        %330 = sbr.rel (%p328) target = $region60
      $region59: #{rdb_forward.1} parent=55 // pred_region
        %p331 = scmp.lt.s32.totalorder %s17, 1
        %s332 = scalar_select %p331, %s17, 1
        %s333 = smul.addr %s332, 2
        %s334 = smul.addr %s333, 8
        %s335 = scalar_lea.vmem %s0, %s334
      $region60: #{rdb_forward.1} parent=55 // pred_fallthru
        _
    $region56: #{rdb_forward.1} parent=5 // pred_fallthru
      _
    %p336 = scmp.le.s32.totalorder 1, %s17
    %p337 = scmp.lt.s32.totalorder %s17, 3
    %p338 = pnand %p336, %p337
    %p339 = pneg %p338
    // Predicated region
    $region61: #{rdb_forward.1} parent=5 // pred_check
      _
    $region62: #{rdb_forward.1} parent=5 // pred_check_branch
      %341 = sbr.rel (%p338) target = $region64
    $region63: #{rdb_forward.1} parent=5 // pred_region
      %s342 = ssub.s32 %s17, 1
      %p343 = scmp.lt.s32.totalorder %s22, 1
      %s344 = scalar_select %p343, %s22, 1
      %s345 = smul.addr %s344, 2
      %s346 = smul.addr %s345, 8
      %s347 = scalar_lea.vmem %s0, %s346
      %p348 = pneg %p43
      %p349 = pneg %p40
      %p350 = pneg %p64
      %p351 = pneg %p61
      %p352 = pneg %p85
      %p353 = pneg %p82
      %p354 = pneg %p106
      %p355 = pneg %p103
      %p356 = pneg %p127
      %p357 = pneg %p124
      %p358 = pneg %p148
      %p359 = pneg %p145
      %p360 = pneg %p169
      %p361 = pneg %p166
      %p362 = pneg %p190
      %p363 = pneg %p187
      %p364 = pneg %p211
      %p365 = pneg %p208
      %p366 = pneg %p232
      %p367 = pneg %p229
      %p368 = pneg %p253
      %p369 = pneg %p250
      %p370 = pneg %p279
      %p371 = pneg %p276
      %p372 = scmp.lt.s32.totalorder %s22, 1
      %s373 = scalar_select %p372, %s22, 1
      %s374 = smul.addr %s373, 2
      %s375 = smul.addr %s374, 8
      %s376 = scalar_lea.vmem %s11, %s375
      %p377 = scmp.lt.s32.totalorder %s22, 1
      %s378 = scalar_select %p377, %s22, 1
      %s379 = smul.addr %s378, 2
      %s380 = smul.addr %s379, 8
      %s381 = scalar_lea.vmem %s0, %s380
      %p382 = scmp.lt.s32.totalorder %s22, 1
      %s383 = scalar_select %p382, %s22, 1
      %s384 = smul.addr %s383, 2
      %s385 = smul.addr %s384, 8
      %s386 = scalar_lea.vmem %s11, %s385
      %387 = vst [vmem:[#allocation2] sm:$0xff] 0.0
      %388 = vst [vmem:[#allocation2 + $0x8] sm:$0xff] 0.0
      %389 = vst [vmem:[#allocation2 + $0x10] sm:$0xff] 0.0
      %390 = vst [vmem:[#allocation2 + $0x18] sm:$0xff] 0.0
      %391 = vst [vmem:[#allocation2 + $0x20] sm:$0xff] 0.0
      %392 = vst [vmem:[#allocation2 + $0x28] sm:$0xff] 0.0
      %393 = vst [vmem:[#allocation2 + $0x30] sm:$0xff] 0.0
      %394 = vst [vmem:[#allocation2 + $0x38] sm:$0xff] 0.0
      %395 = vst [vmem:[#allocation2 + $0x40] sm:$0xff] 0.0
      %396 = vst [vmem:[#allocation2 + $0x48] sm:$0xff] 0.0
      %397 = vst [vmem:[#allocation2 + $0x50] sm:$0xff] 0.0
      %398 = vst [vmem:[#allocation2 + $0x58] sm:$0xff] 0.0
      %v399 = vld [vmem:[%s381] sm:$0xff]
      %v400 = vld [vmem:[%s381 + $0x8] sm:$0xff]
      %401 = vst [vmem:[#allocation2 + $0x8] sm:$0xff] %v399
      %402 = vst [vmem:[#allocation2 + $0x10] sm:$0xff] %v400
      %v403 = vlaneseq
      %v404 = vand.u32 %v403, 127
      %v405 = vadd.s32 %v404, 128
      %vm406 = vcmp.lt.s32.totalorder %v404, 0
      %v407 = vsub.s32 0, %v404
      %v408 = vsel %vm406, %v407, %v404
      %v409 = vshrl.u32 %v408, 4
      %v410 = vand.u32 %v408, 15
      %v411 = vsub.s32 0, %v410
      %v412 = vsel %vm406, %v411, %v410
      %vm413 = vcmp.lt.s32.totalorder %v405, 0
      %v414 = vsub.s32 0, %v405
      %v415 = vsel %vm413, %v414, %v405
      %v416 = vshrl.u32 %v415, 4
      %v417 = vand.u32 %v415, 15
      %v418 = vsub.s32 0, %v417
      %v419 = vsel %vm413, %v418, %v417
      %vm420 = vcmp.ne.s32.totalorder %v412, 0
      %vm421 = vcmp.ne.s32.totalorder %v419, 0
      %vm422 = vcmp.lt.s32.totalorder %v412, 0
      %vm423 = vcmp.lt.s32.totalorder %v419, 0
      %vm424 = vmand %vm422, %vm420
      %vm425 = vmand %vm423, %vm421
      %v426 = vadd.s32 %v412, 16
      %v427 = vadd.s32 %v419, 16
      %v428 = vsel %vm424, %v426, %v412
      %v429 = vsel %vm425, %v427, %v419
      %vm430 = vcmp.ge.s32.totalorder %v428, 1
      %vm431 = vcmp.ge.s32.totalorder %v429, 1
      %vm432 = vcmp.le.s32.totalorder %v428, 14
      %vm433 = vcmp.le.s32.totalorder %v429, 14
      %v434 = vld [vmem:[#allocation2] sm:$0xff]
      %v435 = vld [vmem:[#allocation2 + $0x8] sm:$0xff]
      %v436 = vld [vmem:[#allocation2 + $0x10] sm:$0xff]
      %v437 = vsel %vm430, 1, 0
      %v438 = vsel %vm431, 1, 0
      %vm439 = vcmp.eq.s32.totalorder %v437, 1
      %vm440 = vcmp.eq.s32.totalorder %v438, 1
      %444 = vrot.lane.b32.xlu0 %v434, 17
      %v445 = vpop.permute.xlu0 %444
      %446 = vrot.lane.b32.xlu0 %v435, 17
      %v447 = vpop.permute.xlu0 %446
      %448 = vrot.lane.b32.xlu0 %v436, 17
      %v449 = vpop.permute.xlu0 %448
      %vm450 = vcmask 138240
      %v451 = vsel %vm450, %v445, %v447
      %v452 = vsel %vm450, %v447, %v449
      %v455 = vsel %vm439, %v451, 0.0
      %v456 = vsel %vm440, %v452, 0.0
      %v457 = vld [vmem:[%s1] sm:$0xf]
      %s458 = scalar_lea.vmem %s1, 4
      %v459 = vld [vmem:[%s458] sm:$0xf]
      %460 = vrot.lane.b32.xlu0 %v434, 16
      %v461 = vpop.permute.xlu0 %460
      %462 = vrot.lane.b32.xlu0 %v435, 16
      %v463 = vpop.permute.xlu0 %462
      %464 = vrot.lane.b32.xlu0 %v436, 16
      %v465 = vpop.permute.xlu0 %464
      %vm466 = vcmask 130048
      %v467 = vsel %vm466, %v461, %v463
      %v468 = vsel %vm466, %v463, %v465
      %vm471 = vcmask 64512
      %v473 = vsel %vm471, %v459, 0
      %475 = vmatprep.subr.mxu0 %v468
      %476 = vmatpush1.msra.mxu0 %v467
      %477 = vmatprep.subr.mxu0 0.0
      %478 = vmatpush1.msra.mxu0 0.0
      %479 = vmatprep.subr.mxu0 0.0
      %480 = vmatpush1.msra.mxu0 0.0
      %481 = vmatprep.subr.mxu0 0.0
      %482 = vmatpush1.msra.mxu0 0.0
      %483 = vmatprep.subr.mxu0 0.0
      %484 = vmatpush1.msra.mxu0 0.0
      %485 = vmatprep.subr.mxu0 0.0
      %486 = vmatpush1.msra.mxu0 0.0
      %487 = vmatprep.subr.mxu0 0.0
      %488 = vmatpush1.msra.mxu0 0.0
      %489 = vmatprep.subr.mxu0 0.0
      %490 = vmatpush1.msra.mxu0 0.0
      %491 = vmatprep.subr.mxu0 0.0
      %492 = vmatpush1.msra.mxu0 0.0
      %493 = vmatprep.subr.mxu0 0.0
      %494 = vmatpush1.msra.mxu0 0.0
      %495 = vmatprep.subr.mxu0 0.0
      %496 = vmatpush1.msra.mxu0 0.0
      %497 = vmatprep.subr.mxu0 0.0
      %498 = vmatpush1.msra.mxu0 0.0
      %499 = vmatprep.subr.mxu0 0.0
      %500 = vmatpush1.msra.mxu0 0.0
      %501 = vmatprep.subr.mxu0 0.0
      %502 = vmatpush1.msra.mxu0 0.0
      %503 = vmatprep.subr.mxu0 0.0
      %504 = vmatpush1.msra.mxu0 0.0
      %505 = vmatprep.subr.mxu0 0.0
      %506 = vmatpush1.msra.mxu0 0.0
      %507 = vmatprep.subr.mxu0 0.0
      %508 = vmatpush1.msra.mxu0 0.0
      %509 = vmatprep.subr.mxu0 0.0
      %510 = vmatpush1.msra.mxu0 0.0
      %511 = vmatprep.subr.mxu0 0.0
      %512 = vmatpush1.msra.mxu0 0.0
      %513 = vmatprep.subr.mxu0 0.0
      %514 = vmatpush1.msra.mxu0 0.0
      %515 = vmatprep.subr.mxu0 0.0
      %516 = vmatpush1.msra.mxu0 0.0
      %517 = vmatprep.subr.mxu0 0.0
      %518 = vmatpush1.msra.mxu0 0.0
      %519 = vmatprep.subr.mxu0 0.0
      %520 = vmatpush1.msra.mxu0 0.0
      %521 = vmatprep.subr.mxu0 0.0
      %522 = vmatpush1.msra.mxu0 0.0
      %523 = vmatprep.subr.mxu0 0.0
      %524 = vmatpush1.msra.mxu0 0.0
      %525 = vmatprep.subr.mxu0 0.0
      %526 = vmatpush1.msra.mxu0 0.0
      %527 = vmatprep.subr.mxu0 0.0
      %528 = vmatpush1.msra.mxu0 0.0
      %529 = vmatprep.subr.mxu0 0.0
      %530 = vmatpush1.msra.mxu0 0.0
      %531 = vmatprep.subr.mxu0 0.0
      %532 = vmatpush1.msra.mxu0 0.0
      %533 = vmatprep.subr.mxu0 0.0
      %534 = vmatpush1.msra.mxu0 0.0
      %535 = vmatprep.subr.mxu0 0.0
      %536 = vmatpush1.msra.mxu0 0.0
      %537 = vmatprep.subr.mxu0 0.0
      %538 = vmatpush1.msra.mxu0 0.0
      %539 = vmatprep.mubr.f32.mxu0 0.0
      %540 = vmatmul.mubr.f32.gmra.mrb[0].mxu0 %v473
      %v541 = vpop.f32.mrb[0].mxu0
      %v542 = vadd.f32 0.0, %v541
      %v543 = vpop.f32.mrb[0].mxu0
      %v544 = vadd.f32 0.0, %v543
      %545 = vdwg.mxu0
      %v547 = vsel %vm471, %v457, 0
      %549 = vmatprep.subr.mxu0 %v456
      %550 = vmatpush1.msra.mxu0 %v455
      %551 = vmatprep.subr.mxu0 0.0
      %552 = vmatpush1.msra.mxu0 0.0
      %553 = vmatprep.subr.mxu0 0.0
      %554 = vmatpush1.msra.mxu0 0.0
      %555 = vmatprep.subr.mxu0 0.0
      %556 = vmatpush1.msra.mxu0 0.0
      %557 = vmatprep.subr.mxu0 0.0
      %558 = vmatpush1.msra.mxu0 0.0
      %559 = vmatprep.subr.mxu0 0.0
      %560 = vmatpush1.msra.mxu0 0.0
      %561 = vmatprep.subr.mxu0 0.0
      %562 = vmatpush1.msra.mxu0 0.0
      %563 = vmatprep.subr.mxu0 0.0
      %564 = vmatpush1.msra.mxu0 0.0
      %565 = vmatprep.subr.mxu0 0.0
      %566 = vmatpush1.msra.mxu0 0.0
      %567 = vmatprep.subr.mxu0 0.0
      %568 = vmatpush1.msra.mxu0 0.0
      %569 = vmatprep.subr.mxu0 0.0
      %570 = vmatpush1.msra.mxu0 0.0
      %571 = vmatprep.subr.mxu0 0.0
      %572 = vmatpush1.msra.mxu0 0.0
      %573 = vmatprep.subr.mxu0 0.0
      %574 = vmatpush1.msra.mxu0 0.0
      %575 = vmatprep.subr.mxu0 0.0
      %576 = vmatpush1.msra.mxu0 0.0
      %577 = vmatprep.subr.mxu0 0.0
      %578 = vmatpush1.msra.mxu0 0.0
      %579 = vmatprep.subr.mxu0 0.0
      %580 = vmatpush1.msra.mxu0 0.0
      %581 = vmatprep.subr.mxu0 0.0
      %582 = vmatpush1.msra.mxu0 0.0
      %583 = vmatprep.subr.mxu0 0.0
      %584 = vmatpush1.msra.mxu0 0.0
      %585 = vmatprep.subr.mxu0 0.0
      %586 = vmatpush1.msra.mxu0 0.0
      %587 = vmatprep.subr.mxu0 0.0
      %588 = vmatpush1.msra.mxu0 0.0
      %589 = vmatprep.subr.mxu0 0.0
      %590 = vmatpush1.msra.mxu0 0.0
      %591 = vmatprep.subr.mxu0 0.0
      %592 = vmatpush1.msra.mxu0 0.0
      %593 = vmatprep.subr.mxu0 0.0
      %594 = vmatpush1.msra.mxu0 0.0
      %595 = vmatprep.subr.mxu0 0.0
      %596 = vmatpush1.msra.mxu0 0.0
      %597 = vmatprep.subr.mxu0 0.0
      %598 = vmatpush1.msra.mxu0 0.0
      %599 = vmatprep.subr.mxu0 0.0
      %600 = vmatpush1.msra.mxu0 0.0
      %601 = vmatprep.subr.mxu0 0.0
      %602 = vmatpush1.msra.mxu0 0.0
      %603 = vmatprep.subr.mxu0 0.0
      %604 = vmatpush1.msra.mxu0 0.0
      %605 = vmatprep.subr.mxu0 0.0
      %606 = vmatpush1.msra.mxu0 0.0
      %607 = vmatprep.subr.mxu0 0.0
      %608 = vmatpush1.msra.mxu0 0.0
      %609 = vmatprep.subr.mxu0 0.0
      %610 = vmatpush1.msra.mxu0 0.0
      %611 = vmatprep.subr.mxu0 0.0
      %612 = vmatpush1.msra.mxu0 0.0
      %613 = vmatprep.mubr.f32.mxu0 0.0
      %614 = vmatmul.mubr.f32.gmra.mrb[0].mxu0 %v547
      %v615 = vpop.f32.mrb[0].mxu0
      %v616 = vadd.f32 %v542, %v615
      %v617 = vpop.f32.mrb[0].mxu0
      %v618 = vadd.f32 %v544, %v617
      %619 = vdwg.mxu0
      %v620 = vsel %vm432, 1, 0
      %v621 = vsel %vm433, 1, 0
      %vm622 = vcmp.eq.s32.totalorder %v620, 1
      %vm623 = vcmp.eq.s32.totalorder %v621, 1
      %624 = vrot.lane.b32.xlu0 %v434, 15
      %v625 = vpop.permute.xlu0 %624
      %626 = vrot.lane.b32.xlu0 %v435, 15
      %v627 = vpop.permute.xlu0 %626
      %628 = vrot.lane.b32.xlu0 %v436, 15
      %v629 = vpop.permute.xlu0 %628
      %vm630 = vcmask 121856
      %v631 = vsel %vm630, %v625, %v627
      %v632 = vsel %vm630, %v627, %v629
      %v635 = vsel %vm622, %v631, 0.0
      %v636 = vsel %vm623, %v632, 0.0
      %s637 = scalar_lea.vmem %s1, 8
      %v638 = vld [vmem:[%s637] sm:$0xf]
      %v640 = vsel %vm471, %v638, 0
      %642 = vmatprep.subr.mxu0 %v636
      %643 = vmatpush1.msra.mxu0 %v635
      %644 = vmatprep.subr.mxu0 0.0
      %645 = vmatpush1.msra.mxu0 0.0
      %646 = vmatprep.subr.mxu0 0.0
      %647 = vmatpush1.msra.mxu0 0.0
      %648 = vmatprep.subr.mxu0 0.0
      %649 = vmatpush1.msra.mxu0 0.0
      %650 = vmatprep.subr.mxu0 0.0
      %651 = vmatpush1.msra.mxu0 0.0
      %652 = vmatprep.subr.mxu0 0.0
      %653 = vmatpush1.msra.mxu0 0.0
      %654 = vmatprep.subr.mxu0 0.0
      %655 = vmatpush1.msra.mxu0 0.0
      %656 = vmatprep.subr.mxu0 0.0
      %657 = vmatpush1.msra.mxu0 0.0
      %658 = vmatprep.subr.mxu0 0.0
      %659 = vmatpush1.msra.mxu0 0.0
      %660 = vmatprep.subr.mxu0 0.0
      %661 = vmatpush1.msra.mxu0 0.0
      %662 = vmatprep.subr.mxu0 0.0
      %663 = vmatpush1.msra.mxu0 0.0
      %664 = vmatprep.subr.mxu0 0.0
      %665 = vmatpush1.msra.mxu0 0.0
      %666 = vmatprep.subr.mxu0 0.0
      %667 = vmatpush1.msra.mxu0 0.0
      %668 = vmatprep.subr.mxu0 0.0
      %669 = vmatpush1.msra.mxu0 0.0
      %670 = vmatprep.subr.mxu0 0.0
      %671 = vmatpush1.msra.mxu0 0.0
      %672 = vmatprep.subr.mxu0 0.0
      %673 = vmatpush1.msra.mxu0 0.0
      %674 = vmatprep.subr.mxu0 0.0
      %675 = vmatpush1.msra.mxu0 0.0
      %676 = vmatprep.subr.mxu0 0.0
      %677 = vmatpush1.msra.mxu0 0.0
      %678 = vmatprep.subr.mxu0 0.0
      %679 = vmatpush1.msra.mxu0 0.0
      %680 = vmatprep.subr.mxu0 0.0
      %681 = vmatpush1.msra.mxu0 0.0
      %682 = vmatprep.subr.mxu0 0.0
      %683 = vmatpush1.msra.mxu0 0.0
      %684 = vmatprep.subr.mxu0 0.0
      %685 = vmatpush1.msra.mxu0 0.0
      %686 = vmatprep.subr.mxu0 0.0
      %687 = vmatpush1.msra.mxu0 0.0
      %688 = vmatprep.subr.mxu0 0.0
      %689 = vmatpush1.msra.mxu0 0.0
      %690 = vmatprep.subr.mxu0 0.0
      %691 = vmatpush1.msra.mxu0 0.0
      %692 = vmatprep.subr.mxu0 0.0
      %693 = vmatpush1.msra.mxu0 0.0
      %694 = vmatprep.subr.mxu0 0.0
      %695 = vmatpush1.msra.mxu0 0.0
      %696 = vmatprep.subr.mxu0 0.0
      %697 = vmatpush1.msra.mxu0 0.0
      %698 = vmatprep.subr.mxu0 0.0
      %699 = vmatpush1.msra.mxu0 0.0
      %700 = vmatprep.subr.mxu0 0.0
      %701 = vmatpush1.msra.mxu0 0.0
      %702 = vmatprep.subr.mxu0 0.0
      %703 = vmatpush1.msra.mxu0 0.0
      %704 = vmatprep.subr.mxu0 0.0
      %705 = vmatpush1.msra.mxu0 0.0
      %706 = vmatprep.mubr.f32.mxu0 0.0
      %707 = vmatmul.mubr.f32.gmra.mrb[0].mxu0 %v640
      %v708 = vpop.f32.mrb[0].mxu0
      %v709 = vadd.f32 0.0, %v708
      %v710 = vpop.f32.mrb[0].mxu0
      %v711 = vadd.f32 0.0, %v710
      %712 = vdwg.mxu0
      %v713 = vadd.f32 %v616, %v709
      %v714 = vadd.f32 %v618, %v711
      %715 = vrot.lane.b32.xlu0 %v434, 1
      %v716 = vpop.permute.xlu0 %715
      %717 = vrot.lane.b32.xlu0 %v435, 1
      %v718 = vpop.permute.xlu0 %717
      %719 = vrot.lane.b32.xlu0 %v436, 1
      %v720 = vpop.permute.xlu0 %719
      %vm721 = vcmask 7168
      %v722 = vsel %vm721, %v716, %v718
      %v723 = vsel %vm721, %v718, %v720
      %v726 = vsel %vm439, %v722, 0.0
      %v727 = vsel %vm440, %v723, 0.0
      %s728 = scalar_lea.vmem %s1, 12
      %v729 = vld [vmem:[%s728] sm:$0xf]
      %v731 = vsel %vm471, %v729, 0
      %733 = vmatprep.subr.mxu0 %v727
      %734 = vmatpush1.msra.mxu0 %v726
      %735 = vmatprep.subr.mxu0 0.0
      %736 = vmatpush1.msra.mxu0 0.0
      %737 = vmatprep.subr.mxu0 0.0
      %738 = vmatpush1.msra.mxu0 0.0
      %739 = vmatprep.subr.mxu0 0.0
      %740 = vmatpush1.msra.mxu0 0.0
      %741 = vmatprep.subr.mxu0 0.0
      %742 = vmatpush1.msra.mxu0 0.0
      %743 = vmatprep.subr.mxu0 0.0
      %744 = vmatpush1.msra.mxu0 0.0
      %745 = vmatprep.subr.mxu0 0.0
      %746 = vmatpush1.msra.mxu0 0.0
      %747 = vmatprep.subr.mxu0 0.0
      %748 = vmatpush1.msra.mxu0 0.0
      %749 = vmatprep.subr.mxu0 0.0
      %750 = vmatpush1.msra.mxu0 0.0
      %751 = vmatprep.subr.mxu0 0.0
      %752 = vmatpush1.msra.mxu0 0.0
      %753 = vmatprep.subr.mxu0 0.0
      %754 = vmatpush1.msra.mxu0 0.0
      %755 = vmatprep.subr.mxu0 0.0
      %756 = vmatpush1.msra.mxu0 0.0
      %757 = vmatprep.subr.mxu0 0.0
      %758 = vmatpush1.msra.mxu0 0.0
      %759 = vmatprep.subr.mxu0 0.0
      %760 = vmatpush1.msra.mxu0 0.0
      %761 = vmatprep.subr.mxu0 0.0
      %762 = vmatpush1.msra.mxu0 0.0
      %763 = vmatprep.subr.mxu0 0.0
      %764 = vmatpush1.msra.mxu0 0.0
      %765 = vmatprep.subr.mxu0 0.0
      %766 = vmatpush1.msra.mxu0 0.0
      %767 = vmatprep.subr.mxu0 0.0
      %768 = vmatpush1.msra.mxu0 0.0
      %769 = vmatprep.subr.mxu0 0.0
      %770 = vmatpush1.msra.mxu0 0.0
      %771 = vmatprep.subr.mxu0 0.0
      %772 = vmatpush1.msra.mxu0 0.0
      %773 = vmatprep.subr.mxu0 0.0
      %774 = vmatpush1.msra.mxu0 0.0
      %775 = vmatprep.subr.mxu0 0.0
      %776 = vmatpush1.msra.mxu0 0.0
      %777 = vmatprep.subr.mxu0 0.0
      %778 = vmatpush1.msra.mxu0 0.0
      %779 = vmatprep.subr.mxu0 0.0
      %780 = vmatpush1.msra.mxu0 0.0
      %781 = vmatprep.subr.mxu0 0.0
      %782 = vmatpush1.msra.mxu0 0.0
      %783 = vmatprep.subr.mxu0 0.0
      %784 = vmatpush1.msra.mxu0 0.0
      %785 = vmatprep.subr.mxu0 0.0
      %786 = vmatpush1.msra.mxu0 0.0
      %787 = vmatprep.subr.mxu0 0.0
      %788 = vmatpush1.msra.mxu0 0.0
      %789 = vmatprep.subr.mxu0 0.0
      %790 = vmatpush1.msra.mxu0 0.0
      %791 = vmatprep.subr.mxu0 0.0
      %792 = vmatpush1.msra.mxu0 0.0
      %793 = vmatprep.subr.mxu0 0.0
      %794 = vmatpush1.msra.mxu0 0.0
      %795 = vmatprep.subr.mxu0 0.0
      %796 = vmatpush1.msra.mxu0 0.0
      %797 = vmatprep.mubr.f32.mxu0 0.0
      %798 = vmatmul.mubr.f32.gmra.mrb[0].mxu0 %v731
      %v799 = vpop.f32.mrb[0].mxu0
      %v800 = vadd.f32 0.0, %v799
      %v801 = vpop.f32.mrb[0].mxu0
      %v802 = vadd.f32 0.0, %v801
      %803 = vdwg.mxu0
      %v804 = vadd.f32 %v713, %v800
      %v805 = vadd.f32 %v714, %v802
      %s806 = scalar_lea.vmem %s1, 16
      %v807 = vld [vmem:[%s806] sm:$0xf]
      %v809 = vsel %vm471, %v807, 0
      %811 = vmatprep.subr.mxu0 %v436
      %812 = vmatpush1.msra.mxu0 %v435
      %813 = vmatprep.subr.mxu0 0.0
      %814 = vmatpush1.msra.mxu0 0.0
      %815 = vmatprep.subr.mxu0 0.0
      %816 = vmatpush1.msra.mxu0 0.0
      %817 = vmatprep.subr.mxu0 0.0
      %818 = vmatpush1.msra.mxu0 0.0
      %819 = vmatprep.subr.mxu0 0.0
      %820 = vmatpush1.msra.mxu0 0.0
      %821 = vmatprep.subr.mxu0 0.0
      %822 = vmatpush1.msra.mxu0 0.0
      %823 = vmatprep.subr.mxu0 0.0
      %824 = vmatpush1.msra.mxu0 0.0
      %825 = vmatprep.subr.mxu0 0.0
      %826 = vmatpush1.msra.mxu0 0.0
      %827 = vmatprep.subr.mxu0 0.0
      %828 = vmatpush1.msra.mxu0 0.0
      %829 = vmatprep.subr.mxu0 0.0
      %830 = vmatpush1.msra.mxu0 0.0
      %831 = vmatprep.subr.mxu0 0.0
      %832 = vmatpush1.msra.mxu0 0.0
      %833 = vmatprep.subr.mxu0 0.0
      %834 = vmatpush1.msra.mxu0 0.0
      %835 = vmatprep.subr.mxu0 0.0
      %836 = vmatpush1.msra.mxu0 0.0
      %837 = vmatprep.subr.mxu0 0.0
      %838 = vmatpush1.msra.mxu0 0.0
      %839 = vmatprep.subr.mxu0 0.0
      %840 = vmatpush1.msra.mxu0 0.0
      %841 = vmatprep.subr.mxu0 0.0
      %842 = vmatpush1.msra.mxu0 0.0
      %843 = vmatprep.subr.mxu0 0.0
      %844 = vmatpush1.msra.mxu0 0.0
      %845 = vmatprep.subr.mxu0 0.0
      %846 = vmatpush1.msra.mxu0 0.0
      %847 = vmatprep.subr.mxu0 0.0
      %848 = vmatpush1.msra.mxu0 0.0
      %849 = vmatprep.subr.mxu0 0.0
      %850 = vmatpush1.msra.mxu0 0.0
      %851 = vmatprep.subr.mxu0 0.0
      %852 = vmatpush1.msra.mxu0 0.0
      %853 = vmatprep.subr.mxu0 0.0
      %854 = vmatpush1.msra.mxu0 0.0
      %855 = vmatprep.subr.mxu0 0.0
      %856 = vmatpush1.msra.mxu0 0.0
      %857 = vmatprep.subr.mxu0 0.0
      %858 = vmatpush1.msra.mxu0 0.0
      %859 = vmatprep.subr.mxu0 0.0
      %860 = vmatpush1.msra.mxu0 0.0
      %861 = vmatprep.subr.mxu0 0.0
      %862 = vmatpush1.msra.mxu0 0.0
      %863 = vmatprep.subr.mxu0 0.0
      %864 = vmatpush1.msra.mxu0 0.0
      %865 = vmatprep.subr.mxu0 0.0
      %866 = vmatpush1.msra.mxu0 0.0
      %867 = vmatprep.subr.mxu0 0.0
      %868 = vmatpush1.msra.mxu0 0.0
      %869 = vmatprep.subr.mxu0 0.0
      %870 = vmatpush1.msra.mxu0 0.0
      %871 = vmatprep.subr.mxu0 0.0
      %872 = vmatpush1.msra.mxu0 0.0
      %873 = vmatprep.subr.mxu0 0.0
      %874 = vmatpush1.msra.mxu0 0.0
      %875 = vmatprep.mubr.f32.mxu0 0.0
      %876 = vmatmul.mubr.f32.gmra.mrb[0].mxu0 %v809
      %v877 = vpop.f32.mrb[0].mxu0
      %v878 = vadd.f32 0.0, %v877
      %v879 = vpop.f32.mrb[0].mxu0
      %v880 = vadd.f32 0.0, %v879
      %881 = vdwg.mxu0
      %v882 = vadd.f32 %v804, %v878
      %v883 = vadd.f32 %v805, %v880
      %v884 = vld [vmem:[#allocation2 + $0x8] sm:$0xff]
      %v885 = vld [vmem:[#allocation2 + $0x10] sm:$0xff]
      %v886 = vld [vmem:[#allocation2 + $0x18] sm:$0xff]
      %890 = vrot.lane.b32.xlu0 %v884, 127
      %v891 = vpop.permute.xlu0 %890
      %892 = vrot.lane.b32.xlu0 %v885, 127
      %v893 = vpop.permute.xlu0 %892
      %894 = vrot.lane.b32.xlu0 %v886, 127
      %v895 = vpop.permute.xlu0 %894
      %vm896 = vcmask 1039360
      %v897 = vsel %vm896, %v891, %v893
      %v898 = vsel %vm896, %v893, %v895
      %v901 = vsel %vm622, %v897, 0.0
      %v902 = vsel %vm623, %v898, 0.0
      %s903 = scalar_lea.vmem %s1, 20
      %v904 = vld [vmem:[%s903] sm:$0xf]
      %v906 = vsel %vm471, %v904, 0
      %908 = vmatprep.subr.mxu0 %v902
      %909 = vmatpush1.msra.mxu0 %v901
      %910 = vmatprep.subr.mxu0 0.0
      %911 = vmatpush1.msra.mxu0 0.0
      %912 = vmatprep.subr.mxu0 0.0
      %913 = vmatpush1.msra.mxu0 0.0
      %914 = vmatprep.subr.mxu0 0.0
      %915 = vmatpush1.msra.mxu0 0.0
      %916 = vmatprep.subr.mxu0 0.0
      %917 = vmatpush1.msra.mxu0 0.0
      %918 = vmatprep.subr.mxu0 0.0
      %919 = vmatpush1.msra.mxu0 0.0
      %920 = vmatprep.subr.mxu0 0.0
      %921 = vmatpush1.msra.mxu0 0.0
      %922 = vmatprep.subr.mxu0 0.0
      %923 = vmatpush1.msra.mxu0 0.0
      %924 = vmatprep.subr.mxu0 0.0
      %925 = vmatpush1.msra.mxu0 0.0
      %926 = vmatprep.subr.mxu0 0.0
      %927 = vmatpush1.msra.mxu0 0.0
      %928 = vmatprep.subr.mxu0 0.0
      %929 = vmatpush1.msra.mxu0 0.0
      %930 = vmatprep.subr.mxu0 0.0
      %931 = vmatpush1.msra.mxu0 0.0
      %932 = vmatprep.subr.mxu0 0.0
      %933 = vmatpush1.msra.mxu0 0.0
      %934 = vmatprep.subr.mxu0 0.0
      %935 = vmatpush1.msra.mxu0 0.0
      %936 = vmatprep.subr.mxu0 0.0
      %937 = vmatpush1.msra.mxu0 0.0
      %938 = vmatprep.subr.mxu0 0.0
      %939 = vmatpush1.msra.mxu0 0.0
      %940 = vmatprep.subr.mxu0 0.0
      %941 = vmatpush1.msra.mxu0 0.0
      %942 = vmatprep.subr.mxu0 0.0
      %943 = vmatpush1.msra.mxu0 0.0
      %944 = vmatprep.subr.mxu0 0.0
      %945 = vmatpush1.msra.mxu0 0.0
      %946 = vmatprep.subr.mxu0 0.0
      %947 = vmatpush1.msra.mxu0 0.0
      %948 = vmatprep.subr.mxu0 0.0
      %949 = vmatpush1.msra.mxu0 0.0
      %950 = vmatprep.subr.mxu0 0.0
      %951 = vmatpush1.msra.mxu0 0.0
      %952 = vmatprep.subr.mxu0 0.0
      %953 = vmatpush1.msra.mxu0 0.0
      %954 = vmatprep.subr.mxu0 0.0
      %955 = vmatpush1.msra.mxu0 0.0
      %956 = vmatprep.subr.mxu0 0.0
      %957 = vmatpush1.msra.mxu0 0.0
      %958 = vmatprep.subr.mxu0 0.0
      %959 = vmatpush1.msra.mxu0 0.0
      %960 = vmatprep.subr.mxu0 0.0
      %961 = vmatpush1.msra.mxu0 0.0
      %962 = vmatprep.subr.mxu0 0.0
      %963 = vmatpush1.msra.mxu0 0.0
      %964 = vmatprep.subr.mxu0 0.0
      %965 = vmatpush1.msra.mxu0 0.0
      %966 = vmatprep.subr.mxu0 0.0
      %967 = vmatpush1.msra.mxu0 0.0
      %968 = vmatprep.subr.mxu0 0.0
      %969 = vmatpush1.msra.mxu0 0.0
      %970 = vmatprep.subr.mxu0 0.0
      %971 = vmatpush1.msra.mxu0 0.0
      %972 = vmatprep.mubr.f32.mxu0 0.0
      %973 = vmatmul.mubr.f32.gmra.mrb[0].mxu0 %v906
      %v974 = vpop.f32.mrb[0].mxu0
      %v975 = vadd.f32 0.0, %v974
      %v976 = vpop.f32.mrb[0].mxu0
      %v977 = vadd.f32 0.0, %v976
      %978 = vdwg.mxu0
      %v979 = vadd.f32 %v882, %v975
      %v980 = vadd.f32 %v883, %v977
      %981 = vrot.lane.b32.xlu0 %v884, 113
      %v982 = vpop.permute.xlu0 %981
      %983 = vrot.lane.b32.xlu0 %v885, 113
      %v984 = vpop.permute.xlu0 %983
      %985 = vrot.lane.b32.xlu0 %v886, 113
      %v986 = vpop.permute.xlu0 %985
      %vm987 = vcmask 924672
      %v988 = vsel %vm987, %v982, %v984
      %v989 = vsel %vm987, %v984, %v986
      %v992 = vsel %vm439, %v988, 0.0
      %v993 = vsel %vm440, %v989, 0.0
      %s994 = scalar_lea.vmem %s1, 24
      %v995 = vld [vmem:[%s994] sm:$0xf]
      %v997 = vsel %vm471, %v995, 0
      %999 = vmatprep.subr.mxu0 %v993
      %1000 = vmatpush1.msra.mxu0 %v992
      %1001 = vmatprep.subr.mxu0 0.0
      %1002 = vmatpush1.msra.mxu0 0.0
      %1003 = vmatprep.subr.mxu0 0.0
      %1004 = vmatpush1.msra.mxu0 0.0
      %1005 = vmatprep.subr.mxu0 0.0
      %1006 = vmatpush1.msra.mxu0 0.0
      %1007 = vmatprep.subr.mxu0 0.0
      %1008 = vmatpush1.msra.mxu0 0.0
      %1009 = vmatprep.subr.mxu0 0.0
      %1010 = vmatpush1.msra.mxu0 0.0
      %1011 = vmatprep.subr.mxu0 0.0
      %1012 = vmatpush1.msra.mxu0 0.0
      %1013 = vmatprep.subr.mxu0 0.0
      %1014 = vmatpush1.msra.mxu0 0.0
      %1015 = vmatprep.subr.mxu0 0.0
      %1016 = vmatpush1.msra.mxu0 0.0
      %1017 = vmatprep.subr.mxu0 0.0
      %1018 = vmatpush1.msra.mxu0 0.0
      %1019 = vmatprep.subr.mxu0 0.0
      %1020 = vmatpush1.msra.mxu0 0.0
      %1021 = vmatprep.subr.mxu0 0.0
      %1022 = vmatpush1.msra.mxu0 0.0
      %1023 = vmatprep.subr.mxu0 0.0
      %1024 = vmatpush1.msra.mxu0 0.0
      %1025 = vmatprep.subr.mxu0 0.0
      %1026 = vmatpush1.msra.mxu0 0.0
      %1027 = vmatprep.subr.mxu0 0.0
      %1028 = vmatpush1.msra.mxu0 0.0
      %1029 = vmatprep.subr.mxu0 0.0
      %1030 = vmatpush1.msra.mxu0 0.0
      %1031 = vmatprep.subr.mxu0 0.0
      %1032 = vmatpush1.msra.mxu0 0.0
      %1033 = vmatprep.subr.mxu0 0.0
      %1034 = vmatpush1.msra.mxu0 0.0
      %1035 = vmatprep.subr.mxu0 0.0
      %1036 = vmatpush1.msra.mxu0 0.0
      %1037 = vmatprep.subr.mxu0 0.0
      %1038 = vmatpush1.msra.mxu0 0.0
      %1039 = vmatprep.subr.mxu0 0.0
      %1040 = vmatpush1.msra.mxu0 0.0
      %1041 = vmatprep.subr.mxu0 0.0
      %1042 = vmatpush1.msra.mxu0 0.0
      %1043 = vmatprep.subr.mxu0 0.0
      %1044 = vmatpush1.msra.mxu0 0.0
      %1045 = vmatprep.subr.mxu0 0.0
      %1046 = vmatpush1.msra.mxu0 0.0
      %1047 = vmatprep.subr.mxu0 0.0
      %1048 = vmatpush1.msra.mxu0 0.0
      %1049 = vmatprep.subr.mxu0 0.0
      %1050 = vmatpush1.msra.mxu0 0.0
      %1051 = vmatprep.subr.mxu0 0.0
      %1052 = vmatpush1.msra.mxu0 0.0
      %1053 = vmatprep.subr.mxu0 0.0
      %1054 = vmatpush1.msra.mxu0 0.0
      %1055 = vmatprep.subr.mxu0 0.0
      %1056 = vmatpush1.msra.mxu0 0.0
      %1057 = vmatprep.subr.mxu0 0.0
      %1058 = vmatpush1.msra.mxu0 0.0
      %1059 = vmatprep.subr.mxu0 0.0
      %1060 = vmatpush1.msra.mxu0 0.0
      %1061 = vmatprep.subr.mxu0 0.0
      %1062 = vmatpush1.msra.mxu0 0.0
      %1063 = vmatprep.mubr.f32.mxu0 0.0
      %1064 = vmatmul.mubr.f32.gmra.mrb[0].mxu0 %v997
      %v1065 = vpop.f32.mrb[0].mxu0
      %v1066 = vadd.f32 0.0, %v1065
      %v1067 = vpop.f32.mrb[0].mxu0
      %v1068 = vadd.f32 0.0, %v1067
      %1069 = vdwg.mxu0
      %v1070 = vadd.f32 %v979, %v1066
      %v1071 = vadd.f32 %v980, %v1068
      %s1072 = scalar_lea.vmem %s1, 28
      %v1073 = vld [vmem:[%s1072] sm:$0xf]
      %1074 = vrot.lane.b32.xlu0 %v884, 112
      %v1075 = vpop.permute.xlu0 %1074
      %1076 = vrot.lane.b32.xlu0 %v885, 112
      %v1077 = vpop.permute.xlu0 %1076
      %1078 = vrot.lane.b32.xlu0 %v886, 112
      %v1079 = vpop.permute.xlu0 %1078
      %vm1080 = vcmask 916480
      %v1081 = vsel %vm1080, %v1075, %v1077
      %v1082 = vsel %vm1080, %v1077, %v1079
      %v1086 = vsel %vm471, %v1073, 0
      %1088 = vmatprep.subr.mxu0 %v1082
      %1089 = vmatpush1.msra.mxu0 %v1081
      %1090 = vmatprep.subr.mxu0 0.0
      %1091 = vmatpush1.msra.mxu0 0.0
      %1092 = vmatprep.subr.mxu0 0.0
      %1093 = vmatpush1.msra.mxu0 0.0
      %1094 = vmatprep.subr.mxu0 0.0
      %1095 = vmatpush1.msra.mxu0 0.0
      %1096 = vmatprep.subr.mxu0 0.0
      %1097 = vmatpush1.msra.mxu0 0.0
      %1098 = vmatprep.subr.mxu0 0.0
      %1099 = vmatpush1.msra.mxu0 0.0
      %1100 = vmatprep.subr.mxu0 0.0
      %1101 = vmatpush1.msra.mxu0 0.0
      %1102 = vmatprep.subr.mxu0 0.0
      %1103 = vmatpush1.msra.mxu0 0.0
      %1104 = vmatprep.subr.mxu0 0.0
      %1105 = vmatpush1.msra.mxu0 0.0
      %1106 = vmatprep.subr.mxu0 0.0
      %1107 = vmatpush1.msra.mxu0 0.0
      %1108 = vmatprep.subr.mxu0 0.0
      %1109 = vmatpush1.msra.mxu0 0.0
      %1110 = vmatprep.subr.mxu0 0.0
      %1111 = vmatpush1.msra.mxu0 0.0
      %1112 = vmatprep.subr.mxu0 0.0
      %1113 = vmatpush1.msra.mxu0 0.0
      %1114 = vmatprep.subr.mxu0 0.0
      %1115 = vmatpush1.msra.mxu0 0.0
      %1116 = vmatprep.subr.mxu0 0.0
      %1117 = vmatpush1.msra.mxu0 0.0
      %1118 = vmatprep.subr.mxu0 0.0
      %1119 = vmatpush1.msra.mxu0 0.0
      %1120 = vmatprep.subr.mxu0 0.0
      %1121 = vmatpush1.msra.mxu0 0.0
      %1122 = vmatprep.subr.mxu0 0.0
      %1123 = vmatpush1.msra.mxu0 0.0
      %1124 = vmatprep.subr.mxu0 0.0
      %1125 = vmatpush1.msra.mxu0 0.0
      %1126 = vmatprep.subr.mxu0 0.0
      %1127 = vmatpush1.msra.mxu0 0.0
      %1128 = vmatprep.subr.mxu0 0.0
      %1129 = vmatpush1.msra.mxu0 0.0
      %1130 = vmatprep.subr.mxu0 0.0
      %1131 = vmatpush1.msra.mxu0 0.0
      %1132 = vmatprep.subr.mxu0 0.0
      %1133 = vmatpush1.msra.mxu0 0.0
      %1134 = vmatprep.subr.mxu0 0.0
      %1135 = vmatpush1.msra.mxu0 0.0
      %1136 = vmatprep.subr.mxu0 0.0
      %1137 = vmatpush1.msra.mxu0 0.0
      %1138 = vmatprep.subr.mxu0 0.0
      %1139 = vmatpush1.msra.mxu0 0.0
      %1140 = vmatprep.subr.mxu0 0.0
      %1141 = vmatpush1.msra.mxu0 0.0
      %1142 = vmatprep.subr.mxu0 0.0
      %1143 = vmatpush1.msra.mxu0 0.0
      %1144 = vmatprep.subr.mxu0 0.0
      %1145 = vmatpush1.msra.mxu0 0.0
      %1146 = vmatprep.subr.mxu0 0.0
      %1147 = vmatpush1.msra.mxu0 0.0
      %1148 = vmatprep.subr.mxu0 0.0
      %1149 = vmatpush1.msra.mxu0 0.0
      %1150 = vmatprep.subr.mxu0 0.0
      %1151 = vmatpush1.msra.mxu0 0.0
      %1152 = vmatprep.mubr.f32.mxu0 0.0
      %1153 = vmatmul.mubr.f32.gmra.mrb[0].mxu0 %v1086
      %v1154 = vpop.f32.mrb[0].mxu0
      %v1155 = vadd.f32 0.0, %v1154
      %v1156 = vpop.f32.mrb[0].mxu0
      %v1157 = vadd.f32 0.0, %v1156
      %1158 = vdwg.mxu0
      %v1159 = vadd.f32 %v1070, %v1155
      %v1160 = vadd.f32 %v1071, %v1157
      %1161 = vrot.lane.b32.xlu0 %v884, 111
      %v1162 = vpop.permute.xlu0 %1161
      %1163 = vrot.lane.b32.xlu0 %v885, 111
      %v1164 = vpop.permute.xlu0 %1163
      %1165 = vrot.lane.b32.xlu0 %v886, 111
      %v1166 = vpop.permute.xlu0 %1165
      %vm1167 = vcmask 908288
      %v1168 = vsel %vm1167, %v1162, %v1164
      %v1169 = vsel %vm1167, %v1164, %v1166
      %v1172 = vsel %vm622, %v1168, 0.0
      %v1173 = vsel %vm623, %v1169, 0.0
      %s1174 = scalar_lea.vmem %s1, 32
      %v1175 = vld [vmem:[%s1174] sm:$0xf]
      %v1177 = vsel %vm471, %v1175, 0
      %1179 = vmatprep.subr.mxu0 %v1173
      %1180 = vmatpush1.msra.mxu0 %v1172
      %1181 = vmatprep.subr.mxu0 0.0
      %1182 = vmatpush1.msra.mxu0 0.0
      %1183 = vmatprep.subr.mxu0 0.0
      %1184 = vmatpush1.msra.mxu0 0.0
      %1185 = vmatprep.subr.mxu0 0.0
      %1186 = vmatpush1.msra.mxu0 0.0
      %1187 = vmatprep.subr.mxu0 0.0
      %1188 = vmatpush1.msra.mxu0 0.0
      %1189 = vmatprep.subr.mxu0 0.0
      %1190 = vmatpush1.msra.mxu0 0.0
      %1191 = vmatprep.subr.mxu0 0.0
      %1192 = vmatpush1.msra.mxu0 0.0
      %1193 = vmatprep.subr.mxu0 0.0
      %1194 = vmatpush1.msra.mxu0 0.0
      %1195 = vmatprep.subr.mxu0 0.0
      %1196 = vmatpush1.msra.mxu0 0.0
      %1197 = vmatprep.subr.mxu0 0.0
      %1198 = vmatpush1.msra.mxu0 0.0
      %1199 = vmatprep.subr.mxu0 0.0
      %1200 = vmatpush1.msra.mxu0 0.0
      %1201 = vmatprep.subr.mxu0 0.0
      %1202 = vmatpush1.msra.mxu0 0.0
      %1203 = vmatprep.subr.mxu0 0.0
      %1204 = vmatpush1.msra.mxu0 0.0
      %1205 = vmatprep.subr.mxu0 0.0
      %1206 = vmatpush1.msra.mxu0 0.0
      %1207 = vmatprep.subr.mxu0 0.0
      %1208 = vmatpush1.msra.mxu0 0.0
      %1209 = vmatprep.subr.mxu0 0.0
      %1210 = vmatpush1.msra.mxu0 0.0
      %1211 = vmatprep.subr.mxu0 0.0
      %1212 = vmatpush1.msra.mxu0 0.0
      %1213 = vmatprep.subr.mxu0 0.0
      %1214 = vmatpush1.msra.mxu0 0.0
      %1215 = vmatprep.subr.mxu0 0.0
      %1216 = vmatpush1.msra.mxu0 0.0
      %1217 = vmatprep.subr.mxu0 0.0
      %1218 = vmatpush1.msra.mxu0 0.0
      %1219 = vmatprep.subr.mxu0 0.0
      %1220 = vmatpush1.msra.mxu0 0.0
      %1221 = vmatprep.subr.mxu0 0.0
      %1222 = vmatpush1.msra.mxu0 0.0
      %1223 = vmatprep.subr.mxu0 0.0
      %1224 = vmatpush1.msra.mxu0 0.0
      %1225 = vmatprep.subr.mxu0 0.0
      %1226 = vmatpush1.msra.mxu0 0.0
      %1227 = vmatprep.subr.mxu0 0.0
      %1228 = vmatpush1.msra.mxu0 0.0
      %1229 = vmatprep.subr.mxu0 0.0
      %1230 = vmatpush1.msra.mxu0 0.0
      %1231 = vmatprep.subr.mxu0 0.0
      %1232 = vmatpush1.msra.mxu0 0.0
      %1233 = vmatprep.subr.mxu0 0.0
      %1234 = vmatpush1.msra.mxu0 0.0
      %1235 = vmatprep.subr.mxu0 0.0
      %1236 = vmatpush1.msra.mxu0 0.0
      %1237 = vmatprep.subr.mxu0 0.0
      %1238 = vmatpush1.msra.mxu0 0.0
      %1239 = vmatprep.subr.mxu0 0.0
      %1240 = vmatpush1.msra.mxu0 0.0
      %1241 = vmatprep.subr.mxu0 0.0
      %1242 = vmatpush1.msra.mxu0 0.0
      %1243 = vmatprep.mubr.f32.mxu0 0.0
      %1244 = vmatmul.mubr.f32.gmra.mrb[0].mxu0 %v1177
      %v1245 = vpop.f32.mrb[0].mxu0
      %v1246 = vadd.f32 0.0, %v1245
      %v1247 = vpop.f32.mrb[0].mxu0
      %v1248 = vadd.f32 0.0, %v1247
      %1249 = vdwg.mxu0
      %v1250 = vadd.f32 %v1159, %v1246
      %v1251 = vadd.f32 %v1160, %v1248
      %v1252 = vld [vmem:[%s6] sm:$0xf]
      %1254 = vset.pattern.permute.xlu0 0
      %1255 = vperm.xlu0 %1254, %v1252
      %v1256 = vpop.permute.xlu0 %1255
      %v1258 = vadd.f32 %v1250, %v1256
      %v1259 = vadd.f32 %v1251, %v1256
      %vm1260 = vcmp.ge.f32.partialorder %v1258, 0.0
      %vm1261 = vcmp.ge.f32.partialorder %v1259, 0.0
      %v1262 = vmul.f32 %v1258, 0.2
      %v1263 = vmul.f32 %v1259, 0.2
      %v1264 = vsel %vm1260, %v1258, %v1262
      %v1265 = vsel %vm1261, %v1259, %v1263
      %1266 = vst [vmem:[#allocation2 + $0x28] sm:$0xf] %v1264
      %1267 = vst [vmem:[#allocation2 + $0x30] sm:$0xf] %v1265
      %v1268 = vld [vmem:[#allocation2] sm:$0xff]
      %v1269 = vld [vmem:[#allocation2 + $0x8] sm:$0xff]
      %v1270 = vld [vmem:[#allocation2 + $0x10] sm:$0xff]
      %v1271 = vld [vmem:[#allocation2 + $0x20] sm:$0xf]
      %v1272 = vld [vmem:[#allocation2 + $0x28] sm:$0xf]
      %v1273 = vld [vmem:[#allocation2 + $0x30] sm:$0xf]
      %1280 = vrot.lane.b32.xlu0 %v1268, 17
      %v1281 = vpop.permute.xlu0 %1280
      %1282 = vrot.lane.b32.xlu0 %v1269, 17
      %v1283 = vpop.permute.xlu0 %1282
      %1284 = vrot.lane.b32.xlu0 %v1270, 17
      %v1285 = vpop.permute.xlu0 %1284
      %1286 = vrot.lane.b32.xlu0 %v1271, 17
      %v1287 = vpop.permute.xlu0 %1286
      %1288 = vrot.lane.b32.xlu0 %v1272, 17
      %v1289 = vpop.permute.xlu0 %1288
      %1290 = vrot.lane.b32.xlu0 %v1273, 17
      %v1291 = vpop.permute.xlu0 %1290
      %v1292 = vsel %vm450, %v1281, %v1283
      %v1293 = vsel %vm450, %v1283, %v1285
      %v1294 = vsel %vm450, %v1287, %v1289
      %v1295 = vsel %vm450, %v1289, %v1291
      %v1300 = vsel %vm439, %v1292, 0.0
      %v1301 = vsel %vm440, %v1293, 0.0
      %v1302 = vsel %vm439, %v1294, 0.0
      %v1303 = vsel %vm440, %v1295, 0.0
      %v1304 = vld [vmem:[%s2] sm:$0xf]
      %s1305 = scalar_lea.vmem %s2, 4
      %v1306 = vld [vmem:[%s1305] sm:$0xf]
      %1307 = vrot.lane.b32.xlu0 %v1268, 16
      %v1308 = vpop.permute.xlu0 %1307
      %1309 = vrot.lane.b32.xlu0 %v1269, 16
      %v1310 = vpop.permute.xlu0 %1309
      %1311 = vrot.lane.b32.xlu0 %v1270, 16
      %v1312 = vpop.permute.xlu0 %1311
      %1313 = vrot.lane.b32.xlu0 %v1271, 16
      %v1314 = vpop.permute.xlu0 %1313
      %1315 = vrot.lane.b32.xlu0 %v1272, 16
      %v1316 = vpop.permute.xlu0 %1315
      %1317 = vrot.lane.b32.xlu0 %v1273, 16
      %v1318 = vpop.permute.xlu0 %1317
      %v1319 = vsel %vm466, %v1308, %v1310
      %v1320 = vsel %vm466, %v1310, %v1312
      %v1321 = vsel %vm466, %v1314, %v1316
      %v1322 = vsel %vm466, %v1316, %v1318
      %vm1325 = vcmask 97280
      %v1327 = vsel %vm1325, %v1306, 0
      %vm1329 = vcmask 1043456
      %v1330 = vsel %vm1329, %v1321, 0
      %v1332 = vsel %vm1329, %v1322, 0
      %1334 = vmatprep.subr.mxu0 %v1320
      %1335 = vmatpush1.msra.mxu0 %v1319
      %1336 = vmatprep.subr.mxu0 %v1332
      %1337 = vmatpush1.msra.mxu0 %v1330
      %1338 = vmatprep.subr.mxu0 0.0
      %1339 = vmatpush1.msra.mxu0 0.0
      %1340 = vmatprep.subr.mxu0 0.0
      %1341 = vmatpush1.msra.mxu0 0.0
      %1342 = vmatprep.subr.mxu0 0.0
      %1343 = vmatpush1.msra.mxu0 0.0
      %1344 = vmatprep.subr.mxu0 0.0
      %1345 = vmatpush1.msra.mxu0 0.0
      %1346 = vmatprep.subr.mxu0 0.0
      %1347 = vmatpush1.msra.mxu0 0.0
      %1348 = vmatprep.subr.mxu0 0.0
      %1349 = vmatpush1.msra.mxu0 0.0
      %1350 = vmatprep.subr.mxu0 0.0
      %1351 = vmatpush1.msra.mxu0 0.0
      %1352 = vmatprep.subr.mxu0 0.0
      %1353 = vmatpush1.msra.mxu0 0.0
      %1354 = vmatprep.subr.mxu0 0.0
      %1355 = vmatpush1.msra.mxu0 0.0
      %1356 = vmatprep.subr.mxu0 0.0
      %1357 = vmatpush1.msra.mxu0 0.0
      %1358 = vmatprep.subr.mxu0 0.0
      %1359 = vmatpush1.msra.mxu0 0.0
      %1360 = vmatprep.subr.mxu0 0.0
      %1361 = vmatpush1.msra.mxu0 0.0
      %1362 = vmatprep.subr.mxu0 0.0
      %1363 = vmatpush1.msra.mxu0 0.0
      %1364 = vmatprep.subr.mxu0 0.0
      %1365 = vmatpush1.msra.mxu0 0.0
      %1366 = vmatprep.subr.mxu0 0.0
      %1367 = vmatpush1.msra.mxu0 0.0
      %1368 = vmatprep.subr.mxu0 0.0
      %1369 = vmatpush1.msra.mxu0 0.0
      %1370 = vmatprep.subr.mxu0 0.0
      %1371 = vmatpush1.msra.mxu0 0.0
      %1372 = vmatprep.subr.mxu0 0.0
      %1373 = vmatpush1.msra.mxu0 0.0
      %1374 = vmatprep.subr.mxu0 0.0
      %1375 = vmatpush1.msra.mxu0 0.0
      %1376 = vmatprep.subr.mxu0 0.0
      %1377 = vmatpush1.msra.mxu0 0.0
      %1378 = vmatprep.subr.mxu0 0.0
      %1379 = vmatpush1.msra.mxu0 0.0
      %1380 = vmatprep.subr.mxu0 0.0
      %1381 = vmatpush1.msra.mxu0 0.0
      %1382 = vmatprep.subr.mxu0 0.0
      %1383 = vmatpush1.msra.mxu0 0.0
      %1384 = vmatprep.subr.mxu0 0.0
      %1385 = vmatpush1.msra.mxu0 0.0
      %1386 = vmatprep.subr.mxu0 0.0
      %1387 = vmatpush1.msra.mxu0 0.0
      %1388 = vmatprep.subr.mxu0 0.0
      %1389 = vmatpush1.msra.mxu0 0.0
      %1390 = vmatprep.subr.mxu0 0.0
      %1391 = vmatpush1.msra.mxu0 0.0
      %1392 = vmatprep.subr.mxu0 0.0
      %1393 = vmatpush1.msra.mxu0 0.0
      %1394 = vmatprep.subr.mxu0 0.0
      %1395 = vmatpush1.msra.mxu0 0.0
      %1396 = vmatprep.subr.mxu0 0.0
      %1397 = vmatpush1.msra.mxu0 0.0
      %1398 = vmatprep.mubr.f32.mxu0 0.0
      %1399 = vmatmul.mubr.f32.gmra.mrb[0].mxu0 %v1327
      %v1400 = vpop.f32.mrb[0].mxu0
      %v1401 = vadd.f32 0.0, %v1400
      %v1402 = vpop.f32.mrb[0].mxu0
      %v1403 = vadd.f32 0.0, %v1402
      %1404 = vdwg.mxu0
      %v1406 = vsel %vm1325, %v1304, 0
      %v1409 = vsel %vm1329, %v1302, 0
      %v1412 = vsel %vm1329, %v1303, 0
      %1414 = vmatprep.subr.mxu0 %v1301
      %1415 = vmatpush1.msra.mxu0 %v1300
      %1416 = vmatprep.subr.mxu0 %v1412
      %1417 = vmatpush1.msra.mxu0 %v1409
      %1418 = vmatprep.subr.mxu0 0.0
      %1419 = vmatpush1.msra.mxu0 0.0
      %1420 = vmatprep.subr.mxu0 0.0
      %1421 = vmatpush1.msra.mxu0 0.0
      %1422 = vmatprep.subr.mxu0 0.0
      %1423 = vmatpush1.msra.mxu0 0.0
      %1424 = vmatprep.subr.mxu0 0.0
      %1425 = vmatpush1.msra.mxu0 0.0
      %1426 = vmatprep.subr.mxu0 0.0
      %1427 = vmatpush1.msra.mxu0 0.0
      %1428 = vmatprep.subr.mxu0 0.0
      %1429 = vmatpush1.msra.mxu0 0.0
      %1430 = vmatprep.subr.mxu0 0.0
      %1431 = vmatpush1.msra.mxu0 0.0
      %1432 = vmatprep.subr.mxu0 0.0
      %1433 = vmatpush1.msra.mxu0 0.0
      %1434 = vmatprep.subr.mxu0 0.0
      %1435 = vmatpush1.msra.mxu0 0.0
      %1436 = vmatprep.subr.mxu0 0.0
      %1437 = vmatpush1.msra.mxu0 0.0
      %1438 = vmatprep.subr.mxu0 0.0
      %1439 = vmatpush1.msra.mxu0 0.0
      %1440 = vmatprep.subr.mxu0 0.0
      %1441 = vmatpush1.msra.mxu0 0.0
      %1442 = vmatprep.subr.mxu0 0.0
      %1443 = vmatpush1.msra.mxu0 0.0
      %1444 = vmatprep.subr.mxu0 0.0
      %1445 = vmatpush1.msra.mxu0 0.0
      %1446 = vmatprep.subr.mxu0 0.0
      %1447 = vmatpush1.msra.mxu0 0.0
      %1448 = vmatprep.subr.mxu0 0.0
      %1449 = vmatpush1.msra.mxu0 0.0
      %1450 = vmatprep.subr.mxu0 0.0
      %1451 = vmatpush1.msra.mxu0 0.0
      %1452 = vmatprep.subr.mxu0 0.0
      %1453 = vmatpush1.msra.mxu0 0.0
      %1454 = vmatprep.subr.mxu0 0.0
      %1455 = vmatpush1.msra.mxu0 0.0
      %1456 = vmatprep.subr.mxu0 0.0
      %1457 = vmatpush1.msra.mxu0 0.0
      %1458 = vmatprep.subr.mxu0 0.0
      %1459 = vmatpush1.msra.mxu0 0.0
      %1460 = vmatprep.subr.mxu0 0.0
      %1461 = vmatpush1.msra.mxu0 0.0
      %1462 = vmatprep.subr.mxu0 0.0
      %1463 = vmatpush1.msra.mxu0 0.0
      %1464 = vmatprep.subr.mxu0 0.0
      %1465 = vmatpush1.msra.mxu0 0.0
      %1466 = vmatprep.subr.mxu0 0.0
      %1467 = vmatpush1.msra.mxu0 0.0
      %1468 = vmatprep.subr.mxu0 0.0
      %1469 = vmatpush1.msra.mxu0 0.0
      %1470 = vmatprep.subr.mxu0 0.0
      %1471 = vmatpush1.msra.mxu0 0.0
      %1472 = vmatprep.subr.mxu0 0.0
      %1473 = vmatpush1.msra.mxu0 0.0
      %1474 = vmatprep.subr.mxu0 0.0
      %1475 = vmatpush1.msra.mxu0 0.0
      %1476 = vmatprep.subr.mxu0 0.0
      %1477 = vmatpush1.msra.mxu0 0.0
      %1478 = vmatprep.mubr.f32.mxu0 0.0
      %1479 = vmatmul.mubr.f32.gmra.mrb[0].mxu0 %v1406
      %v1480 = vpop.f32.mrb[0].mxu0
      %v1481 = vadd.f32 %v1401, %v1480
      %v1482 = vpop.f32.mrb[0].mxu0
      %v1483 = vadd.f32 %v1403, %v1482
      %1484 = vdwg.mxu0
      %1485 = vrot.lane.b32.xlu0 %v1268, 15
      %v1486 = vpop.permute.xlu0 %1485
      %1487 = vrot.lane.b32.xlu0 %v1269, 15
      %v1488 = vpop.permute.xlu0 %1487
      %1489 = vrot.lane.b32.xlu0 %v1270, 15
      %v1490 = vpop.permute.xlu0 %1489
      %1491 = vrot.lane.b32.xlu0 %v1271, 15
      %v1492 = vpop.permute.xlu0 %1491
      %1493 = vrot.lane.b32.xlu0 %v1272, 15
      %v1494 = vpop.permute.xlu0 %1493
      %1495 = vrot.lane.b32.xlu0 %v1273, 15
      %v1496 = vpop.permute.xlu0 %1495
      %v1497 = vsel %vm630, %v1486, %v1488
      %v1498 = vsel %vm630, %v1488, %v1490
      %v1499 = vsel %vm630, %v1492, %v1494
      %v1500 = vsel %vm630, %v1494, %v1496
      %v1505 = vsel %vm622, %v1497, 0.0
      %v1506 = vsel %vm623, %v1498, 0.0
      %v1507 = vsel %vm622, %v1499, 0.0
      %v1508 = vsel %vm623, %v1500, 0.0
      %s1509 = scalar_lea.vmem %s2, 8
      %v1510 = vld [vmem:[%s1509] sm:$0xf]
      %v1512 = vsel %vm1325, %v1510, 0
      %v1515 = vsel %vm1329, %v1507, 0
      %v1518 = vsel %vm1329, %v1508, 0
      %1520 = vmatprep.subr.mxu0 %v1506
      %1521 = vmatpush1.msra.mxu0 %v1505
      %1522 = vmatprep.subr.mxu0 %v1518
      %1523 = vmatpush1.msra.mxu0 %v1515
      %1524 = vmatprep.subr.mxu0 0.0
      %1525 = vmatpush1.msra.mxu0 0.0
      %1526 = vmatprep.subr.mxu0 0.0
      %1527 = vmatpush1.msra.mxu0 0.0
      %1528 = vmatprep.subr.mxu0 0.0
      %1529 = vmatpush1.msra.mxu0 0.0
      %1530 = vmatprep.subr.mxu0 0.0
      %1531 = vmatpush1.msra.mxu0 0.0
      %1532 = vmatprep.subr.mxu0 0.0
      %1533 = vmatpush1.msra.mxu0 0.0
      %1534 = vmatprep.subr.mxu0 0.0
      %1535 = vmatpush1.msra.mxu0 0.0
      %1536 = vmatprep.subr.mxu0 0.0
      %1537 = vmatpush1.msra.mxu0 0.0
      %1538 = vmatprep.subr.mxu0 0.0
      %1539 = vmatpush1.msra.mxu0 0.0
      %1540 = vmatprep.subr.mxu0 0.0
      %1541 = vmatpush1.msra.mxu0 0.0
      %1542 = vmatprep.subr.mxu0 0.0
      %1543 = vmatpush1.msra.mxu0 0.0
      %1544 = vmatprep.subr.mxu0 0.0
      %1545 = vmatpush1.msra.mxu0 0.0
      %1546 = vmatprep.subr.mxu0 0.0
      %1547 = vmatpush1.msra.mxu0 0.0
      %1548 = vmatprep.subr.mxu0 0.0
      %1549 = vmatpush1.msra.mxu0 0.0
      %1550 = vmatprep.subr.mxu0 0.0
      %1551 = vmatpush1.msra.mxu0 0.0
      %1552 = vmatprep.subr.mxu0 0.0
      %1553 = vmatpush1.msra.mxu0 0.0
      %1554 = vmatprep.subr.mxu0 0.0
      %1555 = vmatpush1.msra.mxu0 0.0
      %1556 = vmatprep.subr.mxu0 0.0
      %1557 = vmatpush1.msra.mxu0 0.0
      %1558 = vmatprep.subr.mxu0 0.0
      %1559 = vmatpush1.msra.mxu0 0.0
      %1560 = vmatprep.subr.mxu0 0.0
      %1561 = vmatpush1.msra.mxu0 0.0
      %1562 = vmatprep.subr.mxu0 0.0
      %1563 = vmatpush1.msra.mxu0 0.0
      %1564 = vmatprep.subr.mxu0 0.0
      %1565 = vmatpush1.msra.mxu0 0.0
      %1566 = vmatprep.subr.mxu0 0.0
      %1567 = vmatpush1.msra.mxu0 0.0
      %1568 = vmatprep.subr.mxu0 0.0
      %1569 = vmatpush1.msra.mxu0 0.0
      %1570 = vmatprep.subr.mxu0 0.0
      %1571 = vmatpush1.msra.mxu0 0.0
      %1572 = vmatprep.subr.mxu0 0.0
      %1573 = vmatpush1.msra.mxu0 0.0
      %1574 = vmatprep.subr.mxu0 0.0
      %1575 = vmatpush1.msra.mxu0 0.0
      %1576 = vmatprep.subr.mxu0 0.0
      %1577 = vmatpush1.msra.mxu0 0.0
      %1578 = vmatprep.subr.mxu0 0.0
      %1579 = vmatpush1.msra.mxu0 0.0
      %1580 = vmatprep.subr.mxu0 0.0
      %1581 = vmatpush1.msra.mxu0 0.0
      %1582 = vmatprep.subr.mxu0 0.0
      %1583 = vmatpush1.msra.mxu0 0.0
      %1584 = vmatprep.mubr.f32.mxu0 0.0
      %1585 = vmatmul.mubr.f32.gmra.mrb[0].mxu0 %v1512
      %v1586 = vpop.f32.mrb[0].mxu0
      %v1587 = vadd.f32 0.0, %v1586
      %v1588 = vpop.f32.mrb[0].mxu0
      %v1589 = vadd.f32 0.0, %v1588
      %1590 = vdwg.mxu0
      %v1591 = vadd.f32 %v1481, %v1587
      %v1592 = vadd.f32 %v1483, %v1589
      %1593 = vrot.lane.b32.xlu0 %v1268, 1
      %v1594 = vpop.permute.xlu0 %1593
      %1595 = vrot.lane.b32.xlu0 %v1269, 1
      %v1596 = vpop.permute.xlu0 %1595
      %1597 = vrot.lane.b32.xlu0 %v1270, 1
      %v1598 = vpop.permute.xlu0 %1597
      %1599 = vrot.lane.b32.xlu0 %v1271, 1
      %v1600 = vpop.permute.xlu0 %1599
      %1601 = vrot.lane.b32.xlu0 %v1272, 1
      %v1602 = vpop.permute.xlu0 %1601
      %1603 = vrot.lane.b32.xlu0 %v1273, 1
      %v1604 = vpop.permute.xlu0 %1603
      %v1605 = vsel %vm721, %v1594, %v1596
      %v1606 = vsel %vm721, %v1596, %v1598
      %v1607 = vsel %vm721, %v1600, %v1602
      %v1608 = vsel %vm721, %v1602, %v1604
      %v1613 = vsel %vm439, %v1605, 0.0
      %v1614 = vsel %vm440, %v1606, 0.0
      %v1615 = vsel %vm439, %v1607, 0.0
      %v1616 = vsel %vm440, %v1608, 0.0
      %s1617 = scalar_lea.vmem %s2, 12
      %v1618 = vld [vmem:[%s1617] sm:$0xf]
      %v1620 = vsel %vm1325, %v1618, 0
      %v1623 = vsel %vm1329, %v1615, 0
      %v1626 = vsel %vm1329, %v1616, 0
      %1628 = vmatprep.subr.mxu0 %v1614
      %1629 = vmatpush1.msra.mxu0 %v1613
      %1630 = vmatprep.subr.mxu0 %v1626
      %1631 = vmatpush1.msra.mxu0 %v1623
      %1632 = vmatprep.subr.mxu0 0.0
      %1633 = vmatpush1.msra.mxu0 0.0
      %1634 = vmatprep.subr.mxu0 0.0
      %1635 = vmatpush1.msra.mxu0 0.0
      %1636 = vmatprep.subr.mxu0 0.0
      %1637 = vmatpush1.msra.mxu0 0.0
      %1638 = vmatprep.subr.mxu0 0.0
      %1639 = vmatpush1.msra.mxu0 0.0
      %1640 = vmatprep.subr.mxu0 0.0
      %1641 = vmatpush1.msra.mxu0 0.0
      %1642 = vmatprep.subr.mxu0 0.0
      %1643 = vmatpush1.msra.mxu0 0.0
      %1644 = vmatprep.subr.mxu0 0.0
      %1645 = vmatpush1.msra.mxu0 0.0
      %1646 = vmatprep.subr.mxu0 0.0
      %1647 = vmatpush1.msra.mxu0 0.0
      %1648 = vmatprep.subr.mxu0 0.0
      %1649 = vmatpush1.msra.mxu0 0.0
      %1650 = vmatprep.subr.mxu0 0.0
      %1651 = vmatpush1.msra.mxu0 0.0
      %1652 = vmatprep.subr.mxu0 0.0
      %1653 = vmatpush1.msra.mxu0 0.0
      %1654 = vmatprep.subr.mxu0 0.0
      %1655 = vmatpush1.msra.mxu0 0.0
      %1656 = vmatprep.subr.mxu0 0.0
      %1657 = vmatpush1.msra.mxu0 0.0
      %1658 = vmatprep.subr.mxu0 0.0
      %1659 = vmatpush1.msra.mxu0 0.0
      %1660 = vmatprep.subr.mxu0 0.0
      %1661 = vmatpush1.msra.mxu0 0.0
      %1662 = vmatprep.subr.mxu0 0.0
      %1663 = vmatpush1.msra.mxu0 0.0
      %1664 = vmatprep.subr.mxu0 0.0
      %1665 = vmatpush1.msra.mxu0 0.0
      %1666 = vmatprep.subr.mxu0 0.0
      %1667 = vmatpush1.msra.mxu0 0.0
      %1668 = vmatprep.subr.mxu0 0.0
      %1669 = vmatpush1.msra.mxu0 0.0
      %1670 = vmatprep.subr.mxu0 0.0
      %1671 = vmatpush1.msra.mxu0 0.0
      %1672 = vmatprep.subr.mxu0 0.0
      %1673 = vmatpush1.msra.mxu0 0.0
      %1674 = vmatprep.subr.mxu0 0.0
      %1675 = vmatpush1.msra.mxu0 0.0
      %1676 = vmatprep.subr.mxu0 0.0
      %1677 = vmatpush1.msra.mxu0 0.0
      %1678 = vmatprep.subr.mxu0 0.0
      %1679 = vmatpush1.msra.mxu0 0.0
      %1680 = vmatprep.subr.mxu0 0.0
      %1681 = vmatpush1.msra.mxu0 0.0
      %1682 = vmatprep.subr.mxu0 0.0
      %1683 = vmatpush1.msra.mxu0 0.0
      %1684 = vmatprep.subr.mxu0 0.0
      %1685 = vmatpush1.msra.mxu0 0.0
      %1686 = vmatprep.subr.mxu0 0.0
      %1687 = vmatpush1.msra.mxu0 0.0
      %1688 = vmatprep.subr.mxu0 0.0
      %1689 = vmatpush1.msra.mxu0 0.0
      %1690 = vmatprep.subr.mxu0 0.0
      %1691 = vmatpush1.msra.mxu0 0.0
      %1692 = vmatprep.mubr.f32.mxu0 0.0
      %1693 = vmatmul.mubr.f32.gmra.mrb[0].mxu0 %v1620
      %v1694 = vpop.f32.mrb[0].mxu0
      %v1695 = vadd.f32 0.0, %v1694
      %v1696 = vpop.f32.mrb[0].mxu0
      %v1697 = vadd.f32 0.0, %v1696
      %1698 = vdwg.mxu0
      %v1699 = vadd.f32 %v1591, %v1695
      %v1700 = vadd.f32 %v1592, %v1697
      %s1701 = scalar_lea.vmem %s2, 16
      %v1702 = vld [vmem:[%s1701] sm:$0xf]
      %v1704 = vsel %vm1325, %v1702, 0
      %v1706 = vsel %vm1329, %v1272, 0
      %v1708 = vsel %vm1329, %v1273, 0
      %1710 = vmatprep.subr.mxu0 %v1270
      %1711 = vmatpush1.msra.mxu0 %v1269
      %1712 = vmatprep.subr.mxu0 %v1708
      %1713 = vmatpush1.msra.mxu0 %v1706
      %1714 = vmatprep.subr.mxu0 0.0
      %1715 = vmatpush1.msra.mxu0 0.0
      %1716 = vmatprep.subr.mxu0 0.0
      %1717 = vmatpush1.msra.mxu0 0.0
      %1718 = vmatprep.subr.mxu0 0.0
      %1719 = vmatpush1.msra.mxu0 0.0
      %1720 = vmatprep.subr.mxu0 0.0
      %1721 = vmatpush1.msra.mxu0 0.0
      %1722 = vmatprep.subr.mxu0 0.0
      %1723 = vmatpush1.msra.mxu0 0.0
      %1724 = vmatprep.subr.mxu0 0.0
      %1725 = vmatpush1.msra.mxu0 0.0
      %1726 = vmatprep.subr.mxu0 0.0
      %1727 = vmatpush1.msra.mxu0 0.0
      %1728 = vmatprep.subr.mxu0 0.0
      %1729 = vmatpush1.msra.mxu0 0.0
      %1730 = vmatprep.subr.mxu0 0.0
      %1731 = vmatpush1.msra.mxu0 0.0
      %1732 = vmatprep.subr.mxu0 0.0
      %1733 = vmatpush1.msra.mxu0 0.0
      %1734 = vmatprep.subr.mxu0 0.0
      %1735 = vmatpush1.msra.mxu0 0.0
      %1736 = vmatprep.subr.mxu0 0.0
      %1737 = vmatpush1.msra.mxu0 0.0
      %1738 = vmatprep.subr.mxu0 0.0
      %1739 = vmatpush1.msra.mxu0 0.0
      %1740 = vmatprep.subr.mxu0 0.0
      %1741 = vmatpush1.msra.mxu0 0.0
      %1742 = vmatprep.subr.mxu0 0.0
      %1743 = vmatpush1.msra.mxu0 0.0
      %1744 = vmatprep.subr.mxu0 0.0
      %1745 = vmatpush1.msra.mxu0 0.0
      %1746 = vmatprep.subr.mxu0 0.0
      %1747 = vmatpush1.msra.mxu0 0.0
      %1748 = vmatprep.subr.mxu0 0.0
      %1749 = vmatpush1.msra.mxu0 0.0
      %1750 = vmatprep.subr.mxu0 0.0
      %1751 = vmatpush1.msra.mxu0 0.0
      %1752 = vmatprep.subr.mxu0 0.0
      %1753 = vmatpush1.msra.mxu0 0.0
      %1754 = vmatprep.subr.mxu0 0.0
      %1755 = vmatpush1.msra.mxu0 0.0
      %1756 = vmatprep.subr.mxu0 0.0
      %1757 = vmatpush1.msra.mxu0 0.0
      %1758 = vmatprep.subr.mxu0 0.0
      %1759 = vmatpush1.msra.mxu0 0.0
      %1760 = vmatprep.subr.mxu0 0.0
      %1761 = vmatpush1.msra.mxu0 0.0
      %1762 = vmatprep.subr.mxu0 0.0
      %1763 = vmatpush1.msra.mxu0 0.0
      %1764 = vmatprep.subr.mxu0 0.0
      %1765 = vmatpush1.msra.mxu0 0.0
      %1766 = vmatprep.subr.mxu0 0.0
      %1767 = vmatpush1.msra.mxu0 0.0
      %1768 = vmatprep.subr.mxu0 0.0
      %1769 = vmatpush1.msra.mxu0 0.0
      %1770 = vmatprep.subr.mxu0 0.0
      %1771 = vmatpush1.msra.mxu0 0.0
      %1772 = vmatprep.subr.mxu0 0.0
      %1773 = vmatpush1.msra.mxu0 0.0
      %1774 = vmatprep.mubr.f32.mxu0 0.0
      %1775 = vmatmul.mubr.f32.gmra.mrb[0].mxu0 %v1704
      %v1776 = vpop.f32.mrb[0].mxu0
      %v1777 = vadd.f32 0.0, %v1776
      %v1778 = vpop.f32.mrb[0].mxu0
      %v1779 = vadd.f32 0.0, %v1778
      %1780 = vdwg.mxu0
      %v1781 = vadd.f32 %v1699, %v1777
      %v1782 = vadd.f32 %v1700, %v1779
      %v1783 = vld [vmem:[#allocation2 + $0x8] sm:$0xff]
      %v1784 = vld [vmem:[#allocation2 + $0x10] sm:$0xff]
      %v1785 = vld [vmem:[#allocation2 + $0x18] sm:$0xff]
      %v1786 = vld [vmem:[#allocation2 + $0x28] sm:$0xf]
      %v1787 = vld [vmem:[#allocation2 + $0x30] sm:$0xf]
      %v1788 = vld [vmem:[#allocation2 + $0x38] sm:$0xf]
      %1795 = vrot.lane.b32.xlu0 %v1783, 127
      %v1796 = vpop.permute.xlu0 %1795
      %1797 = vrot.lane.b32.xlu0 %v1784, 127
      %v1798 = vpop.permute.xlu0 %1797
      %1799 = vrot.lane.b32.xlu0 %v1785, 127
      %v1800 = vpop.permute.xlu0 %1799
      %1801 = vrot.lane.b32.xlu0 %v1786, 127
      %v1802 = vpop.permute.xlu0 %1801
      %1803 = vrot.lane.b32.xlu0 %v1787, 127
      %v1804 = vpop.permute.xlu0 %1803
      %1805 = vrot.lane.b32.xlu0 %v1788, 127
      %v1806 = vpop.permute.xlu0 %1805
      %v1807 = vsel %vm896, %v1796, %v1798
      %v1808 = vsel %vm896, %v1798, %v1800
      %v1809 = vsel %vm896, %v1802, %v1804
      %v1810 = vsel %vm896, %v1804, %v1806
      %v1815 = vsel %vm622, %v1807, 0.0
      %v1816 = vsel %vm623, %v1808, 0.0
      %v1817 = vsel %vm622, %v1809, 0.0
      %v1818 = vsel %vm623, %v1810, 0.0
      %s1819 = scalar_lea.vmem %s2, 20
      %v1820 = vld [vmem:[%s1819] sm:$0xf]
      %v1822 = vsel %vm1325, %v1820, 0
      %v1825 = vsel %vm1329, %v1817, 0
      %v1828 = vsel %vm1329, %v1818, 0
      %1830 = vmatprep.subr.mxu0 %v1816
      %1831 = vmatpush1.msra.mxu0 %v1815
      %1832 = vmatprep.subr.mxu0 %v1828
      %1833 = vmatpush1.msra.mxu0 %v1825
      %1834 = vmatprep.subr.mxu0 0.0
      %1835 = vmatpush1.msra.mxu0 0.0
      %1836 = vmatprep.subr.mxu0 0.0
      %1837 = vmatpush1.msra.mxu0 0.0
      %1838 = vmatprep.subr.mxu0 0.0
      %1839 = vmatpush1.msra.mxu0 0.0
      %1840 = vmatprep.subr.mxu0 0.0
      %1841 = vmatpush1.msra.mxu0 0.0
      %1842 = vmatprep.subr.mxu0 0.0
      %1843 = vmatpush1.msra.mxu0 0.0
      %1844 = vmatprep.subr.mxu0 0.0
      %1845 = vmatpush1.msra.mxu0 0.0
      %1846 = vmatprep.subr.mxu0 0.0
      %1847 = vmatpush1.msra.mxu0 0.0
      %1848 = vmatprep.subr.mxu0 0.0
      %1849 = vmatpush1.msra.mxu0 0.0
      %1850 = vmatprep.subr.mxu0 0.0
      %1851 = vmatpush1.msra.mxu0 0.0
      %1852 = vmatprep.subr.mxu0 0.0
      %1853 = vmatpush1.msra.mxu0 0.0
      %1854 = vmatprep.subr.mxu0 0.0
      %1855 = vmatpush1.msra.mxu0 0.0
      %1856 = vmatprep.subr.mxu0 0.0
      %1857 = vmatpush1.msra.mxu0 0.0
      %1858 = vmatprep.subr.mxu0 0.0
      %1859 = vmatpush1.msra.mxu0 0.0
      %1860 = vmatprep.subr.mxu0 0.0
      %1861 = vmatpush1.msra.mxu0 0.0
      %1862 = vmatprep.subr.mxu0 0.0
      %1863 = vmatpush1.msra.mxu0 0.0
      %1864 = vmatprep.subr.mxu0 0.0
      %1865 = vmatpush1.msra.mxu0 0.0
      %1866 = vmatprep.subr.mxu0 0.0
      %1867 = vmatpush1.msra.mxu0 0.0
      %1868 = vmatprep.subr.mxu0 0.0
      %1869 = vmatpush1.msra.mxu0 0.0
      %1870 = vmatprep.subr.mxu0 0.0
      %1871 = vmatpush1.msra.mxu0 0.0
      %1872 = vmatprep.subr.mxu0 0.0
      %1873 = vmatpush1.msra.mxu0 0.0
      %1874 = vmatprep.subr.mxu0 0.0
      %1875 = vmatpush1.msra.mxu0 0.0
      %1876 = vmatprep.subr.mxu0 0.0
      %1877 = vmatpush1.msra.mxu0 0.0
      %1878 = vmatprep.subr.mxu0 0.0
      %1879 = vmatpush1.msra.mxu0 0.0
      %1880 = vmatprep.subr.mxu0 0.0
      %1881 = vmatpush1.msra.mxu0 0.0
      %1882 = vmatprep.subr.mxu0 0.0
      %1883 = vmatpush1.msra.mxu0 0.0
      %1884 = vmatprep.subr.mxu0 0.0
      %1885 = vmatpush1.msra.mxu0 0.0
      %1886 = vmatprep.subr.mxu0 0.0
      %1887 = vmatpush1.msra.mxu0 0.0
      %1888 = vmatprep.subr.mxu0 0.0
      %1889 = vmatpush1.msra.mxu0 0.0
      %1890 = vmatprep.subr.mxu0 0.0
      %1891 = vmatpush1.msra.mxu0 0.0
      %1892 = vmatprep.subr.mxu0 0.0
      %1893 = vmatpush1.msra.mxu0 0.0
      %1894 = vmatprep.mubr.f32.mxu0 0.0
      %1895 = vmatmul.mubr.f32.gmra.mrb[0].mxu0 %v1822
      %v1896 = vpop.f32.mrb[0].mxu0
      %v1897 = vadd.f32 0.0, %v1896
      %v1898 = vpop.f32.mrb[0].mxu0
      %v1899 = vadd.f32 0.0, %v1898
      %1900 = vdwg.mxu0
      %v1901 = vadd.f32 %v1781, %v1897
      %v1902 = vadd.f32 %v1782, %v1899
      %1903 = vrot.lane.b32.xlu0 %v1783, 113
      %v1904 = vpop.permute.xlu0 %1903
      %1905 = vrot.lane.b32.xlu0 %v1784, 113
      %v1906 = vpop.permute.xlu0 %1905
      %1907 = vrot.lane.b32.xlu0 %v1785, 113
      %v1908 = vpop.permute.xlu0 %1907
      %1909 = vrot.lane.b32.xlu0 %v1786, 113
      %v1910 = vpop.permute.xlu0 %1909
      %1911 = vrot.lane.b32.xlu0 %v1787, 113
      %v1912 = vpop.permute.xlu0 %1911
      %1913 = vrot.lane.b32.xlu0 %v1788, 113
      %v1914 = vpop.permute.xlu0 %1913
      %v1915 = vsel %vm987, %v1904, %v1906
      %v1916 = vsel %vm987, %v1906, %v1908
      %v1917 = vsel %vm987, %v1910, %v1912
      %v1918 = vsel %vm987, %v1912, %v1914
      %v1923 = vsel %vm439, %v1915, 0.0
      %v1924 = vsel %vm440, %v1916, 0.0
      %v1925 = vsel %vm439, %v1917, 0.0
      %v1926 = vsel %vm440, %v1918, 0.0
      %s1927 = scalar_lea.vmem %s2, 24
      %v1928 = vld [vmem:[%s1927] sm:$0xf]
      %v1930 = vsel %vm1325, %v1928, 0
      %v1933 = vsel %vm1329, %v1925, 0
      %v1936 = vsel %vm1329, %v1926, 0
      %1938 = vmatprep.subr.mxu0 %v1924
      %1939 = vmatpush1.msra.mxu0 %v1923
      %1940 = vmatprep.subr.mxu0 %v1936
      %1941 = vmatpush1.msra.mxu0 %v1933
      %1942 = vmatprep.subr.mxu0 0.0
      %1943 = vmatpush1.msra.mxu0 0.0
      %1944 = vmatprep.subr.mxu0 0.0
      %1945 = vmatpush1.msra.mxu0 0.0
      %1946 = vmatprep.subr.mxu0 0.0
      %1947 = vmatpush1.msra.mxu0 0.0
      %1948 = vmatprep.subr.mxu0 0.0
      %1949 = vmatpush1.msra.mxu0 0.0
      %1950 = vmatprep.subr.mxu0 0.0
      %1951 = vmatpush1.msra.mxu0 0.0
      %1952 = vmatprep.subr.mxu0 0.0
      %1953 = vmatpush1.msra.mxu0 0.0
      %1954 = vmatprep.subr.mxu0 0.0
      %1955 = vmatpush1.msra.mxu0 0.0
      %1956 = vmatprep.subr.mxu0 0.0
      %1957 = vmatpush1.msra.mxu0 0.0
      %1958 = vmatprep.subr.mxu0 0.0
      %1959 = vmatpush1.msra.mxu0 0.0
      %1960 = vmatprep.subr.mxu0 0.0
      %1961 = vmatpush1.msra.mxu0 0.0
      %1962 = vmatprep.subr.mxu0 0.0
      %1963 = vmatpush1.msra.mxu0 0.0
      %1964 = vmatprep.subr.mxu0 0.0
      %1965 = vmatpush1.msra.mxu0 0.0
      %1966 = vmatprep.subr.mxu0 0.0
      %1967 = vmatpush1.msra.mxu0 0.0
      %1968 = vmatprep.subr.mxu0 0.0
      %1969 = vmatpush1.msra.mxu0 0.0
      %1970 = vmatprep.subr.mxu0 0.0
      %1971 = vmatpush1.msra.mxu0 0.0
      %1972 = vmatprep.subr.mxu0 0.0
      %1973 = vmatpush1.msra.mxu0 0.0
      %1974 = vmatprep.subr.mxu0 0.0
      %1975 = vmatpush1.msra.mxu0 0.0
      %1976 = vmatprep.subr.mxu0 0.0
      %1977 = vmatpush1.msra.mxu0 0.0
      %1978 = vmatprep.subr.mxu0 0.0
      %1979 = vmatpush1.msra.mxu0 0.0
      %1980 = vmatprep.subr.mxu0 0.0
      %1981 = vmatpush1.msra.mxu0 0.0
      %1982 = vmatprep.subr.mxu0 0.0
      %1983 = vmatpush1.msra.mxu0 0.0
      %1984 = vmatprep.subr.mxu0 0.0
      %1985 = vmatpush1.msra.mxu0 0.0
      %1986 = vmatprep.subr.mxu0 0.0
      %1987 = vmatpush1.msra.mxu0 0.0
      %1988 = vmatprep.subr.mxu0 0.0
      %1989 = vmatpush1.msra.mxu0 0.0
      %1990 = vmatprep.subr.mxu0 0.0
      %1991 = vmatpush1.msra.mxu0 0.0
      %1992 = vmatprep.subr.mxu0 0.0
      %1993 = vmatpush1.msra.mxu0 0.0
      %1994 = vmatprep.subr.mxu0 0.0
      %1995 = vmatpush1.msra.mxu0 0.0
      %1996 = vmatprep.subr.mxu0 0.0
      %1997 = vmatpush1.msra.mxu0 0.0
      %1998 = vmatprep.subr.mxu0 0.0
      %1999 = vmatpush1.msra.mxu0 0.0
      %2000 = vmatprep.subr.mxu0 0.0
      %2001 = vmatpush1.msra.mxu0 0.0
      %2002 = vmatprep.mubr.f32.mxu0 0.0
      %2003 = vmatmul.mubr.f32.gmra.mrb[0].mxu0 %v1930
      %v2004 = vpop.f32.mrb[0].mxu0
      %v2005 = vadd.f32 0.0, %v2004
      %v2006 = vpop.f32.mrb[0].mxu0
      %v2007 = vadd.f32 0.0, %v2006
      %2008 = vdwg.mxu0
      %v2009 = vadd.f32 %v1901, %v2005
      %v2010 = vadd.f32 %v1902, %v2007
      %s2011 = scalar_lea.vmem %s2, 28
      %v2012 = vld [vmem:[%s2011] sm:$0xf]
      %2013 = vrot.lane.b32.xlu0 %v1783, 112
      %v2014 = vpop.permute.xlu0 %2013
      %2015 = vrot.lane.b32.xlu0 %v1784, 112
      %v2016 = vpop.permute.xlu0 %2015
      %2017 = vrot.lane.b32.xlu0 %v1785, 112
      %v2018 = vpop.permute.xlu0 %2017
      %2019 = vrot.lane.b32.xlu0 %v1786, 112
      %v2020 = vpop.permute.xlu0 %2019
      %2021 = vrot.lane.b32.xlu0 %v1787, 112
      %v2022 = vpop.permute.xlu0 %2021
      %2023 = vrot.lane.b32.xlu0 %v1788, 112
      %v2024 = vpop.permute.xlu0 %2023
      %v2025 = vsel %vm1080, %v2014, %v2016
      %v2026 = vsel %vm1080, %v2016, %v2018
      %v2027 = vsel %vm1080, %v2020, %v2022
      %v2028 = vsel %vm1080, %v2022, %v2024
      %v2032 = vsel %vm1325, %v2012, 0
      %v2034 = vsel %vm1329, %v2027, 0
      %v2036 = vsel %vm1329, %v2028, 0
      %2038 = vmatprep.subr.mxu0 %v2026
      %2039 = vmatpush1.msra.mxu0 %v2025
      %2040 = vmatprep.subr.mxu0 %v2036
      %2041 = vmatpush1.msra.mxu0 %v2034
      %2042 = vmatprep.subr.mxu0 0.0
      %2043 = vmatpush1.msra.mxu0 0.0
      %2044 = vmatprep.subr.mxu0 0.0
      %2045 = vmatpush1.msra.mxu0 0.0
      %2046 = vmatprep.subr.mxu0 0.0
      %2047 = vmatpush1.msra.mxu0 0.0
      %2048 = vmatprep.subr.mxu0 0.0
      %2049 = vmatpush1.msra.mxu0 0.0
      %2050 = vmatprep.subr.mxu0 0.0
      %2051 = vmatpush1.msra.mxu0 0.0
      %2052 = vmatprep.subr.mxu0 0.0
      %2053 = vmatpush1.msra.mxu0 0.0
      %2054 = vmatprep.subr.mxu0 0.0
      %2055 = vmatpush1.msra.mxu0 0.0
      %2056 = vmatprep.subr.mxu0 0.0
      %2057 = vmatpush1.msra.mxu0 0.0
      %2058 = vmatprep.subr.mxu0 0.0
      %2059 = vmatpush1.msra.mxu0 0.0
      %2060 = vmatprep.subr.mxu0 0.0
      %2061 = vmatpush1.msra.mxu0 0.0
      %2062 = vmatprep.subr.mxu0 0.0
      %2063 = vmatpush1.msra.mxu0 0.0
      %2064 = vmatprep.subr.mxu0 0.0
      %2065 = vmatpush1.msra.mxu0 0.0
      %2066 = vmatprep.subr.mxu0 0.0
      %2067 = vmatpush1.msra.mxu0 0.0
      %2068 = vmatprep.subr.mxu0 0.0
      %2069 = vmatpush1.msra.mxu0 0.0
      %2070 = vmatprep.subr.mxu0 0.0
      %2071 = vmatpush1.msra.mxu0 0.0
      %2072 = vmatprep.subr.mxu0 0.0
      %2073 = vmatpush1.msra.mxu0 0.0
      %2074 = vmatprep.subr.mxu0 0.0
      %2075 = vmatpush1.msra.mxu0 0.0
      %2076 = vmatprep.subr.mxu0 0.0
      %2077 = vmatpush1.msra.mxu0 0.0
      %2078 = vmatprep.subr.mxu0 0.0
      %2079 = vmatpush1.msra.mxu0 0.0
      %2080 = vmatprep.subr.mxu0 0.0
      %2081 = vmatpush1.msra.mxu0 0.0
      %2082 = vmatprep.subr.mxu0 0.0
      %2083 = vmatpush1.msra.mxu0 0.0
      %2084 = vmatprep.subr.mxu0 0.0
      %2085 = vmatpush1.msra.mxu0 0.0
      %2086 = vmatprep.subr.mxu0 0.0
      %2087 = vmatpush1.msra.mxu0 0.0
      %2088 = vmatprep.subr.mxu0 0.0
      %2089 = vmatpush1.msra.mxu0 0.0
      %2090 = vmatprep.subr.mxu0 0.0
      %2091 = vmatpush1.msra.mxu0 0.0
      %2092 = vmatprep.subr.mxu0 0.0
      %2093 = vmatpush1.msra.mxu0 0.0
      %2094 = vmatprep.subr.mxu0 0.0
      %2095 = vmatpush1.msra.mxu0 0.0
      %2096 = vmatprep.subr.mxu0 0.0
      %2097 = vmatpush1.msra.mxu0 0.0
      %2098 = vmatprep.subr.mxu0 0.0
      %2099 = vmatpush1.msra.mxu0 0.0
      %2100 = vmatprep.subr.mxu0 0.0
      %2101 = vmatpush1.msra.mxu0 0.0
      %2102 = vmatprep.mubr.f32.mxu0 0.0
      %2103 = vmatmul.mubr.f32.gmra.mrb[0].mxu0 %v2032
      %v2104 = vpop.f32.mrb[0].mxu0
      %v2105 = vadd.f32 0.0, %v2104
      %v2106 = vpop.f32.mrb[0].mxu0
      %v2107 = vadd.f32 0.0, %v2106
      %2108 = vdwg.mxu0
      %v2109 = vadd.f32 %v2009, %v2105
      %v2110 = vadd.f32 %v2010, %v2107
      %2111 = vrot.lane.b32.xlu0 %v1783, 111
      %v2112 = vpop.permute.xlu0 %2111
      %2113 = vrot.lane.b32.xlu0 %v1784, 111
      %v2114 = vpop.permute.xlu0 %2113
      %2115 = vrot.lane.b32.xlu0 %v1785, 111
      %v2116 = vpop.permute.xlu0 %2115
      %2117 = vrot.lane.b32.xlu0 %v1786, 111
      %v2118 = vpop.permute.xlu0 %2117
      %2119 = vrot.lane.b32.xlu0 %v1787, 111
      %v2120 = vpop.permute.xlu0 %2119
      %2121 = vrot.lane.b32.xlu0 %v1788, 111
      %v2122 = vpop.permute.xlu0 %2121
      %v2123 = vsel %vm1167, %v2112, %v2114
      %v2124 = vsel %vm1167, %v2114, %v2116
      %v2125 = vsel %vm1167, %v2118, %v2120
      %v2126 = vsel %vm1167, %v2120, %v2122
      %v2131 = vsel %vm622, %v2123, 0.0
      %v2132 = vsel %vm623, %v2124, 0.0
      %v2133 = vsel %vm622, %v2125, 0.0
      %v2134 = vsel %vm623, %v2126, 0.0
      %s2135 = scalar_lea.vmem %s2, 32
      %v2136 = vld [vmem:[%s2135] sm:$0xf]
      %v2138 = vsel %vm1325, %v2136, 0
      %v2141 = vsel %vm1329, %v2133, 0
      %v2144 = vsel %vm1329, %v2134, 0
      %2146 = vmatprep.subr.mxu0 %v2132
      %2147 = vmatpush1.msra.mxu0 %v2131
      %2148 = vmatprep.subr.mxu0 %v2144
      %2149 = vmatpush1.msra.mxu0 %v2141
      %2150 = vmatprep.subr.mxu0 0.0
      %2151 = vmatpush1.msra.mxu0 0.0
      %2152 = vmatprep.subr.mxu0 0.0
      %2153 = vmatpush1.msra.mxu0 0.0
      %2154 = vmatprep.subr.mxu0 0.0
      %2155 = vmatpush1.msra.mxu0 0.0
      %2156 = vmatprep.subr.mxu0 0.0
      %2157 = vmatpush1.msra.mxu0 0.0
      %2158 = vmatprep.subr.mxu0 0.0
      %2159 = vmatpush1.msra.mxu0 0.0
      %2160 = vmatprep.subr.mxu0 0.0
      %2161 = vmatpush1.msra.mxu0 0.0
      %2162 = vmatprep.subr.mxu0 0.0
      %2163 = vmatpush1.msra.mxu0 0.0
      %2164 = vmatprep.subr.mxu0 0.0
      %2165 = vmatpush1.msra.mxu0 0.0
      %2166 = vmatprep.subr.mxu0 0.0
      %2167 = vmatpush1.msra.mxu0 0.0
      %2168 = vmatprep.subr.mxu0 0.0
      %2169 = vmatpush1.msra.mxu0 0.0
      %2170 = vmatprep.subr.mxu0 0.0
      %2171 = vmatpush1.msra.mxu0 0.0
      %2172 = vmatprep.subr.mxu0 0.0
      %2173 = vmatpush1.msra.mxu0 0.0
      %2174 = vmatprep.subr.mxu0 0.0
      %2175 = vmatpush1.msra.mxu0 0.0
      %2176 = vmatprep.subr.mxu0 0.0
      %2177 = vmatpush1.msra.mxu0 0.0
      %2178 = vmatprep.subr.mxu0 0.0
      %2179 = vmatpush1.msra.mxu0 0.0
      %2180 = vmatprep.subr.mxu0 0.0
      %2181 = vmatpush1.msra.mxu0 0.0
      %2182 = vmatprep.subr.mxu0 0.0
      %2183 = vmatpush1.msra.mxu0 0.0
      %2184 = vmatprep.subr.mxu0 0.0
      %2185 = vmatpush1.msra.mxu0 0.0
      %2186 = vmatprep.subr.mxu0 0.0
      %2187 = vmatpush1.msra.mxu0 0.0
      %2188 = vmatprep.subr.mxu0 0.0
      %2189 = vmatpush1.msra.mxu0 0.0
      %2190 = vmatprep.subr.mxu0 0.0
      %2191 = vmatpush1.msra.mxu0 0.0
      %2192 = vmatprep.subr.mxu0 0.0
      %2193 = vmatpush1.msra.mxu0 0.0
      %2194 = vmatprep.subr.mxu0 0.0
      %2195 = vmatpush1.msra.mxu0 0.0
      %2196 = vmatprep.subr.mxu0 0.0
      %2197 = vmatpush1.msra.mxu0 0.0
      %2198 = vmatprep.subr.mxu0 0.0
      %2199 = vmatpush1.msra.mxu0 0.0
      %2200 = vmatprep.subr.mxu0 0.0
      %2201 = vmatpush1.msra.mxu0 0.0
      %2202 = vmatprep.subr.mxu0 0.0
      %2203 = vmatpush1.msra.mxu0 0.0
      %2204 = vmatprep.subr.mxu0 0.0
      %2205 = vmatpush1.msra.mxu0 0.0
      %2206 = vmatprep.subr.mxu0 0.0
      %2207 = vmatpush1.msra.mxu0 0.0
      %2208 = vmatprep.subr.mxu0 0.0
      %2209 = vmatpush1.msra.mxu0 0.0
      %2210 = vmatprep.mubr.f32.mxu0 0.0
      %2211 = vmatmul.mubr.f32.gmra.mrb[0].mxu0 %v2138
      %v2212 = vpop.f32.mrb[0].mxu0
      %v2213 = vadd.f32 0.0, %v2212
      %v2214 = vpop.f32.mrb[0].mxu0
      %v2215 = vadd.f32 0.0, %v2214
      %2216 = vdwg.mxu0
      %v2217 = vadd.f32 %v2109, %v2213
      %v2218 = vadd.f32 %v2110, %v2215
      %v2219 = vld [vmem:[%s7] sm:$0xf]
      %2221 = vset.pattern.permute.xlu0 0
      %2222 = vperm.xlu0 %2221, %v2219
      %v2223 = vpop.permute.xlu0 %2222
      %v2225 = vadd.f32 %v2217, %v2223
      %v2226 = vadd.f32 %v2218, %v2223
      %vm2227 = vcmp.ge.f32.partialorder %v2225, 0.0
      %vm2228 = vcmp.ge.f32.partialorder %v2226, 0.0
      %v2229 = vmul.f32 %v2225, 0.2
      %v2230 = vmul.f32 %v2226, 0.2
      %v2231 = vsel %vm2227, %v2225, %v2229
      %v2232 = vsel %vm2228, %v2226, %v2230
      %v2235 = vrot.slane %v2231, 4
      %v2236 = vrot.slane %v2232, 4
      %2239 = vst [vmem:[#allocation2 + $0x28] sm:$0xf0] %v2235
      %2240 = vst [vmem:[#allocation2 + $0x30] sm:$0xf0] %v2236
      %v2241 = vld [vmem:[#allocation2] sm:$0xff]
      %v2242 = vld [vmem:[#allocation2 + $0x8] sm:$0xff]
      %v2243 = vld [vmem:[#allocation2 + $0x10] sm:$0xff]
      %v2244 = vld [vmem:[#allocation2 + $0x20] sm:$0xff]
      %v2245 = vld [vmem:[#allocation2 + $0x28] sm:$0xff]
      %v2246 = vld [vmem:[#allocation2 + $0x30] sm:$0xff]
      %2253 = vrot.lane.b32.xlu0 %v2241, 17
      %v2254 = vpop.permute.xlu0 %2253
      %2255 = vrot.lane.b32.xlu0 %v2242, 17
      %v2256 = vpop.permute.xlu0 %2255
      %2257 = vrot.lane.b32.xlu0 %v2243, 17
      %v2258 = vpop.permute.xlu0 %2257
      %2259 = vrot.lane.b32.xlu0 %v2244, 17
      %v2260 = vpop.permute.xlu0 %2259
      %2261 = vrot.lane.b32.xlu0 %v2245, 17
      %v2262 = vpop.permute.xlu0 %2261
      %2263 = vrot.lane.b32.xlu0 %v2246, 17
      %v2264 = vpop.permute.xlu0 %2263
      %v2265 = vsel %vm450, %v2254, %v2256
      %v2266 = vsel %vm450, %v2256, %v2258
      %v2267 = vsel %vm450, %v2260, %v2262
      %v2268 = vsel %vm450, %v2262, %v2264
      %v2273 = vsel %vm439, %v2265, 0.0
      %v2274 = vsel %vm440, %v2266, 0.0
      %v2275 = vsel %vm439, %v2267, 0.0
      %v2276 = vsel %vm440, %v2268, 0.0
      %v2277 = vld [vmem:[%s3] sm:$0xf]
      %s2278 = scalar_lea.vmem %s3, 4
      %v2279 = vld [vmem:[%s2278] sm:$0xf]
      %2280 = vrot.lane.b32.xlu0 %v2241, 16
      %v2281 = vpop.permute.xlu0 %2280
      %2282 = vrot.lane.b32.xlu0 %v2242, 16
      %v2283 = vpop.permute.xlu0 %2282
      %2284 = vrot.lane.b32.xlu0 %v2243, 16
      %v2285 = vpop.permute.xlu0 %2284
      %2286 = vrot.lane.b32.xlu0 %v2244, 16
      %v2287 = vpop.permute.xlu0 %2286
      %2288 = vrot.lane.b32.xlu0 %v2245, 16
      %v2289 = vpop.permute.xlu0 %2288
      %2290 = vrot.lane.b32.xlu0 %v2246, 16
      %v2291 = vpop.permute.xlu0 %2290
      %v2292 = vsel %vm466, %v2281, %v2283
      %v2293 = vsel %vm466, %v2283, %v2285
      %v2294 = vsel %vm466, %v2287, %v2289
      %v2295 = vsel %vm466, %v2289, %v2291
      %v2301 = vsel %vm466, %v2279, 0
      %2303 = vmatprep.subr.mxu0 %v2293
      %2304 = vmatpush1.msra.mxu0 %v2292
      %2305 = vmatprep.subr.mxu0 %v2295
      %2306 = vmatpush1.msra.mxu0 %v2294
      %2307 = vmatprep.subr.mxu0 0.0
      %2308 = vmatpush1.msra.mxu0 0.0
      %2309 = vmatprep.subr.mxu0 0.0
      %2310 = vmatpush1.msra.mxu0 0.0
      %2311 = vmatprep.subr.mxu0 0.0
      %2312 = vmatpush1.msra.mxu0 0.0
      %2313 = vmatprep.subr.mxu0 0.0
      %2314 = vmatpush1.msra.mxu0 0.0
      %2315 = vmatprep.subr.mxu0 0.0
      %2316 = vmatpush1.msra.mxu0 0.0
      %2317 = vmatprep.subr.mxu0 0.0
      %2318 = vmatpush1.msra.mxu0 0.0
      %2319 = vmatprep.subr.mxu0 0.0
      %2320 = vmatpush1.msra.mxu0 0.0
      %2321 = vmatprep.subr.mxu0 0.0
      %2322 = vmatpush1.msra.mxu0 0.0
      %2323 = vmatprep.subr.mxu0 0.0
      %2324 = vmatpush1.msra.mxu0 0.0
      %2325 = vmatprep.subr.mxu0 0.0
      %2326 = vmatpush1.msra.mxu0 0.0
      %2327 = vmatprep.subr.mxu0 0.0
      %2328 = vmatpush1.msra.mxu0 0.0
      %2329 = vmatprep.subr.mxu0 0.0
      %2330 = vmatpush1.msra.mxu0 0.0
      %2331 = vmatprep.subr.mxu0 0.0
      %2332 = vmatpush1.msra.mxu0 0.0
      %2333 = vmatprep.subr.mxu0 0.0
      %2334 = vmatpush1.msra.mxu0 0.0
      %2335 = vmatprep.subr.mxu0 0.0
      %2336 = vmatpush1.msra.mxu0 0.0
      %2337 = vmatprep.subr.mxu0 0.0
      %2338 = vmatpush1.msra.mxu0 0.0
      %2339 = vmatprep.subr.mxu0 0.0
      %2340 = vmatpush1.msra.mxu0 0.0
      %2341 = vmatprep.subr.mxu0 0.0
      %2342 = vmatpush1.msra.mxu0 0.0
      %2343 = vmatprep.subr.mxu0 0.0
      %2344 = vmatpush1.msra.mxu0 0.0
      %2345 = vmatprep.subr.mxu0 0.0
      %2346 = vmatpush1.msra.mxu0 0.0
      %2347 = vmatprep.subr.mxu0 0.0
      %2348 = vmatpush1.msra.mxu0 0.0
      %2349 = vmatprep.subr.mxu0 0.0
      %2350 = vmatpush1.msra.mxu0 0.0
      %2351 = vmatprep.subr.mxu0 0.0
      %2352 = vmatpush1.msra.mxu0 0.0
      %2353 = vmatprep.subr.mxu0 0.0
      %2354 = vmatpush1.msra.mxu0 0.0
      %2355 = vmatprep.subr.mxu0 0.0
      %2356 = vmatpush1.msra.mxu0 0.0
      %2357 = vmatprep.subr.mxu0 0.0
      %2358 = vmatpush1.msra.mxu0 0.0
      %2359 = vmatprep.subr.mxu0 0.0
      %2360 = vmatpush1.msra.mxu0 0.0
      %2361 = vmatprep.subr.mxu0 0.0
      %2362 = vmatpush1.msra.mxu0 0.0
      %2363 = vmatprep.subr.mxu0 0.0
      %2364 = vmatpush1.msra.mxu0 0.0
      %2365 = vmatprep.subr.mxu0 0.0
      %2366 = vmatpush1.msra.mxu0 0.0
      %2367 = vmatprep.mubr.f32.mxu0 0.0
      %2368 = vmatmul.mubr.f32.gmra.mrb[0].mxu0 %v2301
      %v2369 = vpop.f32.mrb[0].mxu0
      %v2370 = vadd.f32 0.0, %v2369
      %v2371 = vpop.f32.mrb[0].mxu0
      %v2372 = vadd.f32 0.0, %v2371
      %2373 = vdwg.mxu0
      %v2375 = vsel %vm466, %v2277, 0
      %2377 = vmatprep.subr.mxu0 %v2274
      %2378 = vmatpush1.msra.mxu0 %v2273
      %2379 = vmatprep.subr.mxu0 %v2276
      %2380 = vmatpush1.msra.mxu0 %v2275
      %2381 = vmatprep.subr.mxu0 0.0
      %2382 = vmatpush1.msra.mxu0 0.0
      %2383 = vmatprep.subr.mxu0 0.0
      %2384 = vmatpush1.msra.mxu0 0.0
      %2385 = vmatprep.subr.mxu0 0.0
      %2386 = vmatpush1.msra.mxu0 0.0
      %2387 = vmatprep.subr.mxu0 0.0
      %2388 = vmatpush1.msra.mxu0 0.0
      %2389 = vmatprep.subr.mxu0 0.0
      %2390 = vmatpush1.msra.mxu0 0.0
      %2391 = vmatprep.subr.mxu0 0.0
      %2392 = vmatpush1.msra.mxu0 0.0
      %2393 = vmatprep.subr.mxu0 0.0
      %2394 = vmatpush1.msra.mxu0 0.0
      %2395 = vmatprep.subr.mxu0 0.0
      %2396 = vmatpush1.msra.mxu0 0.0
      %2397 = vmatprep.subr.mxu0 0.0
      %2398 = vmatpush1.msra.mxu0 0.0
      %2399 = vmatprep.subr.mxu0 0.0
      %2400 = vmatpush1.msra.mxu0 0.0
      %2401 = vmatprep.subr.mxu0 0.0
      %2402 = vmatpush1.msra.mxu0 0.0
      %2403 = vmatprep.subr.mxu0 0.0
      %2404 = vmatpush1.msra.mxu0 0.0
      %2405 = vmatprep.subr.mxu0 0.0
      %2406 = vmatpush1.msra.mxu0 0.0
      %2407 = vmatprep.subr.mxu0 0.0
      %2408 = vmatpush1.msra.mxu0 0.0
      %2409 = vmatprep.subr.mxu0 0.0
      %2410 = vmatpush1.msra.mxu0 0.0
      %2411 = vmatprep.subr.mxu0 0.0
      %2412 = vmatpush1.msra.mxu0 0.0
      %2413 = vmatprep.subr.mxu0 0.0
      %2414 = vmatpush1.msra.mxu0 0.0
      %2415 = vmatprep.subr.mxu0 0.0
      %2416 = vmatpush1.msra.mxu0 0.0
      %2417 = vmatprep.subr.mxu0 0.0
      %2418 = vmatpush1.msra.mxu0 0.0
      %2419 = vmatprep.subr.mxu0 0.0
      %2420 = vmatpush1.msra.mxu0 0.0
      %2421 = vmatprep.subr.mxu0 0.0
      %2422 = vmatpush1.msra.mxu0 0.0
      %2423 = vmatprep.subr.mxu0 0.0
      %2424 = vmatpush1.msra.mxu0 0.0
      %2425 = vmatprep.subr.mxu0 0.0
      %2426 = vmatpush1.msra.mxu0 0.0
      %2427 = vmatprep.subr.mxu0 0.0
      %2428 = vmatpush1.msra.mxu0 0.0
      %2429 = vmatprep.subr.mxu0 0.0
      %2430 = vmatpush1.msra.mxu0 0.0
      %2431 = vmatprep.subr.mxu0 0.0
      %2432 = vmatpush1.msra.mxu0 0.0
      %2433 = vmatprep.subr.mxu0 0.0
      %2434 = vmatpush1.msra.mxu0 0.0
      %2435 = vmatprep.subr.mxu0 0.0
      %2436 = vmatpush1.msra.mxu0 0.0
      %2437 = vmatprep.subr.mxu0 0.0
      %2438 = vmatpush1.msra.mxu0 0.0
      %2439 = vmatprep.subr.mxu0 0.0
      %2440 = vmatpush1.msra.mxu0 0.0
      %2441 = vmatprep.mubr.f32.mxu0 0.0
      %2442 = vmatmul.mubr.f32.gmra.mrb[0].mxu0 %v2375
      %v2443 = vpop.f32.mrb[0].mxu0
      %v2444 = vadd.f32 %v2370, %v2443
      %v2445 = vpop.f32.mrb[0].mxu0
      %v2446 = vadd.f32 %v2372, %v2445
      %2447 = vdwg.mxu0
      %2448 = vrot.lane.b32.xlu0 %v2241, 15
      %v2449 = vpop.permute.xlu0 %2448
      %2450 = vrot.lane.b32.xlu0 %v2242, 15
      %v2451 = vpop.permute.xlu0 %2450
      %2452 = vrot.lane.b32.xlu0 %v2243, 15
      %v2453 = vpop.permute.xlu0 %2452
      %2454 = vrot.lane.b32.xlu0 %v2244, 15
      %v2455 = vpop.permute.xlu0 %2454
      %2456 = vrot.lane.b32.xlu0 %v2245, 15
      %v2457 = vpop.permute.xlu0 %2456
      %2458 = vrot.lane.b32.xlu0 %v2246, 15
      %v2459 = vpop.permute.xlu0 %2458
      %v2460 = vsel %vm630, %v2449, %v2451
      %v2461 = vsel %vm630, %v2451, %v2453
      %v2462 = vsel %vm630, %v2455, %v2457
      %v2463 = vsel %vm630, %v2457, %v2459
      %v2468 = vsel %vm622, %v2460, 0.0
      %v2469 = vsel %vm623, %v2461, 0.0
      %v2470 = vsel %vm622, %v2462, 0.0
      %v2471 = vsel %vm623, %v2463, 0.0
      %s2472 = scalar_lea.vmem %s3, 8
      %v2473 = vld [vmem:[%s2472] sm:$0xf]
      %v2475 = vsel %vm466, %v2473, 0
      %2477 = vmatprep.subr.mxu0 %v2469
      %2478 = vmatpush1.msra.mxu0 %v2468
      %2479 = vmatprep.subr.mxu0 %v2471
      %2480 = vmatpush1.msra.mxu0 %v2470
      %2481 = vmatprep.subr.mxu0 0.0
      %2482 = vmatpush1.msra.mxu0 0.0
      %2483 = vmatprep.subr.mxu0 0.0
      %2484 = vmatpush1.msra.mxu0 0.0
      %2485 = vmatprep.subr.mxu0 0.0
      %2486 = vmatpush1.msra.mxu0 0.0
      %2487 = vmatprep.subr.mxu0 0.0
      %2488 = vmatpush1.msra.mxu0 0.0
      %2489 = vmatprep.subr.mxu0 0.0
      %2490 = vmatpush1.msra.mxu0 0.0
      %2491 = vmatprep.subr.mxu0 0.0
      %2492 = vmatpush1.msra.mxu0 0.0
      %2493 = vmatprep.subr.mxu0 0.0
      %2494 = vmatpush1.msra.mxu0 0.0
      %2495 = vmatprep.subr.mxu0 0.0
      %2496 = vmatpush1.msra.mxu0 0.0
      %2497 = vmatprep.subr.mxu0 0.0
      %2498 = vmatpush1.msra.mxu0 0.0
      %2499 = vmatprep.subr.mxu0 0.0
      %2500 = vmatpush1.msra.mxu0 0.0
      %2501 = vmatprep.subr.mxu0 0.0
      %2502 = vmatpush1.msra.mxu0 0.0
      %2503 = vmatprep.subr.mxu0 0.0
      %2504 = vmatpush1.msra.mxu0 0.0
      %2505 = vmatprep.subr.mxu0 0.0
      %2506 = vmatpush1.msra.mxu0 0.0
      %2507 = vmatprep.subr.mxu0 0.0
      %2508 = vmatpush1.msra.mxu0 0.0
      %2509 = vmatprep.subr.mxu0 0.0
      %2510 = vmatpush1.msra.mxu0 0.0
      %2511 = vmatprep.subr.mxu0 0.0
      %2512 = vmatpush1.msra.mxu0 0.0
      %2513 = vmatprep.subr.mxu0 0.0
      %2514 = vmatpush1.msra.mxu0 0.0
      %2515 = vmatprep.subr.mxu0 0.0
      %2516 = vmatpush1.msra.mxu0 0.0
      %2517 = vmatprep.subr.mxu0 0.0
      %2518 = vmatpush1.msra.mxu0 0.0
      %2519 = vmatprep.subr.mxu0 0.0
      %2520 = vmatpush1.msra.mxu0 0.0
      %2521 = vmatprep.subr.mxu0 0.0
      %2522 = vmatpush1.msra.mxu0 0.0
      %2523 = vmatprep.subr.mxu0 0.0
      %2524 = vmatpush1.msra.mxu0 0.0
      %2525 = vmatprep.subr.mxu0 0.0
      %2526 = vmatpush1.msra.mxu0 0.0
      %2527 = vmatprep.subr.mxu0 0.0
      %2528 = vmatpush1.msra.mxu0 0.0
      %2529 = vmatprep.subr.mxu0 0.0
      %2530 = vmatpush1.msra.mxu0 0.0
      %2531 = vmatprep.subr.mxu0 0.0
      %2532 = vmatpush1.msra.mxu0 0.0
      %2533 = vmatprep.subr.mxu0 0.0
      %2534 = vmatpush1.msra.mxu0 0.0
      %2535 = vmatprep.subr.mxu0 0.0
      %2536 = vmatpush1.msra.mxu0 0.0
      %2537 = vmatprep.subr.mxu0 0.0
      %2538 = vmatpush1.msra.mxu0 0.0
      %2539 = vmatprep.subr.mxu0 0.0
      %2540 = vmatpush1.msra.mxu0 0.0
      %2541 = vmatprep.mubr.f32.mxu0 0.0
      %2542 = vmatmul.mubr.f32.gmra.mrb[0].mxu0 %v2475
      %v2543 = vpop.f32.mrb[0].mxu0
      %v2544 = vadd.f32 0.0, %v2543
      %v2545 = vpop.f32.mrb[0].mxu0
      %v2546 = vadd.f32 0.0, %v2545
      %2547 = vdwg.mxu0
      %v2548 = vadd.f32 %v2444, %v2544
      %v2549 = vadd.f32 %v2446, %v2546
      %2550 = vrot.lane.b32.xlu0 %v2241, 1
      %v2551 = vpop.permute.xlu0 %2550
      %2552 = vrot.lane.b32.xlu0 %v2242, 1
      %v2553 = vpop.permute.xlu0 %2552
      %2554 = vrot.lane.b32.xlu0 %v2243, 1
      %v2555 = vpop.permute.xlu0 %2554
      %2556 = vrot.lane.b32.xlu0 %v2244, 1
      %v2557 = vpop.permute.xlu0 %2556
      %2558 = vrot.lane.b32.xlu0 %v2245, 1
      %v2559 = vpop.permute.xlu0 %2558
      %2560 = vrot.lane.b32.xlu0 %v2246, 1
      %v2561 = vpop.permute.xlu0 %2560
      %v2562 = vsel %vm721, %v2551, %v2553
      %v2563 = vsel %vm721, %v2553, %v2555
      %v2564 = vsel %vm721, %v2557, %v2559
      %v2565 = vsel %vm721, %v2559, %v2561
      %v2570 = vsel %vm439, %v2562, 0.0
      %v2571 = vsel %vm440, %v2563, 0.0
      %v2572 = vsel %vm439, %v2564, 0.0
      %v2573 = vsel %vm440, %v2565, 0.0
      %s2574 = scalar_lea.vmem %s3, 12
      %v2575 = vld [vmem:[%s2574] sm:$0xf]
      %v2577 = vsel %vm466, %v2575, 0
      %2579 = vmatprep.subr.mxu0 %v2571
      %2580 = vmatpush1.msra.mxu0 %v2570
      %2581 = vmatprep.subr.mxu0 %v2573
      %2582 = vmatpush1.msra.mxu0 %v2572
      %2583 = vmatprep.subr.mxu0 0.0
      %2584 = vmatpush1.msra.mxu0 0.0
      %2585 = vmatprep.subr.mxu0 0.0
      %2586 = vmatpush1.msra.mxu0 0.0
      %2587 = vmatprep.subr.mxu0 0.0
      %2588 = vmatpush1.msra.mxu0 0.0
      %2589 = vmatprep.subr.mxu0 0.0
      %2590 = vmatpush1.msra.mxu0 0.0
      %2591 = vmatprep.subr.mxu0 0.0
      %2592 = vmatpush1.msra.mxu0 0.0
      %2593 = vmatprep.subr.mxu0 0.0
      %2594 = vmatpush1.msra.mxu0 0.0
      %2595 = vmatprep.subr.mxu0 0.0
      %2596 = vmatpush1.msra.mxu0 0.0
      %2597 = vmatprep.subr.mxu0 0.0
      %2598 = vmatpush1.msra.mxu0 0.0
      %2599 = vmatprep.subr.mxu0 0.0
      %2600 = vmatpush1.msra.mxu0 0.0
      %2601 = vmatprep.subr.mxu0 0.0
      %2602 = vmatpush1.msra.mxu0 0.0
      %2603 = vmatprep.subr.mxu0 0.0
      %2604 = vmatpush1.msra.mxu0 0.0
      %2605 = vmatprep.subr.mxu0 0.0
      %2606 = vmatpush1.msra.mxu0 0.0
      %2607 = vmatprep.subr.mxu0 0.0
      %2608 = vmatpush1.msra.mxu0 0.0
      %2609 = vmatprep.subr.mxu0 0.0
      %2610 = vmatpush1.msra.mxu0 0.0
      %2611 = vmatprep.subr.mxu0 0.0
      %2612 = vmatpush1.msra.mxu0 0.0
      %2613 = vmatprep.subr.mxu0 0.0
      %2614 = vmatpush1.msra.mxu0 0.0
      %2615 = vmatprep.subr.mxu0 0.0
      %2616 = vmatpush1.msra.mxu0 0.0
      %2617 = vmatprep.subr.mxu0 0.0
      %2618 = vmatpush1.msra.mxu0 0.0
      %2619 = vmatprep.subr.mxu0 0.0
      %2620 = vmatpush1.msra.mxu0 0.0
      %2621 = vmatprep.subr.mxu0 0.0
      %2622 = vmatpush1.msra.mxu0 0.0
      %2623 = vmatprep.subr.mxu0 0.0
      %2624 = vmatpush1.msra.mxu0 0.0
      %2625 = vmatprep.subr.mxu0 0.0
      %2626 = vmatpush1.msra.mxu0 0.0
      %2627 = vmatprep.subr.mxu0 0.0
      %2628 = vmatpush1.msra.mxu0 0.0
      %2629 = vmatprep.subr.mxu0 0.0
      %2630 = vmatpush1.msra.mxu0 0.0
      %2631 = vmatprep.subr.mxu0 0.0
      %2632 = vmatpush1.msra.mxu0 0.0
      %2633 = vmatprep.subr.mxu0 0.0
      %2634 = vmatpush1.msra.mxu0 0.0
      %2635 = vmatprep.subr.mxu0 0.0
      %2636 = vmatpush1.msra.mxu0 0.0
      %2637 = vmatprep.subr.mxu0 0.0
      %2638 = vmatpush1.msra.mxu0 0.0
      %2639 = vmatprep.subr.mxu0 0.0
      %2640 = vmatpush1.msra.mxu0 0.0
      %2641 = vmatprep.subr.mxu0 0.0
      %2642 = vmatpush1.msra.mxu0 0.0
      %2643 = vmatprep.mubr.f32.mxu0 0.0
      %2644 = vmatmul.mubr.f32.gmra.mrb[0].mxu0 %v2577
      %v2645 = vpop.f32.mrb[0].mxu0
      %v2646 = vadd.f32 0.0, %v2645
      %v2647 = vpop.f32.mrb[0].mxu0
      %v2648 = vadd.f32 0.0, %v2647
      %2649 = vdwg.mxu0
      %v2650 = vadd.f32 %v2548, %v2646
      %v2651 = vadd.f32 %v2549, %v2648
      %s2652 = scalar_lea.vmem %s3, 16
      %v2653 = vld [vmem:[%s2652] sm:$0xf]
      %v2655 = vsel %vm466, %v2653, 0
      %2657 = vmatprep.subr.mxu0 %v2243
      %2658 = vmatpush1.msra.mxu0 %v2242
      %2659 = vmatprep.subr.mxu0 %v2246
      %2660 = vmatpush1.msra.mxu0 %v2245
      %2661 = vmatprep.subr.mxu0 0.0
      %2662 = vmatpush1.msra.mxu0 0.0
      %2663 = vmatprep.subr.mxu0 0.0
      %2664 = vmatpush1.msra.mxu0 0.0
      %2665 = vmatprep.subr.mxu0 0.0
      %2666 = vmatpush1.msra.mxu0 0.0
      %2667 = vmatprep.subr.mxu0 0.0
      %2668 = vmatpush1.msra.mxu0 0.0
      %2669 = vmatprep.subr.mxu0 0.0
      %2670 = vmatpush1.msra.mxu0 0.0
      %2671 = vmatprep.subr.mxu0 0.0
      %2672 = vmatpush1.msra.mxu0 0.0
      %2673 = vmatprep.subr.mxu0 0.0
      %2674 = vmatpush1.msra.mxu0 0.0
      %2675 = vmatprep.subr.mxu0 0.0
      %2676 = vmatpush1.msra.mxu0 0.0
      %2677 = vmatprep.subr.mxu0 0.0
      %2678 = vmatpush1.msra.mxu0 0.0
      %2679 = vmatprep.subr.mxu0 0.0
      %2680 = vmatpush1.msra.mxu0 0.0
      %2681 = vmatprep.subr.mxu0 0.0
      %2682 = vmatpush1.msra.mxu0 0.0
      %2683 = vmatprep.subr.mxu0 0.0
      %2684 = vmatpush1.msra.mxu0 0.0
      %2685 = vmatprep.subr.mxu0 0.0
      %2686 = vmatpush1.msra.mxu0 0.0
      %2687 = vmatprep.subr.mxu0 0.0
      %2688 = vmatpush1.msra.mxu0 0.0
      %2689 = vmatprep.subr.mxu0 0.0
      %2690 = vmatpush1.msra.mxu0 0.0
      %2691 = vmatprep.subr.mxu0 0.0
      %2692 = vmatpush1.msra.mxu0 0.0
      %2693 = vmatprep.subr.mxu0 0.0
      %2694 = vmatpush1.msra.mxu0 0.0
      %2695 = vmatprep.subr.mxu0 0.0
      %2696 = vmatpush1.msra.mxu0 0.0
      %2697 = vmatprep.subr.mxu0 0.0
      %2698 = vmatpush1.msra.mxu0 0.0
      %2699 = vmatprep.subr.mxu0 0.0
      %2700 = vmatpush1.msra.mxu0 0.0
      %2701 = vmatprep.subr.mxu0 0.0
      %2702 = vmatpush1.msra.mxu0 0.0
      %2703 = vmatprep.subr.mxu0 0.0
      %2704 = vmatpush1.msra.mxu0 0.0
      %2705 = vmatprep.subr.mxu0 0.0
      %2706 = vmatpush1.msra.mxu0 0.0
      %2707 = vmatprep.subr.mxu0 0.0
      %2708 = vmatpush1.msra.mxu0 0.0
      %2709 = vmatprep.subr.mxu0 0.0
      %2710 = vmatpush1.msra.mxu0 0.0
      %2711 = vmatprep.subr.mxu0 0.0
      %2712 = vmatpush1.msra.mxu0 0.0
      %2713 = vmatprep.subr.mxu0 0.0
      %2714 = vmatpush1.msra.mxu0 0.0
      %2715 = vmatprep.subr.mxu0 0.0
      %2716 = vmatpush1.msra.mxu0 0.0
      %2717 = vmatprep.subr.mxu0 0.0
      %2718 = vmatpush1.msra.mxu0 0.0
      %2719 = vmatprep.subr.mxu0 0.0
      %2720 = vmatpush1.msra.mxu0 0.0
      %2721 = vmatprep.mubr.f32.mxu0 0.0
      %2722 = vmatmul.mubr.f32.gmra.mrb[0].mxu0 %v2655
      %v2723 = vpop.f32.mrb[0].mxu0
      %v2724 = vadd.f32 0.0, %v2723
      %v2725 = vpop.f32.mrb[0].mxu0
      %v2726 = vadd.f32 0.0, %v2725
      %2727 = vdwg.mxu0
      %v2728 = vadd.f32 %v2650, %v2724
      %v2729 = vadd.f32 %v2651, %v2726
      %v2730 = vld [vmem:[#allocation2 + $0x8] sm:$0xff]
      %v2731 = vld [vmem:[#allocation2 + $0x10] sm:$0xff]
      %v2732 = vld [vmem:[#allocation2 + $0x18] sm:$0xff]
      %v2733 = vld [vmem:[#allocation2 + $0x28] sm:$0xff]
      %v2734 = vld [vmem:[#allocation2 + $0x30] sm:$0xff]
      %v2735 = vld [vmem:[#allocation2 + $0x38] sm:$0xff]
      %2742 = vrot.lane.b32.xlu0 %v2730, 127
      %v2743 = vpop.permute.xlu0 %2742
      %2744 = vrot.lane.b32.xlu0 %v2731, 127
      %v2745 = vpop.permute.xlu0 %2744
      %2746 = vrot.lane.b32.xlu0 %v2732, 127
      %v2747 = vpop.permute.xlu0 %2746
      %2748 = vrot.lane.b32.xlu0 %v2733, 127
      %v2749 = vpop.permute.xlu0 %2748
      %2750 = vrot.lane.b32.xlu0 %v2734, 127
      %v2751 = vpop.permute.xlu0 %2750
      %2752 = vrot.lane.b32.xlu0 %v2735, 127
      %v2753 = vpop.permute.xlu0 %2752
      %v2754 = vsel %vm896, %v2743, %v2745
      %v2755 = vsel %vm896, %v2745, %v2747
      %v2756 = vsel %vm896, %v2749, %v2751
      %v2757 = vsel %vm896, %v2751, %v2753
      %v2762 = vsel %vm622, %v2754, 0.0
      %v2763 = vsel %vm623, %v2755, 0.0
      %v2764 = vsel %vm622, %v2756, 0.0
      %v2765 = vsel %vm623, %v2757, 0.0
      %s2766 = scalar_lea.vmem %s3, 20
      %v2767 = vld [vmem:[%s2766] sm:$0xf]
      %v2769 = vsel %vm466, %v2767, 0
      %2771 = vmatprep.subr.mxu0 %v2763
      %2772 = vmatpush1.msra.mxu0 %v2762
      %2773 = vmatprep.subr.mxu0 %v2765
      %2774 = vmatpush1.msra.mxu0 %v2764
      %2775 = vmatprep.subr.mxu0 0.0
      %2776 = vmatpush1.msra.mxu0 0.0
      %2777 = vmatprep.subr.mxu0 0.0
      %2778 = vmatpush1.msra.mxu0 0.0
      %2779 = vmatprep.subr.mxu0 0.0
      %2780 = vmatpush1.msra.mxu0 0.0
      %2781 = vmatprep.subr.mxu0 0.0
      %2782 = vmatpush1.msra.mxu0 0.0
      %2783 = vmatprep.subr.mxu0 0.0
      %2784 = vmatpush1.msra.mxu0 0.0
      %2785 = vmatprep.subr.mxu0 0.0
      %2786 = vmatpush1.msra.mxu0 0.0
      %2787 = vmatprep.subr.mxu0 0.0
      %2788 = vmatpush1.msra.mxu0 0.0
      %2789 = vmatprep.subr.mxu0 0.0
      %2790 = vmatpush1.msra.mxu0 0.0
      %2791 = vmatprep.subr.mxu0 0.0
      %2792 = vmatpush1.msra.mxu0 0.0
      %2793 = vmatprep.subr.mxu0 0.0
      %2794 = vmatpush1.msra.mxu0 0.0
      %2795 = vmatprep.subr.mxu0 0.0
      %2796 = vmatpush1.msra.mxu0 0.0
      %2797 = vmatprep.subr.mxu0 0.0
      %2798 = vmatpush1.msra.mxu0 0.0
      %2799 = vmatprep.subr.mxu0 0.0
      %2800 = vmatpush1.msra.mxu0 0.0
      %2801 = vmatprep.subr.mxu0 0.0
      %2802 = vmatpush1.msra.mxu0 0.0
      %2803 = vmatprep.subr.mxu0 0.0
      %2804 = vmatpush1.msra.mxu0 0.0
      %2805 = vmatprep.subr.mxu0 0.0
      %2806 = vmatpush1.msra.mxu0 0.0
      %2807 = vmatprep.subr.mxu0 0.0
      %2808 = vmatpush1.msra.mxu0 0.0
      %2809 = vmatprep.subr.mxu0 0.0
      %2810 = vmatpush1.msra.mxu0 0.0
      %2811 = vmatprep.subr.mxu0 0.0
      %2812 = vmatpush1.msra.mxu0 0.0
      %2813 = vmatprep.subr.mxu0 0.0
      %2814 = vmatpush1.msra.mxu0 0.0
      %2815 = vmatprep.subr.mxu0 0.0
      %2816 = vmatpush1.msra.mxu0 0.0
      %2817 = vmatprep.subr.mxu0 0.0
      %2818 = vmatpush1.msra.mxu0 0.0
      %2819 = vmatprep.subr.mxu0 0.0
      %2820 = vmatpush1.msra.mxu0 0.0
      %2821 = vmatprep.subr.mxu0 0.0
      %2822 = vmatpush1.msra.mxu0 0.0
      %2823 = vmatprep.subr.mxu0 0.0
      %2824 = vmatpush1.msra.mxu0 0.0
      %2825 = vmatprep.subr.mxu0 0.0
      %2826 = vmatpush1.msra.mxu0 0.0
      %2827 = vmatprep.subr.mxu0 0.0
      %2828 = vmatpush1.msra.mxu0 0.0
      %2829 = vmatprep.subr.mxu0 0.0
      %2830 = vmatpush1.msra.mxu0 0.0
      %2831 = vmatprep.subr.mxu0 0.0
      %2832 = vmatpush1.msra.mxu0 0.0
      %2833 = vmatprep.subr.mxu0 0.0
      %2834 = vmatpush1.msra.mxu0 0.0
      %2835 = vmatprep.mubr.f32.mxu0 0.0
      %2836 = vmatmul.mubr.f32.gmra.mrb[0].mxu0 %v2769
      %v2837 = vpop.f32.mrb[0].mxu0
      %v2838 = vadd.f32 0.0, %v2837
      %v2839 = vpop.f32.mrb[0].mxu0
      %v2840 = vadd.f32 0.0, %v2839
      %2841 = vdwg.mxu0
      %v2842 = vadd.f32 %v2728, %v2838
      %v2843 = vadd.f32 %v2729, %v2840
      %2844 = vrot.lane.b32.xlu0 %v2730, 113
      %v2845 = vpop.permute.xlu0 %2844
      %2846 = vrot.lane.b32.xlu0 %v2731, 113
      %v2847 = vpop.permute.xlu0 %2846
      %2848 = vrot.lane.b32.xlu0 %v2732, 113
      %v2849 = vpop.permute.xlu0 %2848
      %2850 = vrot.lane.b32.xlu0 %v2733, 113
      %v2851 = vpop.permute.xlu0 %2850
      %2852 = vrot.lane.b32.xlu0 %v2734, 113
      %v2853 = vpop.permute.xlu0 %2852
      %2854 = vrot.lane.b32.xlu0 %v2735, 113
      %v2855 = vpop.permute.xlu0 %2854
      %v2856 = vsel %vm987, %v2845, %v2847
      %v2857 = vsel %vm987, %v2847, %v2849
      %v2858 = vsel %vm987, %v2851, %v2853
      %v2859 = vsel %vm987, %v2853, %v2855
      %v2864 = vsel %vm439, %v2856, 0.0
      %v2865 = vsel %vm440, %v2857, 0.0
      %v2866 = vsel %vm439, %v2858, 0.0
      %v2867 = vsel %vm440, %v2859, 0.0
      %s2868 = scalar_lea.vmem %s3, 24
      %v2869 = vld [vmem:[%s2868] sm:$0xf]
      %v2871 = vsel %vm466, %v2869, 0
      %2873 = vmatprep.subr.mxu0 %v2865
      %2874 = vmatpush1.msra.mxu0 %v2864
      %2875 = vmatprep.subr.mxu0 %v2867
      %2876 = vmatpush1.msra.mxu0 %v2866
      %2877 = vmatprep.subr.mxu0 0.0
      %2878 = vmatpush1.msra.mxu0 0.0
      %2879 = vmatprep.subr.mxu0 0.0
      %2880 = vmatpush1.msra.mxu0 0.0
      %2881 = vmatprep.subr.mxu0 0.0
      %2882 = vmatpush1.msra.mxu0 0.0
      %2883 = vmatprep.subr.mxu0 0.0
      %2884 = vmatpush1.msra.mxu0 0.0
      %2885 = vmatprep.subr.mxu0 0.0
      %2886 = vmatpush1.msra.mxu0 0.0
      %2887 = vmatprep.subr.mxu0 0.0
      %2888 = vmatpush1.msra.mxu0 0.0
      %2889 = vmatprep.subr.mxu0 0.0
      %2890 = vmatpush1.msra.mxu0 0.0
      %2891 = vmatprep.subr.mxu0 0.0
      %2892 = vmatpush1.msra.mxu0 0.0
      %2893 = vmatprep.subr.mxu0 0.0
      %2894 = vmatpush1.msra.mxu0 0.0
      %2895 = vmatprep.subr.mxu0 0.0
      %2896 = vmatpush1.msra.mxu0 0.0
      %2897 = vmatprep.subr.mxu0 0.0
      %2898 = vmatpush1.msra.mxu0 0.0
      %2899 = vmatprep.subr.mxu0 0.0
      %2900 = vmatpush1.msra.mxu0 0.0
      %2901 = vmatprep.subr.mxu0 0.0
      %2902 = vmatpush1.msra.mxu0 0.0
      %2903 = vmatprep.subr.mxu0 0.0
      %2904 = vmatpush1.msra.mxu0 0.0
      %2905 = vmatprep.subr.mxu0 0.0
      %2906 = vmatpush1.msra.mxu0 0.0
      %2907 = vmatprep.subr.mxu0 0.0
      %2908 = vmatpush1.msra.mxu0 0.0
      %2909 = vmatprep.subr.mxu0 0.0
      %2910 = vmatpush1.msra.mxu0 0.0
      %2911 = vmatprep.subr.mxu0 0.0
      %2912 = vmatpush1.msra.mxu0 0.0
      %2913 = vmatprep.subr.mxu0 0.0
      %2914 = vmatpush1.msra.mxu0 0.0
      %2915 = vmatprep.subr.mxu0 0.0
      %2916 = vmatpush1.msra.mxu0 0.0
      %2917 = vmatprep.subr.mxu0 0.0
      %2918 = vmatpush1.msra.mxu0 0.0
      %2919 = vmatprep.subr.mxu0 0.0
      %2920 = vmatpush1.msra.mxu0 0.0
      %2921 = vmatprep.subr.mxu0 0.0
      %2922 = vmatpush1.msra.mxu0 0.0
      %2923 = vmatprep.subr.mxu0 0.0
      %2924 = vmatpush1.msra.mxu0 0.0
      %2925 = vmatprep.subr.mxu0 0.0
      %2926 = vmatpush1.msra.mxu0 0.0
      %2927 = vmatprep.subr.mxu0 0.0
      %2928 = vmatpush1.msra.mxu0 0.0
      %2929 = vmatprep.subr.mxu0 0.0
      %2930 = vmatpush1.msra.mxu0 0.0
      %2931 = vmatprep.subr.mxu0 0.0
      %2932 = vmatpush1.msra.mxu0 0.0
      %2933 = vmatprep.subr.mxu0 0.0
      %2934 = vmatpush1.msra.mxu0 0.0
      %2935 = vmatprep.subr.mxu0 0.0
      %2936 = vmatpush1.msra.mxu0 0.0
      %2937 = vmatprep.mubr.f32.mxu0 0.0
      %2938 = vmatmul.mubr.f32.gmra.mrb[0].mxu0 %v2871
      %v2939 = vpop.f32.mrb[0].mxu0
      %v2940 = vadd.f32 0.0, %v2939
      %v2941 = vpop.f32.mrb[0].mxu0
      %v2942 = vadd.f32 0.0, %v2941
      %2943 = vdwg.mxu0
      %v2944 = vadd.f32 %v2842, %v2940
      %v2945 = vadd.f32 %v2843, %v2942
      %s2946 = scalar_lea.vmem %s3, 28
      %v2947 = vld [vmem:[%s2946] sm:$0xf]
      %2948 = vrot.lane.b32.xlu0 %v2730, 112
      %v2949 = vpop.permute.xlu0 %2948
      %2950 = vrot.lane.b32.xlu0 %v2731, 112
      %v2951 = vpop.permute.xlu0 %2950
      %2952 = vrot.lane.b32.xlu0 %v2732, 112
      %v2953 = vpop.permute.xlu0 %2952
      %2954 = vrot.lane.b32.xlu0 %v2733, 112
      %v2955 = vpop.permute.xlu0 %2954
      %2956 = vrot.lane.b32.xlu0 %v2734, 112
      %v2957 = vpop.permute.xlu0 %2956
      %2958 = vrot.lane.b32.xlu0 %v2735, 112
      %v2959 = vpop.permute.xlu0 %2958
      %v2960 = vsel %vm1080, %v2949, %v2951
      %v2961 = vsel %vm1080, %v2951, %v2953
      %v2962 = vsel %vm1080, %v2955, %v2957
      %v2963 = vsel %vm1080, %v2957, %v2959
      %v2969 = vsel %vm466, %v2947, 0
      %2971 = vmatprep.subr.mxu0 %v2961
      %2972 = vmatpush1.msra.mxu0 %v2960
      %2973 = vmatprep.subr.mxu0 %v2963
      %2974 = vmatpush1.msra.mxu0 %v2962
      %2975 = vmatprep.subr.mxu0 0.0
      %2976 = vmatpush1.msra.mxu0 0.0
      %2977 = vmatprep.subr.mxu0 0.0
      %2978 = vmatpush1.msra.mxu0 0.0
      %2979 = vmatprep.subr.mxu0 0.0
      %2980 = vmatpush1.msra.mxu0 0.0
      %2981 = vmatprep.subr.mxu0 0.0
      %2982 = vmatpush1.msra.mxu0 0.0
      %2983 = vmatprep.subr.mxu0 0.0
      %2984 = vmatpush1.msra.mxu0 0.0
      %2985 = vmatprep.subr.mxu0 0.0
      %2986 = vmatpush1.msra.mxu0 0.0
      %2987 = vmatprep.subr.mxu0 0.0
      %2988 = vmatpush1.msra.mxu0 0.0
      %2989 = vmatprep.subr.mxu0 0.0
      %2990 = vmatpush1.msra.mxu0 0.0
      %2991 = vmatprep.subr.mxu0 0.0
      %2992 = vmatpush1.msra.mxu0 0.0
      %2993 = vmatprep.subr.mxu0 0.0
      %2994 = vmatpush1.msra.mxu0 0.0
      %2995 = vmatprep.subr.mxu0 0.0
      %2996 = vmatpush1.msra.mxu0 0.0
      %2997 = vmatprep.subr.mxu0 0.0
      %2998 = vmatpush1.msra.mxu0 0.0
      %2999 = vmatprep.subr.mxu0 0.0
      %3000 = vmatpush1.msra.mxu0 0.0
      %3001 = vmatprep.subr.mxu0 0.0
      %3002 = vmatpush1.msra.mxu0 0.0
      %3003 = vmatprep.subr.mxu0 0.0
      %3004 = vmatpush1.msra.mxu0 0.0
      %3005 = vmatprep.subr.mxu0 0.0
      %3006 = vmatpush1.msra.mxu0 0.0
      %3007 = vmatprep.subr.mxu0 0.0
      %3008 = vmatpush1.msra.mxu0 0.0
      %3009 = vmatprep.subr.mxu0 0.0
      %3010 = vmatpush1.msra.mxu0 0.0
      %3011 = vmatprep.subr.mxu0 0.0
      %3012 = vmatpush1.msra.mxu0 0.0
      %3013 = vmatprep.subr.mxu0 0.0
      %3014 = vmatpush1.msra.mxu0 0.0
      %3015 = vmatprep.subr.mxu0 0.0
      %3016 = vmatpush1.msra.mxu0 0.0
      %3017 = vmatprep.subr.mxu0 0.0
      %3018 = vmatpush1.msra.mxu0 0.0
      %3019 = vmatprep.subr.mxu0 0.0
      %3020 = vmatpush1.msra.mxu0 0.0
      %3021 = vmatprep.subr.mxu0 0.0
      %3022 = vmatpush1.msra.mxu0 0.0
      %3023 = vmatprep.subr.mxu0 0.0
      %3024 = vmatpush1.msra.mxu0 0.0
      %3025 = vmatprep.subr.mxu0 0.0
      %3026 = vmatpush1.msra.mxu0 0.0
      %3027 = vmatprep.subr.mxu0 0.0
      %3028 = vmatpush1.msra.mxu0 0.0
      %3029 = vmatprep.subr.mxu0 0.0
      %3030 = vmatpush1.msra.mxu0 0.0
      %3031 = vmatprep.subr.mxu0 0.0
      %3032 = vmatpush1.msra.mxu0 0.0
      %3033 = vmatprep.subr.mxu0 0.0
      %3034 = vmatpush1.msra.mxu0 0.0
      %3035 = vmatprep.mubr.f32.mxu0 0.0
      %3036 = vmatmul.mubr.f32.gmra.mrb[0].mxu0 %v2969
      %v3037 = vpop.f32.mrb[0].mxu0
      %v3038 = vadd.f32 0.0, %v3037
      %v3039 = vpop.f32.mrb[0].mxu0
      %v3040 = vadd.f32 0.0, %v3039
      %3041 = vdwg.mxu0
      %v3042 = vadd.f32 %v2944, %v3038
      %v3043 = vadd.f32 %v2945, %v3040
      %3044 = vrot.lane.b32.xlu0 %v2730, 111
      %v3045 = vpop.permute.xlu0 %3044
      %3046 = vrot.lane.b32.xlu0 %v2731, 111
      %v3047 = vpop.permute.xlu0 %3046
      %3048 = vrot.lane.b32.xlu0 %v2732, 111
      %v3049 = vpop.permute.xlu0 %3048
      %3050 = vrot.lane.b32.xlu0 %v2733, 111
      %v3051 = vpop.permute.xlu0 %3050
      %3052 = vrot.lane.b32.xlu0 %v2734, 111
      %v3053 = vpop.permute.xlu0 %3052
      %3054 = vrot.lane.b32.xlu0 %v2735, 111
      %v3055 = vpop.permute.xlu0 %3054
      %v3056 = vsel %vm1167, %v3045, %v3047
      %v3057 = vsel %vm1167, %v3047, %v3049
      %v3058 = vsel %vm1167, %v3051, %v3053
      %v3059 = vsel %vm1167, %v3053, %v3055
      %v3064 = vsel %vm622, %v3056, 0.0
      %v3065 = vsel %vm623, %v3057, 0.0
      %v3066 = vsel %vm622, %v3058, 0.0
      %v3067 = vsel %vm623, %v3059, 0.0
      %s3068 = scalar_lea.vmem %s3, 32
      %v3069 = vld [vmem:[%s3068] sm:$0xf]
      %v3071 = vsel %vm466, %v3069, 0
      %3073 = vmatprep.subr.mxu0 %v3065
      %3074 = vmatpush1.msra.mxu0 %v3064
      %3075 = vmatprep.subr.mxu0 %v3067
      %3076 = vmatpush1.msra.mxu0 %v3066
      %3077 = vmatprep.subr.mxu0 0.0
      %3078 = vmatpush1.msra.mxu0 0.0
      %3079 = vmatprep.subr.mxu0 0.0
      %3080 = vmatpush1.msra.mxu0 0.0
      %3081 = vmatprep.subr.mxu0 0.0
      %3082 = vmatpush1.msra.mxu0 0.0
      %3083 = vmatprep.subr.mxu0 0.0
      %3084 = vmatpush1.msra.mxu0 0.0
      %3085 = vmatprep.subr.mxu0 0.0
      %3086 = vmatpush1.msra.mxu0 0.0
      %3087 = vmatprep.subr.mxu0 0.0
      %3088 = vmatpush1.msra.mxu0 0.0
      %3089 = vmatprep.subr.mxu0 0.0
      %3090 = vmatpush1.msra.mxu0 0.0
      %3091 = vmatprep.subr.mxu0 0.0
      %3092 = vmatpush1.msra.mxu0 0.0
      %3093 = vmatprep.subr.mxu0 0.0
      %3094 = vmatpush1.msra.mxu0 0.0
      %3095 = vmatprep.subr.mxu0 0.0
      %3096 = vmatpush1.msra.mxu0 0.0
      %3097 = vmatprep.subr.mxu0 0.0
      %3098 = vmatpush1.msra.mxu0 0.0
      %3099 = vmatprep.subr.mxu0 0.0
      %3100 = vmatpush1.msra.mxu0 0.0
      %3101 = vmatprep.subr.mxu0 0.0
      %3102 = vmatpush1.msra.mxu0 0.0
      %3103 = vmatprep.subr.mxu0 0.0
      %3104 = vmatpush1.msra.mxu0 0.0
      %3105 = vmatprep.subr.mxu0 0.0
      %3106 = vmatpush1.msra.mxu0 0.0
      %3107 = vmatprep.subr.mxu0 0.0
      %3108 = vmatpush1.msra.mxu0 0.0
      %3109 = vmatprep.subr.mxu0 0.0
      %3110 = vmatpush1.msra.mxu0 0.0
      %3111 = vmatprep.subr.mxu0 0.0
      %3112 = vmatpush1.msra.mxu0 0.0
      %3113 = vmatprep.subr.mxu0 0.0
      %3114 = vmatpush1.msra.mxu0 0.0
      %3115 = vmatprep.subr.mxu0 0.0
      %3116 = vmatpush1.msra.mxu0 0.0
      %3117 = vmatprep.subr.mxu0 0.0
      %3118 = vmatpush1.msra.mxu0 0.0
      %3119 = vmatprep.subr.mxu0 0.0
      %3120 = vmatpush1.msra.mxu0 0.0
      %3121 = vmatprep.subr.mxu0 0.0
      %3122 = vmatpush1.msra.mxu0 0.0
      %3123 = vmatprep.subr.mxu0 0.0
      %3124 = vmatpush1.msra.mxu0 0.0
      %3125 = vmatprep.subr.mxu0 0.0
      %3126 = vmatpush1.msra.mxu0 0.0
      %3127 = vmatprep.subr.mxu0 0.0
      %3128 = vmatpush1.msra.mxu0 0.0
      %3129 = vmatprep.subr.mxu0 0.0
      %3130 = vmatpush1.msra.mxu0 0.0
      %3131 = vmatprep.subr.mxu0 0.0
      %3132 = vmatpush1.msra.mxu0 0.0
      %3133 = vmatprep.subr.mxu0 0.0
      %3134 = vmatpush1.msra.mxu0 0.0
      %3135 = vmatprep.subr.mxu0 0.0
      %3136 = vmatpush1.msra.mxu0 0.0
      %3137 = vmatprep.mubr.f32.mxu0 0.0
      %3138 = vmatmul.mubr.f32.gmra.mrb[0].mxu0 %v3071
      %v3139 = vpop.f32.mrb[0].mxu0
      %v3140 = vadd.f32 0.0, %v3139
      %v3141 = vpop.f32.mrb[0].mxu0
      %v3142 = vadd.f32 0.0, %v3141
      %3143 = vdwg.mxu0
      %v3144 = vadd.f32 %v3042, %v3140
      %v3145 = vadd.f32 %v3043, %v3142
      %v3146 = vld [vmem:[%s8] sm:$0xf]
      %3148 = vset.pattern.permute.xlu0 0
      %3149 = vperm.xlu0 %3148, %v3146
      %v3150 = vpop.permute.xlu0 %3149
      %v3152 = vadd.f32 %v3144, %v3150
      %v3153 = vadd.f32 %v3145, %v3150
      %vm3154 = vcmp.ge.f32.partialorder %v3152, 0.0
      %vm3155 = vcmp.ge.f32.partialorder %v3153, 0.0
      %v3156 = vmul.f32 %v3152, 0.2
      %v3157 = vmul.f32 %v3153, 0.2
      %v3158 = vsel %vm3154, %v3152, %v3156
      %v3159 = vsel %vm3155, %v3153, %v3157
      %3160 = vst [vmem:[#allocation2 + $0x48] sm:$0xf] %v3158
      %3161 = vst [vmem:[#allocation2 + $0x50] sm:$0xf] %v3159
      %v3162 = vld [vmem:[#allocation2] sm:$0xff]
      %v3163 = vld [vmem:[#allocation2 + $0x8] sm:$0xff]
      %v3164 = vld [vmem:[#allocation2 + $0x10] sm:$0xff]
      %v3165 = vld [vmem:[#allocation2 + $0x20] sm:$0xff]
      %v3166 = vld [vmem:[#allocation2 + $0x28] sm:$0xff]
      %v3167 = vld [vmem:[#allocation2 + $0x30] sm:$0xff]
      %v3168 = vld [vmem:[#allocation2 + $0x40] sm:$0xf]
      %v3169 = vld [vmem:[#allocation2 + $0x48] sm:$0xf]
      %v3170 = vld [vmem:[#allocation2 + $0x50] sm:$0xf]
      %3180 = vrot.lane.b32.xlu0 %v3162, 17
      %v3181 = vpop.permute.xlu0 %3180
      %3182 = vrot.lane.b32.xlu0 %v3163, 17
      %v3183 = vpop.permute.xlu0 %3182
      %3184 = vrot.lane.b32.xlu0 %v3164, 17
      %v3185 = vpop.permute.xlu0 %3184
      %3186 = vrot.lane.b32.xlu0 %v3165, 17
      %v3187 = vpop.permute.xlu0 %3186
      %3188 = vrot.lane.b32.xlu0 %v3166, 17
      %v3189 = vpop.permute.xlu0 %3188
      %3190 = vrot.lane.b32.xlu0 %v3167, 17
      %v3191 = vpop.permute.xlu0 %3190
      %3192 = vrot.lane.b32.xlu0 %v3168, 17
      %v3193 = vpop.permute.xlu0 %3192
      %3194 = vrot.lane.b32.xlu0 %v3169, 17
      %v3195 = vpop.permute.xlu0 %3194
      %3196 = vrot.lane.b32.xlu0 %v3170, 17
      %v3197 = vpop.permute.xlu0 %3196
      %v3198 = vsel %vm450, %v3181, %v3183
      %v3199 = vsel %vm450, %v3183, %v3185
      %v3200 = vsel %vm450, %v3187, %v3189
      %v3201 = vsel %vm450, %v3189, %v3191
      %v3202 = vsel %vm450, %v3193, %v3195
      %v3203 = vsel %vm450, %v3195, %v3197
      %v3210 = vsel %vm439, %v3198, 0.0
      %v3211 = vsel %vm440, %v3199, 0.0
      %v3212 = vsel %vm439, %v3200, 0.0
      %v3213 = vsel %vm440, %v3201, 0.0
      %v3214 = vsel %vm439, %v3202, 0.0
      %v3215 = vsel %vm440, %v3203, 0.0
      %v3216 = vld [vmem:[%s4] sm:$0xf]
      %s3217 = scalar_lea.vmem %s4, 4
      %v3218 = vld [vmem:[%s3217] sm:$0xf]
      %3219 = vrot.lane.b32.xlu0 %v3162, 16
      %v3220 = vpop.permute.xlu0 %3219
      %3221 = vrot.lane.b32.xlu0 %v3163, 16
      %v3222 = vpop.permute.xlu0 %3221
      %3223 = vrot.lane.b32.xlu0 %v3164, 16
      %v3224 = vpop.permute.xlu0 %3223
      %3225 = vrot.lane.b32.xlu0 %v3165, 16
      %v3226 = vpop.permute.xlu0 %3225
      %3227 = vrot.lane.b32.xlu0 %v3166, 16
      %v3228 = vpop.permute.xlu0 %3227
      %3229 = vrot.lane.b32.xlu0 %v3167, 16
      %v3230 = vpop.permute.xlu0 %3229
      %3231 = vrot.lane.b32.xlu0 %v3168, 16
      %v3232 = vpop.permute.xlu0 %3231
      %3233 = vrot.lane.b32.xlu0 %v3169, 16
      %v3234 = vpop.permute.xlu0 %3233
      %3235 = vrot.lane.b32.xlu0 %v3170, 16
      %v3236 = vpop.permute.xlu0 %3235
      %v3237 = vsel %vm466, %v3220, %v3222
      %v3238 = vsel %vm466, %v3222, %v3224
      %v3239 = vsel %vm466, %v3226, %v3228
      %v3240 = vsel %vm466, %v3228, %v3230
      %v3241 = vsel %vm466, %v3232, %v3234
      %v3242 = vsel %vm466, %v3234, %v3236
      %vm3247 = vcmask 162816
      %v3249 = vsel %vm3247, %v3218, 0
      %v3251 = vsel %vm1329, %v3241, 0
      %v3253 = vsel %vm1329, %v3242, 0
      %3255 = vmatprep.subr.mxu0 %v3238
      %3256 = vmatpush1.msra.mxu0 %v3237
      %3257 = vmatprep.subr.mxu0 %v3240
      %3258 = vmatpush1.msra.mxu0 %v3239
      %3259 = vmatprep.subr.mxu0 %v3253
      %3260 = vmatpush1.msra.mxu0 %v3251
      %3261 = vmatprep.subr.mxu0 0.0
      %3262 = vmatpush1.msra.mxu0 0.0
      %3263 = vmatprep.subr.mxu0 0.0
      %3264 = vmatpush1.msra.mxu0 0.0
      %3265 = vmatprep.subr.mxu0 0.0
      %3266 = vmatpush1.msra.mxu0 0.0
      %3267 = vmatprep.subr.mxu0 0.0
      %3268 = vmatpush1.msra.mxu0 0.0
      %3269 = vmatprep.subr.mxu0 0.0
      %3270 = vmatpush1.msra.mxu0 0.0
      %3271 = vmatprep.subr.mxu0 0.0
      %3272 = vmatpush1.msra.mxu0 0.0
      %3273 = vmatprep.subr.mxu0 0.0
      %3274 = vmatpush1.msra.mxu0 0.0
      %3275 = vmatprep.subr.mxu0 0.0
      %3276 = vmatpush1.msra.mxu0 0.0
      %3277 = vmatprep.subr.mxu0 0.0
      %3278 = vmatpush1.msra.mxu0 0.0
      %3279 = vmatprep.subr.mxu0 0.0
      %3280 = vmatpush1.msra.mxu0 0.0
      %3281 = vmatprep.subr.mxu0 0.0
      %3282 = vmatpush1.msra.mxu0 0.0
      %3283 = vmatprep.subr.mxu0 0.0
      %3284 = vmatpush1.msra.mxu0 0.0
      %3285 = vmatprep.subr.mxu0 0.0
      %3286 = vmatpush1.msra.mxu0 0.0
      %3287 = vmatprep.subr.mxu0 0.0
      %3288 = vmatpush1.msra.mxu0 0.0
      %3289 = vmatprep.subr.mxu0 0.0
      %3290 = vmatpush1.msra.mxu0 0.0
      %3291 = vmatprep.subr.mxu0 0.0
      %3292 = vmatpush1.msra.mxu0 0.0
      %3293 = vmatprep.subr.mxu0 0.0
      %3294 = vmatpush1.msra.mxu0 0.0
      %3295 = vmatprep.subr.mxu0 0.0
      %3296 = vmatpush1.msra.mxu0 0.0
      %3297 = vmatprep.subr.mxu0 0.0
      %3298 = vmatpush1.msra.mxu0 0.0
      %3299 = vmatprep.subr.mxu0 0.0
      %3300 = vmatpush1.msra.mxu0 0.0
      %3301 = vmatprep.subr.mxu0 0.0
      %3302 = vmatpush1.msra.mxu0 0.0
      %3303 = vmatprep.subr.mxu0 0.0
      %3304 = vmatpush1.msra.mxu0 0.0
      %3305 = vmatprep.subr.mxu0 0.0
      %3306 = vmatpush1.msra.mxu0 0.0
      %3307 = vmatprep.subr.mxu0 0.0
      %3308 = vmatpush1.msra.mxu0 0.0
      %3309 = vmatprep.subr.mxu0 0.0
      %3310 = vmatpush1.msra.mxu0 0.0
      %3311 = vmatprep.subr.mxu0 0.0
      %3312 = vmatpush1.msra.mxu0 0.0
      %3313 = vmatprep.subr.mxu0 0.0
      %3314 = vmatpush1.msra.mxu0 0.0
      %3315 = vmatprep.subr.mxu0 0.0
      %3316 = vmatpush1.msra.mxu0 0.0
      %3317 = vmatprep.subr.mxu0 0.0
      %3318 = vmatpush1.msra.mxu0 0.0
      %3319 = vmatprep.mubr.f32.mxu0 0.0
      %3320 = vmatmul.mubr.f32.gmra.mrb[0].mxu0 %v3249
      %v3321 = vpop.f32.mrb[0].mxu0
      %v3322 = vadd.f32 0.0, %v3321
      %v3323 = vpop.f32.mrb[0].mxu0
      %v3324 = vadd.f32 0.0, %v3323
      %3325 = vdwg.mxu0
      %v3327 = vsel %vm3247, %v3216, 0
      %v3330 = vsel %vm1329, %v3214, 0
      %v3333 = vsel %vm1329, %v3215, 0
      %3335 = vmatprep.subr.mxu0 %v3211
      %3336 = vmatpush1.msra.mxu0 %v3210
      %3337 = vmatprep.subr.mxu0 %v3213
      %3338 = vmatpush1.msra.mxu0 %v3212
      %3339 = vmatprep.subr.mxu0 %v3333
      %3340 = vmatpush1.msra.mxu0 %v3330
      %3341 = vmatprep.subr.mxu0 0.0
      %3342 = vmatpush1.msra.mxu0 0.0
      %3343 = vmatprep.subr.mxu0 0.0
      %3344 = vmatpush1.msra.mxu0 0.0
      %3345 = vmatprep.subr.mxu0 0.0
      %3346 = vmatpush1.msra.mxu0 0.0
      %3347 = vmatprep.subr.mxu0 0.0
      %3348 = vmatpush1.msra.mxu0 0.0
      %3349 = vmatprep.subr.mxu0 0.0
      %3350 = vmatpush1.msra.mxu0 0.0
      %3351 = vmatprep.subr.mxu0 0.0
      %3352 = vmatpush1.msra.mxu0 0.0
      %3353 = vmatprep.subr.mxu0 0.0
      %3354 = vmatpush1.msra.mxu0 0.0
      %3355 = vmatprep.subr.mxu0 0.0
      %3356 = vmatpush1.msra.mxu0 0.0
      %3357 = vmatprep.subr.mxu0 0.0
      %3358 = vmatpush1.msra.mxu0 0.0
      %3359 = vmatprep.subr.mxu0 0.0
      %3360 = vmatpush1.msra.mxu0 0.0
      %3361 = vmatprep.subr.mxu0 0.0
      %3362 = vmatpush1.msra.mxu0 0.0
      %3363 = vmatprep.subr.mxu0 0.0
      %3364 = vmatpush1.msra.mxu0 0.0
      %3365 = vmatprep.subr.mxu0 0.0
      %3366 = vmatpush1.msra.mxu0 0.0
      %3367 = vmatprep.subr.mxu0 0.0
      %3368 = vmatpush1.msra.mxu0 0.0
      %3369 = vmatprep.subr.mxu0 0.0
      %3370 = vmatpush1.msra.mxu0 0.0
      %3371 = vmatprep.subr.mxu0 0.0
      %3372 = vmatpush1.msra.mxu0 0.0
      %3373 = vmatprep.subr.mxu0 0.0
      %3374 = vmatpush1.msra.mxu0 0.0
      %3375 = vmatprep.subr.mxu0 0.0
      %3376 = vmatpush1.msra.mxu0 0.0
      %3377 = vmatprep.subr.mxu0 0.0
      %3378 = vmatpush1.msra.mxu0 0.0
      %3379 = vmatprep.subr.mxu0 0.0
      %3380 = vmatpush1.msra.mxu0 0.0
      %3381 = vmatprep.subr.mxu0 0.0
      %3382 = vmatpush1.msra.mxu0 0.0
      %3383 = vmatprep.subr.mxu0 0.0
      %3384 = vmatpush1.msra.mxu0 0.0
      %3385 = vmatprep.subr.mxu0 0.0
      %3386 = vmatpush1.msra.mxu0 0.0
      %3387 = vmatprep.subr.mxu0 0.0
      %3388 = vmatpush1.msra.mxu0 0.0
      %3389 = vmatprep.subr.mxu0 0.0
      %3390 = vmatpush1.msra.mxu0 0.0
      %3391 = vmatprep.subr.mxu0 0.0
      %3392 = vmatpush1.msra.mxu0 0.0
      %3393 = vmatprep.subr.mxu0 0.0
      %3394 = vmatpush1.msra.mxu0 0.0
      %3395 = vmatprep.subr.mxu0 0.0
      %3396 = vmatpush1.msra.mxu0 0.0
      %3397 = vmatprep.subr.mxu0 0.0
      %3398 = vmatpush1.msra.mxu0 0.0
      %3399 = vmatprep.mubr.f32.mxu0 0.0
      %3400 = vmatmul.mubr.f32.gmra.mrb[0].mxu0 %v3327
      %v3401 = vpop.f32.mrb[0].mxu0
      %v3402 = vadd.f32 %v3322, %v3401
      %v3403 = vpop.f32.mrb[0].mxu0
      %v3404 = vadd.f32 %v3324, %v3403
      %3405 = vdwg.mxu0
      %3406 = vrot.lane.b32.xlu0 %v3162, 15
      %v3407 = vpop.permute.xlu0 %3406
      %3408 = vrot.lane.b32.xlu0 %v3163, 15
      %v3409 = vpop.permute.xlu0 %3408
      %3410 = vrot.lane.b32.xlu0 %v3164, 15
      %v3411 = vpop.permute.xlu0 %3410
      %3412 = vrot.lane.b32.xlu0 %v3165, 15
      %v3413 = vpop.permute.xlu0 %3412
      %3414 = vrot.lane.b32.xlu0 %v3166, 15
      %v3415 = vpop.permute.xlu0 %3414
      %3416 = vrot.lane.b32.xlu0 %v3167, 15
      %v3417 = vpop.permute.xlu0 %3416
      %3418 = vrot.lane.b32.xlu0 %v3168, 15
      %v3419 = vpop.permute.xlu0 %3418
      %3420 = vrot.lane.b32.xlu0 %v3169, 15
      %v3421 = vpop.permute.xlu0 %3420
      %3422 = vrot.lane.b32.xlu0 %v3170, 15
      %v3423 = vpop.permute.xlu0 %3422
      %v3424 = vsel %vm630, %v3407, %v3409
      %v3425 = vsel %vm630, %v3409, %v3411
      %v3426 = vsel %vm630, %v3413, %v3415
      %v3427 = vsel %vm630, %v3415, %v3417
      %v3428 = vsel %vm630, %v3419, %v3421
      %v3429 = vsel %vm630, %v3421, %v3423
      %v3436 = vsel %vm622, %v3424, 0.0
      %v3437 = vsel %vm623, %v3425, 0.0
      %v3438 = vsel %vm622, %v3426, 0.0
      %v3439 = vsel %vm623, %v3427, 0.0
      %v3440 = vsel %vm622, %v3428, 0.0
      %v3441 = vsel %vm623, %v3429, 0.0
      %s3442 = scalar_lea.vmem %s4, 8
      %v3443 = vld [vmem:[%s3442] sm:$0xf]
      %v3445 = vsel %vm3247, %v3443, 0
      %v3448 = vsel %vm1329, %v3440, 0
      %v3451 = vsel %vm1329, %v3441, 0
      %3453 = vmatprep.subr.mxu0 %v3437
      %3454 = vmatpush1.msra.mxu0 %v3436
      %3455 = vmatprep.subr.mxu0 %v3439
      %3456 = vmatpush1.msra.mxu0 %v3438
      %3457 = vmatprep.subr.mxu0 %v3451
      %3458 = vmatpush1.msra.mxu0 %v3448
      %3459 = vmatprep.subr.mxu0 0.0
      %3460 = vmatpush1.msra.mxu0 0.0
      %3461 = vmatprep.subr.mxu0 0.0
      %3462 = vmatpush1.msra.mxu0 0.0
      %3463 = vmatprep.subr.mxu0 0.0
      %3464 = vmatpush1.msra.mxu0 0.0
      %3465 = vmatprep.subr.mxu0 0.0
      %3466 = vmatpush1.msra.mxu0 0.0
      %3467 = vmatprep.subr.mxu0 0.0
      %3468 = vmatpush1.msra.mxu0 0.0
      %3469 = vmatprep.subr.mxu0 0.0
      %3470 = vmatpush1.msra.mxu0 0.0
      %3471 = vmatprep.subr.mxu0 0.0
      %3472 = vmatpush1.msra.mxu0 0.0
      %3473 = vmatprep.subr.mxu0 0.0
      %3474 = vmatpush1.msra.mxu0 0.0
      %3475 = vmatprep.subr.mxu0 0.0
      %3476 = vmatpush1.msra.mxu0 0.0
      %3477 = vmatprep.subr.mxu0 0.0
      %3478 = vmatpush1.msra.mxu0 0.0
      %3479 = vmatprep.subr.mxu0 0.0
      %3480 = vmatpush1.msra.mxu0 0.0
      %3481 = vmatprep.subr.mxu0 0.0
      %3482 = vmatpush1.msra.mxu0 0.0
      %3483 = vmatprep.subr.mxu0 0.0
      %3484 = vmatpush1.msra.mxu0 0.0
      %3485 = vmatprep.subr.mxu0 0.0
      %3486 = vmatpush1.msra.mxu0 0.0
      %3487 = vmatprep.subr.mxu0 0.0
      %3488 = vmatpush1.msra.mxu0 0.0
      %3489 = vmatprep.subr.mxu0 0.0
      %3490 = vmatpush1.msra.mxu0 0.0
      %3491 = vmatprep.subr.mxu0 0.0
      %3492 = vmatpush1.msra.mxu0 0.0
      %3493 = vmatprep.subr.mxu0 0.0
      %3494 = vmatpush1.msra.mxu0 0.0
      %3495 = vmatprep.subr.mxu0 0.0
      %3496 = vmatpush1.msra.mxu0 0.0
      %3497 = vmatprep.subr.mxu0 0.0
      %3498 = vmatpush1.msra.mxu0 0.0
      %3499 = vmatprep.subr.mxu0 0.0
      %3500 = vmatpush1.msra.mxu0 0.0
      %3501 = vmatprep.subr.mxu0 0.0
      %3502 = vmatpush1.msra.mxu0 0.0
      %3503 = vmatprep.subr.mxu0 0.0
      %3504 = vmatpush1.msra.mxu0 0.0
      %3505 = vmatprep.subr.mxu0 0.0
      %3506 = vmatpush1.msra.mxu0 0.0
      %3507 = vmatprep.subr.mxu0 0.0
      %3508 = vmatpush1.msra.mxu0 0.0
      %3509 = vmatprep.subr.mxu0 0.0
      %3510 = vmatpush1.msra.mxu0 0.0
      %3511 = vmatprep.subr.mxu0 0.0
      %3512 = vmatpush1.msra.mxu0 0.0
      %3513 = vmatprep.subr.mxu0 0.0
      %3514 = vmatpush1.msra.mxu0 0.0
      %3515 = vmatprep.subr.mxu0 0.0
      %3516 = vmatpush1.msra.mxu0 0.0
      %3517 = vmatprep.mubr.f32.mxu0 0.0
      %3518 = vmatmul.mubr.f32.gmra.mrb[0].mxu0 %v3445
      %v3519 = vpop.f32.mrb[0].mxu0
      %v3520 = vadd.f32 0.0, %v3519
      %v3521 = vpop.f32.mrb[0].mxu0
      %v3522 = vadd.f32 0.0, %v3521
      %3523 = vdwg.mxu0
      %v3524 = vadd.f32 %v3402, %v3520
      %v3525 = vadd.f32 %v3404, %v3522
      %3526 = vrot.lane.b32.xlu0 %v3162, 1
      %v3527 = vpop.permute.xlu0 %3526
      %3528 = vrot.lane.b32.xlu0 %v3163, 1
      %v3529 = vpop.permute.xlu0 %3528
      %3530 = vrot.lane.b32.xlu0 %v3164, 1
      %v3531 = vpop.permute.xlu0 %3530
      %3532 = vrot.lane.b32.xlu0 %v3165, 1
      %v3533 = vpop.permute.xlu0 %3532
      %3534 = vrot.lane.b32.xlu0 %v3166, 1
      %v3535 = vpop.permute.xlu0 %3534
      %3536 = vrot.lane.b32.xlu0 %v3167, 1
      %v3537 = vpop.permute.xlu0 %3536
      %3538 = vrot.lane.b32.xlu0 %v3168, 1
      %v3539 = vpop.permute.xlu0 %3538
      %3540 = vrot.lane.b32.xlu0 %v3169, 1
      %v3541 = vpop.permute.xlu0 %3540
      %3542 = vrot.lane.b32.xlu0 %v3170, 1
      %v3543 = vpop.permute.xlu0 %3542
      %v3544 = vsel %vm721, %v3527, %v3529
      %v3545 = vsel %vm721, %v3529, %v3531
      %v3546 = vsel %vm721, %v3533, %v3535
      %v3547 = vsel %vm721, %v3535, %v3537
      %v3548 = vsel %vm721, %v3539, %v3541
      %v3549 = vsel %vm721, %v3541, %v3543
      %v3556 = vsel %vm439, %v3544, 0.0
      %v3557 = vsel %vm440, %v3545, 0.0
      %v3558 = vsel %vm439, %v3546, 0.0
      %v3559 = vsel %vm440, %v3547, 0.0
      %v3560 = vsel %vm439, %v3548, 0.0
      %v3561 = vsel %vm440, %v3549, 0.0
      %s3562 = scalar_lea.vmem %s4, 12
      %v3563 = vld [vmem:[%s3562] sm:$0xf]
      %v3565 = vsel %vm3247, %v3563, 0
      %v3568 = vsel %vm1329, %v3560, 0
      %v3571 = vsel %vm1329, %v3561, 0
      %3573 = vmatprep.subr.mxu0 %v3557
      %3574 = vmatpush1.msra.mxu0 %v3556
      %3575 = vmatprep.subr.mxu0 %v3559
      %3576 = vmatpush1.msra.mxu0 %v3558
      %3577 = vmatprep.subr.mxu0 %v3571
      %3578 = vmatpush1.msra.mxu0 %v3568
      %3579 = vmatprep.subr.mxu0 0.0
      %3580 = vmatpush1.msra.mxu0 0.0
      %3581 = vmatprep.subr.mxu0 0.0
      %3582 = vmatpush1.msra.mxu0 0.0
      %3583 = vmatprep.subr.mxu0 0.0
      %3584 = vmatpush1.msra.mxu0 0.0
      %3585 = vmatprep.subr.mxu0 0.0
      %3586 = vmatpush1.msra.mxu0 0.0
      %3587 = vmatprep.subr.mxu0 0.0
      %3588 = vmatpush1.msra.mxu0 0.0
      %3589 = vmatprep.subr.mxu0 0.0
      %3590 = vmatpush1.msra.mxu0 0.0
      %3591 = vmatprep.subr.mxu0 0.0
      %3592 = vmatpush1.msra.mxu0 0.0
      %3593 = vmatprep.subr.mxu0 0.0
      %3594 = vmatpush1.msra.mxu0 0.0
      %3595 = vmatprep.subr.mxu0 0.0
      %3596 = vmatpush1.msra.mxu0 0.0
      %3597 = vmatprep.subr.mxu0 0.0
      %3598 = vmatpush1.msra.mxu0 0.0
      %3599 = vmatprep.subr.mxu0 0.0
      %3600 = vmatpush1.msra.mxu0 0.0
      %3601 = vmatprep.subr.mxu0 0.0
      %3602 = vmatpush1.msra.mxu0 0.0
      %3603 = vmatprep.subr.mxu0 0.0
      %3604 = vmatpush1.msra.mxu0 0.0
      %3605 = vmatprep.subr.mxu0 0.0
      %3606 = vmatpush1.msra.mxu0 0.0
      %3607 = vmatprep.subr.mxu0 0.0
      %3608 = vmatpush1.msra.mxu0 0.0
      %3609 = vmatprep.subr.mxu0 0.0
      %3610 = vmatpush1.msra.mxu0 0.0
      %3611 = vmatprep.subr.mxu0 0.0
      %3612 = vmatpush1.msra.mxu0 0.0
      %3613 = vmatprep.subr.mxu0 0.0
      %3614 = vmatpush1.msra.mxu0 0.0
      %3615 = vmatprep.subr.mxu0 0.0
      %3616 = vmatpush1.msra.mxu0 0.0
      %3617 = vmatprep.subr.mxu0 0.0
      %3618 = vmatpush1.msra.mxu0 0.0
      %3619 = vmatprep.subr.mxu0 0.0
      %3620 = vmatpush1.msra.mxu0 0.0
      %3621 = vmatprep.subr.mxu0 0.0
      %3622 = vmatpush1.msra.mxu0 0.0
      %3623 = vmatprep.subr.mxu0 0.0
      %3624 = vmatpush1.msra.mxu0 0.0
      %3625 = vmatprep.subr.mxu0 0.0
      %3626 = vmatpush1.msra.mxu0 0.0
      %3627 = vmatprep.subr.mxu0 0.0
      %3628 = vmatpush1.msra.mxu0 0.0
      %3629 = vmatprep.subr.mxu0 0.0
      %3630 = vmatpush1.msra.mxu0 0.0
      %3631 = vmatprep.subr.mxu0 0.0
      %3632 = vmatpush1.msra.mxu0 0.0
      %3633 = vmatprep.subr.mxu0 0.0
      %3634 = vmatpush1.msra.mxu0 0.0
      %3635 = vmatprep.subr.mxu0 0.0
      %3636 = vmatpush1.msra.mxu0 0.0
      %3637 = vmatprep.mubr.f32.mxu0 0.0
      %3638 = vmatmul.mubr.f32.gmra.mrb[0].mxu0 %v3565
      %v3639 = vpop.f32.mrb[0].mxu0
      %v3640 = vadd.f32 0.0, %v3639
      %v3641 = vpop.f32.mrb[0].mxu0
      %v3642 = vadd.f32 0.0, %v3641
      %3643 = vdwg.mxu0
      %v3644 = vadd.f32 %v3524, %v3640
      %v3645 = vadd.f32 %v3525, %v3642
      %s3646 = scalar_lea.vmem %s4, 16
      %v3647 = vld [vmem:[%s3646] sm:$0xf]
      %v3649 = vsel %vm3247, %v3647, 0
      %v3651 = vsel %vm1329, %v3169, 0
      %v3653 = vsel %vm1329, %v3170, 0
      %3655 = vmatprep.subr.mxu0 %v3164
      %3656 = vmatpush1.msra.mxu0 %v3163
      %3657 = vmatprep.subr.mxu0 %v3167
      %3658 = vmatpush1.msra.mxu0 %v3166
      %3659 = vmatprep.subr.mxu0 %v3653
      %3660 = vmatpush1.msra.mxu0 %v3651
      %3661 = vmatprep.subr.mxu0 0.0
      %3662 = vmatpush1.msra.mxu0 0.0
      %3663 = vmatprep.subr.mxu0 0.0
      %3664 = vmatpush1.msra.mxu0 0.0
      %3665 = vmatprep.subr.mxu0 0.0
      %3666 = vmatpush1.msra.mxu0 0.0
      %3667 = vmatprep.subr.mxu0 0.0
      %3668 = vmatpush1.msra.mxu0 0.0
      %3669 = vmatprep.subr.mxu0 0.0
      %3670 = vmatpush1.msra.mxu0 0.0
      %3671 = vmatprep.subr.mxu0 0.0
      %3672 = vmatpush1.msra.mxu0 0.0
      %3673 = vmatprep.subr.mxu0 0.0
      %3674 = vmatpush1.msra.mxu0 0.0
      %3675 = vmatprep.subr.mxu0 0.0
      %3676 = vmatpush1.msra.mxu0 0.0
      %3677 = vmatprep.subr.mxu0 0.0
      %3678 = vmatpush1.msra.mxu0 0.0
      %3679 = vmatprep.subr.mxu0 0.0
      %3680 = vmatpush1.msra.mxu0 0.0
      %3681 = vmatprep.subr.mxu0 0.0
      %3682 = vmatpush1.msra.mxu0 0.0
      %3683 = vmatprep.subr.mxu0 0.0
      %3684 = vmatpush1.msra.mxu0 0.0
      %3685 = vmatprep.subr.mxu0 0.0
      %3686 = vmatpush1.msra.mxu0 0.0
      %3687 = vmatprep.subr.mxu0 0.0
      %3688 = vmatpush1.msra.mxu0 0.0
      %3689 = vmatprep.subr.mxu0 0.0
      %3690 = vmatpush1.msra.mxu0 0.0
      %3691 = vmatprep.subr.mxu0 0.0
      %3692 = vmatpush1.msra.mxu0 0.0
      %3693 = vmatprep.subr.mxu0 0.0
      %3694 = vmatpush1.msra.mxu0 0.0
      %3695 = vmatprep.subr.mxu0 0.0
      %3696 = vmatpush1.msra.mxu0 0.0
      %3697 = vmatprep.subr.mxu0 0.0
      %3698 = vmatpush1.msra.mxu0 0.0
      %3699 = vmatprep.subr.mxu0 0.0
      %3700 = vmatpush1.msra.mxu0 0.0
      %3701 = vmatprep.subr.mxu0 0.0
      %3702 = vmatpush1.msra.mxu0 0.0
      %3703 = vmatprep.subr.mxu0 0.0
      %3704 = vmatpush1.msra.mxu0 0.0
      %3705 = vmatprep.subr.mxu0 0.0
      %3706 = vmatpush1.msra.mxu0 0.0
      %3707 = vmatprep.subr.mxu0 0.0
      %3708 = vmatpush1.msra.mxu0 0.0
      %3709 = vmatprep.subr.mxu0 0.0
      %3710 = vmatpush1.msra.mxu0 0.0
      %3711 = vmatprep.subr.mxu0 0.0
      %3712 = vmatpush1.msra.mxu0 0.0
      %3713 = vmatprep.subr.mxu0 0.0
      %3714 = vmatpush1.msra.mxu0 0.0
      %3715 = vmatprep.subr.mxu0 0.0
      %3716 = vmatpush1.msra.mxu0 0.0
      %3717 = vmatprep.subr.mxu0 0.0
      %3718 = vmatpush1.msra.mxu0 0.0
      %3719 = vmatprep.mubr.f32.mxu0 0.0
      %3720 = vmatmul.mubr.f32.gmra.mrb[0].mxu0 %v3649
      %v3721 = vpop.f32.mrb[0].mxu0
      %v3722 = vadd.f32 0.0, %v3721
      %v3723 = vpop.f32.mrb[0].mxu0
      %v3724 = vadd.f32 0.0, %v3723
      %3725 = vdwg.mxu0
      %v3726 = vadd.f32 %v3644, %v3722
      %v3727 = vadd.f32 %v3645, %v3724
      %v3728 = vld [vmem:[#allocation2 + $0x8] sm:$0xff]
      %v3729 = vld [vmem:[#allocation2 + $0x10] sm:$0xff]
      %v3730 = vld [vmem:[#allocation2 + $0x18] sm:$0xff]
      %v3731 = vld [vmem:[#allocation2 + $0x28] sm:$0xff]
      %v3732 = vld [vmem:[#allocation2 + $0x30] sm:$0xff]
      %v3733 = vld [vmem:[#allocation2 + $0x38] sm:$0xff]
      %v3734 = vld [vmem:[#allocation2 + $0x48] sm:$0xf]
      %v3735 = vld [vmem:[#allocation2 + $0x50] sm:$0xf]
      %v3736 = vld [vmem:[#allocation2 + $0x58] sm:$0xf]
      %3746 = vrot.lane.b32.xlu0 %v3728, 127
      %v3747 = vpop.permute.xlu0 %3746
      %3748 = vrot.lane.b32.xlu0 %v3729, 127
      %v3749 = vpop.permute.xlu0 %3748
      %3750 = vrot.lane.b32.xlu0 %v3730, 127
      %v3751 = vpop.permute.xlu0 %3750
      %3752 = vrot.lane.b32.xlu0 %v3731, 127
      %v3753 = vpop.permute.xlu0 %3752
      %3754 = vrot.lane.b32.xlu0 %v3732, 127
      %v3755 = vpop.permute.xlu0 %3754
      %3756 = vrot.lane.b32.xlu0 %v3733, 127
      %v3757 = vpop.permute.xlu0 %3756
      %3758 = vrot.lane.b32.xlu0 %v3734, 127
      %v3759 = vpop.permute.xlu0 %3758
      %3760 = vrot.lane.b32.xlu0 %v3735, 127
      %v3761 = vpop.permute.xlu0 %3760
      %3762 = vrot.lane.b32.xlu0 %v3736, 127
      %v3763 = vpop.permute.xlu0 %3762
      %v3764 = vsel %vm896, %v3747, %v3749
      %v3765 = vsel %vm896, %v3749, %v3751
      %v3766 = vsel %vm896, %v3753, %v3755
      %v3767 = vsel %vm896, %v3755, %v3757
      %v3768 = vsel %vm896, %v3759, %v3761
      %v3769 = vsel %vm896, %v3761, %v3763
      %v3776 = vsel %vm622, %v3764, 0.0
      %v3777 = vsel %vm623, %v3765, 0.0
      %v3778 = vsel %vm622, %v3766, 0.0
      %v3779 = vsel %vm623, %v3767, 0.0
      %v3780 = vsel %vm622, %v3768, 0.0
      %v3781 = vsel %vm623, %v3769, 0.0
      %s3782 = scalar_lea.vmem %s4, 20
      %v3783 = vld [vmem:[%s3782] sm:$0xf]
      %v3785 = vsel %vm3247, %v3783, 0
      %v3788 = vsel %vm1329, %v3780, 0
      %v3791 = vsel %vm1329, %v3781, 0
      %3793 = vmatprep.subr.mxu0 %v3777
      %3794 = vmatpush1.msra.mxu0 %v3776
      %3795 = vmatprep.subr.mxu0 %v3779
      %3796 = vmatpush1.msra.mxu0 %v3778
      %3797 = vmatprep.subr.mxu0 %v3791
      %3798 = vmatpush1.msra.mxu0 %v3788
      %3799 = vmatprep.subr.mxu0 0.0
      %3800 = vmatpush1.msra.mxu0 0.0
      %3801 = vmatprep.subr.mxu0 0.0
      %3802 = vmatpush1.msra.mxu0 0.0
      %3803 = vmatprep.subr.mxu0 0.0
      %3804 = vmatpush1.msra.mxu0 0.0
      %3805 = vmatprep.subr.mxu0 0.0
      %3806 = vmatpush1.msra.mxu0 0.0
      %3807 = vmatprep.subr.mxu0 0.0
      %3808 = vmatpush1.msra.mxu0 0.0
      %3809 = vmatprep.subr.mxu0 0.0
      %3810 = vmatpush1.msra.mxu0 0.0
      %3811 = vmatprep.subr.mxu0 0.0
      %3812 = vmatpush1.msra.mxu0 0.0
      %3813 = vmatprep.subr.mxu0 0.0
      %3814 = vmatpush1.msra.mxu0 0.0
      %3815 = vmatprep.subr.mxu0 0.0
      %3816 = vmatpush1.msra.mxu0 0.0
      %3817 = vmatprep.subr.mxu0 0.0
      %3818 = vmatpush1.msra.mxu0 0.0
      %3819 = vmatprep.subr.mxu0 0.0
      %3820 = vmatpush1.msra.mxu0 0.0
      %3821 = vmatprep.subr.mxu0 0.0
      %3822 = vmatpush1.msra.mxu0 0.0
      %3823 = vmatprep.subr.mxu0 0.0
      %3824 = vmatpush1.msra.mxu0 0.0
      %3825 = vmatprep.subr.mxu0 0.0
      %3826 = vmatpush1.msra.mxu0 0.0
      %3827 = vmatprep.subr.mxu0 0.0
      %3828 = vmatpush1.msra.mxu0 0.0
      %3829 = vmatprep.subr.mxu0 0.0
      %3830 = vmatpush1.msra.mxu0 0.0
      %3831 = vmatprep.subr.mxu0 0.0
      %3832 = vmatpush1.msra.mxu0 0.0
      %3833 = vmatprep.subr.mxu0 0.0
      %3834 = vmatpush1.msra.mxu0 0.0
      %3835 = vmatprep.subr.mxu0 0.0
      %3836 = vmatpush1.msra.mxu0 0.0
      %3837 = vmatprep.subr.mxu0 0.0
      %3838 = vmatpush1.msra.mxu0 0.0
      %3839 = vmatprep.subr.mxu0 0.0
      %3840 = vmatpush1.msra.mxu0 0.0
      %3841 = vmatprep.subr.mxu0 0.0
      %3842 = vmatpush1.msra.mxu0 0.0
      %3843 = vmatprep.subr.mxu0 0.0
      %3844 = vmatpush1.msra.mxu0 0.0
      %3845 = vmatprep.subr.mxu0 0.0
      %3846 = vmatpush1.msra.mxu0 0.0
      %3847 = vmatprep.subr.mxu0 0.0
      %3848 = vmatpush1.msra.mxu0 0.0
      %3849 = vmatprep.subr.mxu0 0.0
      %3850 = vmatpush1.msra.mxu0 0.0
      %3851 = vmatprep.subr.mxu0 0.0
      %3852 = vmatpush1.msra.mxu0 0.0
      %3853 = vmatprep.subr.mxu0 0.0
      %3854 = vmatpush1.msra.mxu0 0.0
      %3855 = vmatprep.subr.mxu0 0.0
      %3856 = vmatpush1.msra.mxu0 0.0
      %3857 = vmatprep.mubr.f32.mxu0 0.0
      %3858 = vmatmul.mubr.f32.gmra.mrb[0].mxu0 %v3785
      %v3859 = vpop.f32.mrb[0].mxu0
      %v3860 = vadd.f32 0.0, %v3859
      %v3861 = vpop.f32.mrb[0].mxu0
      %v3862 = vadd.f32 0.0, %v3861
      %3863 = vdwg.mxu0
      %v3864 = vadd.f32 %v3726, %v3860
      %v3865 = vadd.f32 %v3727, %v3862
      %3866 = vrot.lane.b32.xlu0 %v3728, 113
      %v3867 = vpop.permute.xlu0 %3866
      %3868 = vrot.lane.b32.xlu0 %v3729, 113
      %v3869 = vpop.permute.xlu0 %3868
      %3870 = vrot.lane.b32.xlu0 %v3730, 113
      %v3871 = vpop.permute.xlu0 %3870
      %3872 = vrot.lane.b32.xlu0 %v3731, 113
      %v3873 = vpop.permute.xlu0 %3872
      %3874 = vrot.lane.b32.xlu0 %v3732, 113
      %v3875 = vpop.permute.xlu0 %3874
      %3876 = vrot.lane.b32.xlu0 %v3733, 113
      %v3877 = vpop.permute.xlu0 %3876
      %3878 = vrot.lane.b32.xlu0 %v3734, 113
      %v3879 = vpop.permute.xlu0 %3878
      %3880 = vrot.lane.b32.xlu0 %v3735, 113
      %v3881 = vpop.permute.xlu0 %3880
      %3882 = vrot.lane.b32.xlu0 %v3736, 113
      %v3883 = vpop.permute.xlu0 %3882
      %v3884 = vsel %vm987, %v3867, %v3869
      %v3885 = vsel %vm987, %v3869, %v3871
      %v3886 = vsel %vm987, %v3873, %v3875
      %v3887 = vsel %vm987, %v3875, %v3877
      %v3888 = vsel %vm987, %v3879, %v3881
      %v3889 = vsel %vm987, %v3881, %v3883
      %v3896 = vsel %vm439, %v3884, 0.0
      %v3897 = vsel %vm440, %v3885, 0.0
      %v3898 = vsel %vm439, %v3886, 0.0
      %v3899 = vsel %vm440, %v3887, 0.0
      %v3900 = vsel %vm439, %v3888, 0.0
      %v3901 = vsel %vm440, %v3889, 0.0
      %s3902 = scalar_lea.vmem %s4, 24
      %v3903 = vld [vmem:[%s3902] sm:$0xf]
      %v3905 = vsel %vm3247, %v3903, 0
      %v3908 = vsel %vm1329, %v3900, 0
      %v3911 = vsel %vm1329, %v3901, 0
      %3913 = vmatprep.subr.mxu0 %v3897
      %3914 = vmatpush1.msra.mxu0 %v3896
      %3915 = vmatprep.subr.mxu0 %v3899
      %3916 = vmatpush1.msra.mxu0 %v3898
      %3917 = vmatprep.subr.mxu0 %v3911
      %3918 = vmatpush1.msra.mxu0 %v3908
      %3919 = vmatprep.subr.mxu0 0.0
      %3920 = vmatpush1.msra.mxu0 0.0
      %3921 = vmatprep.subr.mxu0 0.0
      %3922 = vmatpush1.msra.mxu0 0.0
      %3923 = vmatprep.subr.mxu0 0.0
      %3924 = vmatpush1.msra.mxu0 0.0
      %3925 = vmatprep.subr.mxu0 0.0
      %3926 = vmatpush1.msra.mxu0 0.0
      %3927 = vmatprep.subr.mxu0 0.0
      %3928 = vmatpush1.msra.mxu0 0.0
      %3929 = vmatprep.subr.mxu0 0.0
      %3930 = vmatpush1.msra.mxu0 0.0
      %3931 = vmatprep.subr.mxu0 0.0
      %3932 = vmatpush1.msra.mxu0 0.0
      %3933 = vmatprep.subr.mxu0 0.0
      %3934 = vmatpush1.msra.mxu0 0.0
      %3935 = vmatprep.subr.mxu0 0.0
      %3936 = vmatpush1.msra.mxu0 0.0
      %3937 = vmatprep.subr.mxu0 0.0
      %3938 = vmatpush1.msra.mxu0 0.0
      %3939 = vmatprep.subr.mxu0 0.0
      %3940 = vmatpush1.msra.mxu0 0.0
      %3941 = vmatprep.subr.mxu0 0.0
      %3942 = vmatpush1.msra.mxu0 0.0
      %3943 = vmatprep.subr.mxu0 0.0
      %3944 = vmatpush1.msra.mxu0 0.0
      %3945 = vmatprep.subr.mxu0 0.0
      %3946 = vmatpush1.msra.mxu0 0.0
      %3947 = vmatprep.subr.mxu0 0.0
      %3948 = vmatpush1.msra.mxu0 0.0
      %3949 = vmatprep.subr.mxu0 0.0
      %3950 = vmatpush1.msra.mxu0 0.0
      %3951 = vmatprep.subr.mxu0 0.0
      %3952 = vmatpush1.msra.mxu0 0.0
      %3953 = vmatprep.subr.mxu0 0.0
      %3954 = vmatpush1.msra.mxu0 0.0
      %3955 = vmatprep.subr.mxu0 0.0
      %3956 = vmatpush1.msra.mxu0 0.0
      %3957 = vmatprep.subr.mxu0 0.0
      %3958 = vmatpush1.msra.mxu0 0.0
      %3959 = vmatprep.subr.mxu0 0.0
      %3960 = vmatpush1.msra.mxu0 0.0
      %3961 = vmatprep.subr.mxu0 0.0
      %3962 = vmatpush1.msra.mxu0 0.0
      %3963 = vmatprep.subr.mxu0 0.0
      %3964 = vmatpush1.msra.mxu0 0.0
      %3965 = vmatprep.subr.mxu0 0.0
      %3966 = vmatpush1.msra.mxu0 0.0
      %3967 = vmatprep.subr.mxu0 0.0
      %3968 = vmatpush1.msra.mxu0 0.0
      %3969 = vmatprep.subr.mxu0 0.0
      %3970 = vmatpush1.msra.mxu0 0.0
      %3971 = vmatprep.subr.mxu0 0.0
      %3972 = vmatpush1.msra.mxu0 0.0
      %3973 = vmatprep.subr.mxu0 0.0
      %3974 = vmatpush1.msra.mxu0 0.0
      %3975 = vmatprep.subr.mxu0 0.0
      %3976 = vmatpush1.msra.mxu0 0.0
      %3977 = vmatprep.mubr.f32.mxu0 0.0
      %3978 = vmatmul.mubr.f32.gmra.mrb[0].mxu0 %v3905
      %v3979 = vpop.f32.mrb[0].mxu0
      %v3980 = vadd.f32 0.0, %v3979
      %v3981 = vpop.f32.mrb[0].mxu0
      %v3982 = vadd.f32 0.0, %v3981
      %3983 = vdwg.mxu0
      %v3984 = vadd.f32 %v3864, %v3980
      %v3985 = vadd.f32 %v3865, %v3982
      %s3986 = scalar_lea.vmem %s4, 28
      %v3987 = vld [vmem:[%s3986] sm:$0xf]
      %3988 = vrot.lane.b32.xlu0 %v3728, 112
      %v3989 = vpop.permute.xlu0 %3988
      %3990 = vrot.lane.b32.xlu0 %v3729, 112
      %v3991 = vpop.permute.xlu0 %3990
      %3992 = vrot.lane.b32.xlu0 %v3730, 112
      %v3993 = vpop.permute.xlu0 %3992
      %3994 = vrot.lane.b32.xlu0 %v3731, 112
      %v3995 = vpop.permute.xlu0 %3994
      %3996 = vrot.lane.b32.xlu0 %v3732, 112
      %v3997 = vpop.permute.xlu0 %3996
      %3998 = vrot.lane.b32.xlu0 %v3733, 112
      %v3999 = vpop.permute.xlu0 %3998
      %4000 = vrot.lane.b32.xlu0 %v3734, 112
      %v4001 = vpop.permute.xlu0 %4000
      %4002 = vrot.lane.b32.xlu0 %v3735, 112
      %v4003 = vpop.permute.xlu0 %4002
      %4004 = vrot.lane.b32.xlu0 %v3736, 112
      %v4005 = vpop.permute.xlu0 %4004
      %v4006 = vsel %vm1080, %v3989, %v3991
      %v4007 = vsel %vm1080, %v3991, %v3993
      %v4008 = vsel %vm1080, %v3995, %v3997
      %v4009 = vsel %vm1080, %v3997, %v3999
      %v4010 = vsel %vm1080, %v4001, %v4003
      %v4011 = vsel %vm1080, %v4003, %v4005
      %v4017 = vsel %vm3247, %v3987, 0
      %v4019 = vsel %vm1329, %v4010, 0
      %v4021 = vsel %vm1329, %v4011, 0
      %4023 = vmatprep.subr.mxu0 %v4007
      %4024 = vmatpush1.msra.mxu0 %v4006
      %4025 = vmatprep.subr.mxu0 %v4009
      %4026 = vmatpush1.msra.mxu0 %v4008
      %4027 = vmatprep.subr.mxu0 %v4021
      %4028 = vmatpush1.msra.mxu0 %v4019
      %4029 = vmatprep.subr.mxu0 0.0
      %4030 = vmatpush1.msra.mxu0 0.0
      %4031 = vmatprep.subr.mxu0 0.0
      %4032 = vmatpush1.msra.mxu0 0.0
      %4033 = vmatprep.subr.mxu0 0.0
      %4034 = vmatpush1.msra.mxu0 0.0
      %4035 = vmatprep.subr.mxu0 0.0
      %4036 = vmatpush1.msra.mxu0 0.0
      %4037 = vmatprep.subr.mxu0 0.0
      %4038 = vmatpush1.msra.mxu0 0.0
      %4039 = vmatprep.subr.mxu0 0.0
      %4040 = vmatpush1.msra.mxu0 0.0
      %4041 = vmatprep.subr.mxu0 0.0
      %4042 = vmatpush1.msra.mxu0 0.0
      %4043 = vmatprep.subr.mxu0 0.0
      %4044 = vmatpush1.msra.mxu0 0.0
      %4045 = vmatprep.subr.mxu0 0.0
      %4046 = vmatpush1.msra.mxu0 0.0
      %4047 = vmatprep.subr.mxu0 0.0
      %4048 = vmatpush1.msra.mxu0 0.0
      %4049 = vmatprep.subr.mxu0 0.0
      %4050 = vmatpush1.msra.mxu0 0.0
      %4051 = vmatprep.subr.mxu0 0.0
      %4052 = vmatpush1.msra.mxu0 0.0
      %4053 = vmatprep.subr.mxu0 0.0
      %4054 = vmatpush1.msra.mxu0 0.0
      %4055 = vmatprep.subr.mxu0 0.0
      %4056 = vmatpush1.msra.mxu0 0.0
      %4057 = vmatprep.subr.mxu0 0.0
      %4058 = vmatpush1.msra.mxu0 0.0
      %4059 = vmatprep.subr.mxu0 0.0
      %4060 = vmatpush1.msra.mxu0 0.0
      %4061 = vmatprep.subr.mxu0 0.0
      %4062 = vmatpush1.msra.mxu0 0.0
      %4063 = vmatprep.subr.mxu0 0.0
      %4064 = vmatpush1.msra.mxu0 0.0
      %4065 = vmatprep.subr.mxu0 0.0
      %4066 = vmatpush1.msra.mxu0 0.0
      %4067 = vmatprep.subr.mxu0 0.0
      %4068 = vmatpush1.msra.mxu0 0.0
      %4069 = vmatprep.subr.mxu0 0.0
      %4070 = vmatpush1.msra.mxu0 0.0
      %4071 = vmatprep.subr.mxu0 0.0
      %4072 = vmatpush1.msra.mxu0 0.0
      %4073 = vmatprep.subr.mxu0 0.0
      %4074 = vmatpush1.msra.mxu0 0.0
      %4075 = vmatprep.subr.mxu0 0.0
      %4076 = vmatpush1.msra.mxu0 0.0
      %4077 = vmatprep.subr.mxu0 0.0
      %4078 = vmatpush1.msra.mxu0 0.0
      %4079 = vmatprep.subr.mxu0 0.0
      %4080 = vmatpush1.msra.mxu0 0.0
      %4081 = vmatprep.subr.mxu0 0.0
      %4082 = vmatpush1.msra.mxu0 0.0
      %4083 = vmatprep.subr.mxu0 0.0
      %4084 = vmatpush1.msra.mxu0 0.0
      %4085 = vmatprep.subr.mxu0 0.0
      %4086 = vmatpush1.msra.mxu0 0.0
      %4087 = vmatprep.mubr.f32.mxu0 0.0
      %4088 = vmatmul.mubr.f32.gmra.mrb[0].mxu0 %v4017
      %v4089 = vpop.f32.mrb[0].mxu0
      %v4090 = vadd.f32 0.0, %v4089
      %v4091 = vpop.f32.mrb[0].mxu0
      %v4092 = vadd.f32 0.0, %v4091
      %4093 = vdwg.mxu0
      %v4094 = vadd.f32 %v3984, %v4090
      %v4095 = vadd.f32 %v3985, %v4092
      %4096 = vrot.lane.b32.xlu0 %v3728, 111
      %v4097 = vpop.permute.xlu0 %4096
      %4098 = vrot.lane.b32.xlu0 %v3729, 111
      %v4099 = vpop.permute.xlu0 %4098
      %4100 = vrot.lane.b32.xlu0 %v3730, 111
      %v4101 = vpop.permute.xlu0 %4100
      %4102 = vrot.lane.b32.xlu0 %v3731, 111
      %v4103 = vpop.permute.xlu0 %4102
      %4104 = vrot.lane.b32.xlu0 %v3732, 111
      %v4105 = vpop.permute.xlu0 %4104
      %4106 = vrot.lane.b32.xlu0 %v3733, 111
      %v4107 = vpop.permute.xlu0 %4106
      %4108 = vrot.lane.b32.xlu0 %v3734, 111
      %v4109 = vpop.permute.xlu0 %4108
      %4110 = vrot.lane.b32.xlu0 %v3735, 111
      %v4111 = vpop.permute.xlu0 %4110
      %4112 = vrot.lane.b32.xlu0 %v3736, 111
      %v4113 = vpop.permute.xlu0 %4112
      %v4114 = vsel %vm1167, %v4097, %v4099
      %v4115 = vsel %vm1167, %v4099, %v4101
      %v4116 = vsel %vm1167, %v4103, %v4105
      %v4117 = vsel %vm1167, %v4105, %v4107
      %v4118 = vsel %vm1167, %v4109, %v4111
      %v4119 = vsel %vm1167, %v4111, %v4113
      %v4126 = vsel %vm622, %v4114, 0.0
      %v4127 = vsel %vm623, %v4115, 0.0
      %v4128 = vsel %vm622, %v4116, 0.0
      %v4129 = vsel %vm623, %v4117, 0.0
      %v4130 = vsel %vm622, %v4118, 0.0
      %v4131 = vsel %vm623, %v4119, 0.0
      %s4132 = scalar_lea.vmem %s4, 32
      %v4133 = vld [vmem:[%s4132] sm:$0xf]
      %v4135 = vsel %vm3247, %v4133, 0
      %v4138 = vsel %vm1329, %v4130, 0
      %v4141 = vsel %vm1329, %v4131, 0
      %4143 = vmatprep.subr.mxu0 %v4127
      %4144 = vmatpush1.msra.mxu0 %v4126
      %4145 = vmatprep.subr.mxu0 %v4129
      %4146 = vmatpush1.msra.mxu0 %v4128
      %4147 = vmatprep.subr.mxu0 %v4141
      %4148 = vmatpush1.msra.mxu0 %v4138
      %4149 = vmatprep.subr.mxu0 0.0
      %4150 = vmatpush1.msra.mxu0 0.0
      %4151 = vmatprep.subr.mxu0 0.0
      %4152 = vmatpush1.msra.mxu0 0.0
      %4153 = vmatprep.subr.mxu0 0.0
      %4154 = vmatpush1.msra.mxu0 0.0
      %4155 = vmatprep.subr.mxu0 0.0
      %4156 = vmatpush1.msra.mxu0 0.0
      %4157 = vmatprep.subr.mxu0 0.0
      %4158 = vmatpush1.msra.mxu0 0.0
      %4159 = vmatprep.subr.mxu0 0.0
      %4160 = vmatpush1.msra.mxu0 0.0
      %4161 = vmatprep.subr.mxu0 0.0
      %4162 = vmatpush1.msra.mxu0 0.0
      %4163 = vmatprep.subr.mxu0 0.0
      %4164 = vmatpush1.msra.mxu0 0.0
      %4165 = vmatprep.subr.mxu0 0.0
      %4166 = vmatpush1.msra.mxu0 0.0
      %4167 = vmatprep.subr.mxu0 0.0
      %4168 = vmatpush1.msra.mxu0 0.0
      %4169 = vmatprep.subr.mxu0 0.0
      %4170 = vmatpush1.msra.mxu0 0.0
      %4171 = vmatprep.subr.mxu0 0.0
      %4172 = vmatpush1.msra.mxu0 0.0
      %4173 = vmatprep.subr.mxu0 0.0
      %4174 = vmatpush1.msra.mxu0 0.0
      %4175 = vmatprep.subr.mxu0 0.0
      %4176 = vmatpush1.msra.mxu0 0.0
      %4177 = vmatprep.subr.mxu0 0.0
      %4178 = vmatpush1.msra.mxu0 0.0
      %4179 = vmatprep.subr.mxu0 0.0
      %4180 = vmatpush1.msra.mxu0 0.0
      %4181 = vmatprep.subr.mxu0 0.0
      %4182 = vmatpush1.msra.mxu0 0.0
      %4183 = vmatprep.subr.mxu0 0.0
      %4184 = vmatpush1.msra.mxu0 0.0
      %4185 = vmatprep.subr.mxu0 0.0
      %4186 = vmatpush1.msra.mxu0 0.0
      %4187 = vmatprep.subr.mxu0 0.0
      %4188 = vmatpush1.msra.mxu0 0.0
      %4189 = vmatprep.subr.mxu0 0.0
      %4190 = vmatpush1.msra.mxu0 0.0
      %4191 = vmatprep.subr.mxu0 0.0
      %4192 = vmatpush1.msra.mxu0 0.0
      %4193 = vmatprep.subr.mxu0 0.0
      %4194 = vmatpush1.msra.mxu0 0.0
      %4195 = vmatprep.subr.mxu0 0.0
      %4196 = vmatpush1.msra.mxu0 0.0
      %4197 = vmatprep.subr.mxu0 0.0
      %4198 = vmatpush1.msra.mxu0 0.0
      %4199 = vmatprep.subr.mxu0 0.0
      %4200 = vmatpush1.msra.mxu0 0.0
      %4201 = vmatprep.subr.mxu0 0.0
      %4202 = vmatpush1.msra.mxu0 0.0
      %4203 = vmatprep.subr.mxu0 0.0
      %4204 = vmatpush1.msra.mxu0 0.0
      %4205 = vmatprep.subr.mxu0 0.0
      %4206 = vmatpush1.msra.mxu0 0.0
      %4207 = vmatprep.mubr.f32.mxu0 0.0
      %4208 = vmatmul.mubr.f32.gmra.mrb[0].mxu0 %v4135
      %v4209 = vpop.f32.mrb[0].mxu0
      %v4210 = vadd.f32 0.0, %v4209
      %v4211 = vpop.f32.mrb[0].mxu0
      %v4212 = vadd.f32 0.0, %v4211
      %4213 = vdwg.mxu0
      %v4214 = vadd.f32 %v4094, %v4210
      %v4215 = vadd.f32 %v4095, %v4212
      %v4216 = vld [vmem:[%s9] sm:$0xf]
      %4218 = vset.pattern.permute.xlu0 0
      %4219 = vperm.xlu0 %4218, %v4216
      %v4220 = vpop.permute.xlu0 %4219
      %v4222 = vadd.f32 %v4214, %v4220
      %v4223 = vadd.f32 %v4215, %v4220
      %vm4224 = vcmp.ge.f32.partialorder %v4222, 0.0
      %vm4225 = vcmp.ge.f32.partialorder %v4223, 0.0
      %v4226 = vmul.f32 %v4222, 0.2
      %v4227 = vmul.f32 %v4223, 0.2
      %v4228 = vsel %vm4224, %v4222, %v4226
      %v4229 = vsel %vm4225, %v4223, %v4227
      %v4232 = vrot.slane %v4228, 4
      %v4233 = vrot.slane %v4229, 4
      %4236 = vst [vmem:[#allocation2 + $0x48] sm:$0xf0] %v4232
      %4237 = vst [vmem:[#allocation2 + $0x50] sm:$0xf0] %v4233
      %v4238 = vld [vmem:[#allocation2] sm:$0xff]
      %v4239 = vld [vmem:[#allocation2 + $0x8] sm:$0xff]
      %v4240 = vld [vmem:[#allocation2 + $0x10] sm:$0xff]
      %v4241 = vld [vmem:[#allocation2 + $0x20] sm:$0xff]
      %v4242 = vld [vmem:[#allocation2 + $0x28] sm:$0xff]
      %v4243 = vld [vmem:[#allocation2 + $0x30] sm:$0xff]
      %v4244 = vld [vmem:[#allocation2 + $0x40] sm:$0xff]
      %v4245 = vld [vmem:[#allocation2 + $0x48] sm:$0xff]
      %v4246 = vld [vmem:[#allocation2 + $0x50] sm:$0xff]
      %4256 = vrot.lane.b32.xlu0 %v4238, 17
      %v4257 = vpop.permute.xlu0 %4256
      %4258 = vrot.lane.b32.xlu0 %v4239, 17
      %v4259 = vpop.permute.xlu0 %4258
      %4260 = vrot.lane.b32.xlu0 %v4240, 17
      %v4261 = vpop.permute.xlu0 %4260
      %4262 = vrot.lane.b32.xlu0 %v4241, 17
      %v4263 = vpop.permute.xlu0 %4262
      %4264 = vrot.lane.b32.xlu0 %v4242, 17
      %v4265 = vpop.permute.xlu0 %4264
      %4266 = vrot.lane.b32.xlu0 %v4243, 17
      %v4267 = vpop.permute.xlu0 %4266
      %4268 = vrot.lane.b32.xlu0 %v4244, 17
      %v4269 = vpop.permute.xlu0 %4268
      %4270 = vrot.lane.b32.xlu0 %v4245, 17
      %v4271 = vpop.permute.xlu0 %4270
      %4272 = vrot.lane.b32.xlu0 %v4246, 17
      %v4273 = vpop.permute.xlu0 %4272
      %v4274 = vsel %vm450, %v4257, %v4259
      %v4275 = vsel %vm450, %v4259, %v4261
      %v4276 = vsel %vm450, %v4263, %v4265
      %v4277 = vsel %vm450, %v4265, %v4267
      %v4278 = vsel %vm450, %v4269, %v4271
      %v4279 = vsel %vm450, %v4271, %v4273
      %v4286 = vsel %vm439, %v4274, 0.0
      %v4287 = vsel %vm440, %v4275, 0.0
      %v4288 = vsel %vm439, %v4276, 0.0
      %v4289 = vsel %vm440, %v4277, 0.0
      %v4290 = vsel %vm439, %v4278, 0.0
      %v4291 = vsel %vm440, %v4279, 0.0
      %v4292 = vld [vmem:[%s5] sm:$0xff]
      %s4293 = scalar_lea.vmem %s5, 8
      %v4294 = vld [vmem:[%s4293] sm:$0xff]
      %4295 = vrot.lane.b32.xlu0 %v4238, 16
      %v4296 = vpop.permute.xlu0 %4295
      %4297 = vrot.lane.b32.xlu0 %v4239, 16
      %v4298 = vpop.permute.xlu0 %4297
      %4299 = vrot.lane.b32.xlu0 %v4240, 16
      %v4300 = vpop.permute.xlu0 %4299
      %4301 = vrot.lane.b32.xlu0 %v4241, 16
      %v4302 = vpop.permute.xlu0 %4301
      %4303 = vrot.lane.b32.xlu0 %v4242, 16
      %v4304 = vpop.permute.xlu0 %4303
      %4305 = vrot.lane.b32.xlu0 %v4243, 16
      %v4306 = vpop.permute.xlu0 %4305
      %4307 = vrot.lane.b32.xlu0 %v4244, 16
      %v4308 = vpop.permute.xlu0 %4307
      %4309 = vrot.lane.b32.xlu0 %v4245, 16
      %v4310 = vpop.permute.xlu0 %4309
      %4311 = vrot.lane.b32.xlu0 %v4246, 16
      %v4312 = vpop.permute.xlu0 %4311
      %v4313 = vsel %vm466, %v4296, %v4298
      %v4314 = vsel %vm466, %v4298, %v4300
      %v4315 = vsel %vm466, %v4302, %v4304
      %v4316 = vsel %vm466, %v4304, %v4306
      %v4317 = vsel %vm466, %v4308, %v4310
      %v4318 = vsel %vm466, %v4310, %v4312
      %vm4325 = vcmask 195584
      %v4327 = vsel %vm4325, %v4294, 0
      %4329 = vmatprep.subr.mxu0 %v4314
      %4330 = vmatpush1.msra.mxu0 %v4313
      %4331 = vmatprep.subr.mxu0 %v4316
      %4332 = vmatpush1.msra.mxu0 %v4315
      %4333 = vmatprep.subr.mxu0 %v4318
      %4334 = vmatpush1.msra.mxu0 %v4317
      %4335 = vmatprep.subr.mxu0 0.0
      %4336 = vmatpush1.msra.mxu0 0.0
      %4337 = vmatprep.subr.mxu0 0.0
      %4338 = vmatpush1.msra.mxu0 0.0
      %4339 = vmatprep.subr.mxu0 0.0
      %4340 = vmatpush1.msra.mxu0 0.0
      %4341 = vmatprep.subr.mxu0 0.0
      %4342 = vmatpush1.msra.mxu0 0.0
      %4343 = vmatprep.subr.mxu0 0.0
      %4344 = vmatpush1.msra.mxu0 0.0
      %4345 = vmatprep.subr.mxu0 0.0
      %4346 = vmatpush1.msra.mxu0 0.0
      %4347 = vmatprep.subr.mxu0 0.0
      %4348 = vmatpush1.msra.mxu0 0.0
      %4349 = vmatprep.subr.mxu0 0.0
      %4350 = vmatpush1.msra.mxu0 0.0
      %4351 = vmatprep.subr.mxu0 0.0
      %4352 = vmatpush1.msra.mxu0 0.0
      %4353 = vmatprep.subr.mxu0 0.0
      %4354 = vmatpush1.msra.mxu0 0.0
      %4355 = vmatprep.subr.mxu0 0.0
      %4356 = vmatpush1.msra.mxu0 0.0
      %4357 = vmatprep.subr.mxu0 0.0
      %4358 = vmatpush1.msra.mxu0 0.0
      %4359 = vmatprep.subr.mxu0 0.0
      %4360 = vmatpush1.msra.mxu0 0.0
      %4361 = vmatprep.subr.mxu0 0.0
      %4362 = vmatpush1.msra.mxu0 0.0
      %4363 = vmatprep.subr.mxu0 0.0
      %4364 = vmatpush1.msra.mxu0 0.0
      %4365 = vmatprep.subr.mxu0 0.0
      %4366 = vmatpush1.msra.mxu0 0.0
      %4367 = vmatprep.subr.mxu0 0.0
      %4368 = vmatpush1.msra.mxu0 0.0
      %4369 = vmatprep.subr.mxu0 0.0
      %4370 = vmatpush1.msra.mxu0 0.0
      %4371 = vmatprep.subr.mxu0 0.0
      %4372 = vmatpush1.msra.mxu0 0.0
      %4373 = vmatprep.subr.mxu0 0.0
      %4374 = vmatpush1.msra.mxu0 0.0
      %4375 = vmatprep.subr.mxu0 0.0
      %4376 = vmatpush1.msra.mxu0 0.0
      %4377 = vmatprep.subr.mxu0 0.0
      %4378 = vmatpush1.msra.mxu0 0.0
      %4379 = vmatprep.subr.mxu0 0.0
      %4380 = vmatpush1.msra.mxu0 0.0
      %4381 = vmatprep.subr.mxu0 0.0
      %4382 = vmatpush1.msra.mxu0 0.0
      %4383 = vmatprep.subr.mxu0 0.0
      %4384 = vmatpush1.msra.mxu0 0.0
      %4385 = vmatprep.subr.mxu0 0.0
      %4386 = vmatpush1.msra.mxu0 0.0
      %4387 = vmatprep.subr.mxu0 0.0
      %4388 = vmatpush1.msra.mxu0 0.0
      %4389 = vmatprep.subr.mxu0 0.0
      %4390 = vmatpush1.msra.mxu0 0.0
      %4391 = vmatprep.subr.mxu0 0.0
      %4392 = vmatpush1.msra.mxu0 0.0
      %4393 = vmatprep.mubr.f32.mxu0 0.0
      %4394 = vmatmul.mubr.f32.gmra.mrb[0].mxu0 %v4327
      %v4395 = vpop.f32.mrb[0].mxu0
      %v4396 = vadd.f32 0.0, %v4395
      %v4397 = vpop.f32.mrb[0].mxu0
      %v4398 = vadd.f32 0.0, %v4397
      %4399 = vdwg.mxu0
      %v4401 = vsel %vm4325, %v4292, 0
      %4403 = vmatprep.subr.mxu0 %v4287
      %4404 = vmatpush1.msra.mxu0 %v4286
      %4405 = vmatprep.subr.mxu0 %v4289
      %4406 = vmatpush1.msra.mxu0 %v4288
      %4407 = vmatprep.subr.mxu0 %v4291
      %4408 = vmatpush1.msra.mxu0 %v4290
      %4409 = vmatprep.subr.mxu0 0.0
      %4410 = vmatpush1.msra.mxu0 0.0
      %4411 = vmatprep.subr.mxu0 0.0
      %4412 = vmatpush1.msra.mxu0 0.0
      %4413 = vmatprep.subr.mxu0 0.0
      %4414 = vmatpush1.msra.mxu0 0.0
      %4415 = vmatprep.subr.mxu0 0.0
      %4416 = vmatpush1.msra.mxu0 0.0
      %4417 = vmatprep.subr.mxu0 0.0
      %4418 = vmatpush1.msra.mxu0 0.0
      %4419 = vmatprep.subr.mxu0 0.0
      %4420 = vmatpush1.msra.mxu0 0.0
      %4421 = vmatprep.subr.mxu0 0.0
      %4422 = vmatpush1.msra.mxu0 0.0
      %4423 = vmatprep.subr.mxu0 0.0
      %4424 = vmatpush1.msra.mxu0 0.0
      %4425 = vmatprep.subr.mxu0 0.0
      %4426 = vmatpush1.msra.mxu0 0.0
      %4427 = vmatprep.subr.mxu0 0.0
      %4428 = vmatpush1.msra.mxu0 0.0
      %4429 = vmatprep.subr.mxu0 0.0
      %4430 = vmatpush1.msra.mxu0 0.0
      %4431 = vmatprep.subr.mxu0 0.0
      %4432 = vmatpush1.msra.mxu0 0.0
      %4433 = vmatprep.subr.mxu0 0.0
      %4434 = vmatpush1.msra.mxu0 0.0
      %4435 = vmatprep.subr.mxu0 0.0
      %4436 = vmatpush1.msra.mxu0 0.0
      %4437 = vmatprep.subr.mxu0 0.0
      %4438 = vmatpush1.msra.mxu0 0.0
      %4439 = vmatprep.subr.mxu0 0.0
      %4440 = vmatpush1.msra.mxu0 0.0
      %4441 = vmatprep.subr.mxu0 0.0
      %4442 = vmatpush1.msra.mxu0 0.0
      %4443 = vmatprep.subr.mxu0 0.0
      %4444 = vmatpush1.msra.mxu0 0.0
      %4445 = vmatprep.subr.mxu0 0.0
      %4446 = vmatpush1.msra.mxu0 0.0
      %4447 = vmatprep.subr.mxu0 0.0
      %4448 = vmatpush1.msra.mxu0 0.0
      %4449 = vmatprep.subr.mxu0 0.0
      %4450 = vmatpush1.msra.mxu0 0.0
      %4451 = vmatprep.subr.mxu0 0.0
      %4452 = vmatpush1.msra.mxu0 0.0
      %4453 = vmatprep.subr.mxu0 0.0
      %4454 = vmatpush1.msra.mxu0 0.0
      %4455 = vmatprep.subr.mxu0 0.0
      %4456 = vmatpush1.msra.mxu0 0.0
      %4457 = vmatprep.subr.mxu0 0.0
      %4458 = vmatpush1.msra.mxu0 0.0
      %4459 = vmatprep.subr.mxu0 0.0
      %4460 = vmatpush1.msra.mxu0 0.0
      %4461 = vmatprep.subr.mxu0 0.0
      %4462 = vmatpush1.msra.mxu0 0.0
      %4463 = vmatprep.subr.mxu0 0.0
      %4464 = vmatpush1.msra.mxu0 0.0
      %4465 = vmatprep.subr.mxu0 0.0
      %4466 = vmatpush1.msra.mxu0 0.0
      %4467 = vmatprep.mubr.f32.mxu0 0.0
      %4468 = vmatmul.mubr.f32.gmra.mrb[0].mxu0 %v4401
      %v4469 = vpop.f32.mrb[0].mxu0
      %v4470 = vadd.f32 %v4396, %v4469
      %v4471 = vpop.f32.mrb[0].mxu0
      %v4472 = vadd.f32 %v4398, %v4471
      %4473 = vdwg.mxu0
      %4474 = vrot.lane.b32.xlu0 %v4238, 15
      %v4475 = vpop.permute.xlu0 %4474
      %4476 = vrot.lane.b32.xlu0 %v4239, 15
      %v4477 = vpop.permute.xlu0 %4476
      %4478 = vrot.lane.b32.xlu0 %v4240, 15
      %v4479 = vpop.permute.xlu0 %4478
      %4480 = vrot.lane.b32.xlu0 %v4241, 15
      %v4481 = vpop.permute.xlu0 %4480
      %4482 = vrot.lane.b32.xlu0 %v4242, 15
      %v4483 = vpop.permute.xlu0 %4482
      %4484 = vrot.lane.b32.xlu0 %v4243, 15
      %v4485 = vpop.permute.xlu0 %4484
      %4486 = vrot.lane.b32.xlu0 %v4244, 15
      %v4487 = vpop.permute.xlu0 %4486
      %4488 = vrot.lane.b32.xlu0 %v4245, 15
      %v4489 = vpop.permute.xlu0 %4488
      %4490 = vrot.lane.b32.xlu0 %v4246, 15
      %v4491 = vpop.permute.xlu0 %4490
      %v4492 = vsel %vm630, %v4475, %v4477
      %v4493 = vsel %vm630, %v4477, %v4479
      %v4494 = vsel %vm630, %v4481, %v4483
      %v4495 = vsel %vm630, %v4483, %v4485
      %v4496 = vsel %vm630, %v4487, %v4489
      %v4497 = vsel %vm630, %v4489, %v4491
      %v4504 = vsel %vm622, %v4492, 0.0
      %v4505 = vsel %vm623, %v4493, 0.0
      %v4506 = vsel %vm622, %v4494, 0.0
      %v4507 = vsel %vm623, %v4495, 0.0
      %v4508 = vsel %vm622, %v4496, 0.0
      %v4509 = vsel %vm623, %v4497, 0.0
      %s4510 = scalar_lea.vmem %s5, 16
      %v4511 = vld [vmem:[%s4510] sm:$0xff]
      %v4513 = vsel %vm4325, %v4511, 0
      %4515 = vmatprep.subr.mxu0 %v4505
      %4516 = vmatpush1.msra.mxu0 %v4504
      %4517 = vmatprep.subr.mxu0 %v4507
      %4518 = vmatpush1.msra.mxu0 %v4506
      %4519 = vmatprep.subr.mxu0 %v4509
      %4520 = vmatpush1.msra.mxu0 %v4508
      %4521 = vmatprep.subr.mxu0 0.0
      %4522 = vmatpush1.msra.mxu0 0.0
      %4523 = vmatprep.subr.mxu0 0.0
      %4524 = vmatpush1.msra.mxu0 0.0
      %4525 = vmatprep.subr.mxu0 0.0
      %4526 = vmatpush1.msra.mxu0 0.0
      %4527 = vmatprep.subr.mxu0 0.0
      %4528 = vmatpush1.msra.mxu0 0.0
      %4529 = vmatprep.subr.mxu0 0.0
      %4530 = vmatpush1.msra.mxu0 0.0
      %4531 = vmatprep.subr.mxu0 0.0
      %4532 = vmatpush1.msra.mxu0 0.0
      %4533 = vmatprep.subr.mxu0 0.0
      %4534 = vmatpush1.msra.mxu0 0.0
      %4535 = vmatprep.subr.mxu0 0.0
      %4536 = vmatpush1.msra.mxu0 0.0
      %4537 = vmatprep.subr.mxu0 0.0
      %4538 = vmatpush1.msra.mxu0 0.0
      %4539 = vmatprep.subr.mxu0 0.0
      %4540 = vmatpush1.msra.mxu0 0.0
      %4541 = vmatprep.subr.mxu0 0.0
      %4542 = vmatpush1.msra.mxu0 0.0
      %4543 = vmatprep.subr.mxu0 0.0
      %4544 = vmatpush1.msra.mxu0 0.0
      %4545 = vmatprep.subr.mxu0 0.0
      %4546 = vmatpush1.msra.mxu0 0.0
      %4547 = vmatprep.subr.mxu0 0.0
      %4548 = vmatpush1.msra.mxu0 0.0
      %4549 = vmatprep.subr.mxu0 0.0
      %4550 = vmatpush1.msra.mxu0 0.0
      %4551 = vmatprep.subr.mxu0 0.0
      %4552 = vmatpush1.msra.mxu0 0.0
      %4553 = vmatprep.subr.mxu0 0.0
      %4554 = vmatpush1.msra.mxu0 0.0
      %4555 = vmatprep.subr.mxu0 0.0
      %4556 = vmatpush1.msra.mxu0 0.0
      %4557 = vmatprep.subr.mxu0 0.0
      %4558 = vmatpush1.msra.mxu0 0.0
      %4559 = vmatprep.subr.mxu0 0.0
      %4560 = vmatpush1.msra.mxu0 0.0
      %4561 = vmatprep.subr.mxu0 0.0
      %4562 = vmatpush1.msra.mxu0 0.0
      %4563 = vmatprep.subr.mxu0 0.0
      %4564 = vmatpush1.msra.mxu0 0.0
      %4565 = vmatprep.subr.mxu0 0.0
      %4566 = vmatpush1.msra.mxu0 0.0
      %4567 = vmatprep.subr.mxu0 0.0
      %4568 = vmatpush1.msra.mxu0 0.0
      %4569 = vmatprep.subr.mxu0 0.0
      %4570 = vmatpush1.msra.mxu0 0.0
      %4571 = vmatprep.subr.mxu0 0.0
      %4572 = vmatpush1.msra.mxu0 0.0
      %4573 = vmatprep.subr.mxu0 0.0
      %4574 = vmatpush1.msra.mxu0 0.0
      %4575 = vmatprep.subr.mxu0 0.0
      %4576 = vmatpush1.msra.mxu0 0.0
      %4577 = vmatprep.subr.mxu0 0.0
      %4578 = vmatpush1.msra.mxu0 0.0
      %4579 = vmatprep.mubr.f32.mxu0 0.0
      %4580 = vmatmul.mubr.f32.gmra.mrb[0].mxu0 %v4513
      %v4581 = vpop.f32.mrb[0].mxu0
      %v4582 = vadd.f32 0.0, %v4581
      %v4583 = vpop.f32.mrb[0].mxu0
      %v4584 = vadd.f32 0.0, %v4583
      %4585 = vdwg.mxu0
      %v4586 = vadd.f32 %v4470, %v4582
      %v4587 = vadd.f32 %v4472, %v4584
      %4588 = vrot.lane.b32.xlu0 %v4238, 1
      %v4589 = vpop.permute.xlu0 %4588
      %4590 = vrot.lane.b32.xlu0 %v4239, 1
      %v4591 = vpop.permute.xlu0 %4590
      %4592 = vrot.lane.b32.xlu0 %v4240, 1
      %v4593 = vpop.permute.xlu0 %4592
      %4594 = vrot.lane.b32.xlu0 %v4241, 1
      %v4595 = vpop.permute.xlu0 %4594
      %4596 = vrot.lane.b32.xlu0 %v4242, 1
      %v4597 = vpop.permute.xlu0 %4596
      %4598 = vrot.lane.b32.xlu0 %v4243, 1
      %v4599 = vpop.permute.xlu0 %4598
      %4600 = vrot.lane.b32.xlu0 %v4244, 1
      %v4601 = vpop.permute.xlu0 %4600
      %4602 = vrot.lane.b32.xlu0 %v4245, 1
      %v4603 = vpop.permute.xlu0 %4602
      %4604 = vrot.lane.b32.xlu0 %v4246, 1
      %v4605 = vpop.permute.xlu0 %4604
      %v4606 = vsel %vm721, %v4589, %v4591
      %v4607 = vsel %vm721, %v4591, %v4593
      %v4608 = vsel %vm721, %v4595, %v4597
      %v4609 = vsel %vm721, %v4597, %v4599
      %v4610 = vsel %vm721, %v4601, %v4603
      %v4611 = vsel %vm721, %v4603, %v4605
      %v4618 = vsel %vm439, %v4606, 0.0
      %v4619 = vsel %vm440, %v4607, 0.0
      %v4620 = vsel %vm439, %v4608, 0.0
      %v4621 = vsel %vm440, %v4609, 0.0
      %v4622 = vsel %vm439, %v4610, 0.0
      %v4623 = vsel %vm440, %v4611, 0.0
      %s4624 = scalar_lea.vmem %s5, 24
      %v4625 = vld [vmem:[%s4624] sm:$0xff]
      %v4627 = vsel %vm4325, %v4625, 0
      %4629 = vmatprep.subr.mxu0 %v4619
      %4630 = vmatpush1.msra.mxu0 %v4618
      %4631 = vmatprep.subr.mxu0 %v4621
      %4632 = vmatpush1.msra.mxu0 %v4620
      %4633 = vmatprep.subr.mxu0 %v4623
      %4634 = vmatpush1.msra.mxu0 %v4622
      %4635 = vmatprep.subr.mxu0 0.0
      %4636 = vmatpush1.msra.mxu0 0.0
      %4637 = vmatprep.subr.mxu0 0.0
      %4638 = vmatpush1.msra.mxu0 0.0
      %4639 = vmatprep.subr.mxu0 0.0
      %4640 = vmatpush1.msra.mxu0 0.0
      %4641 = vmatprep.subr.mxu0 0.0
      %4642 = vmatpush1.msra.mxu0 0.0
      %4643 = vmatprep.subr.mxu0 0.0
      %4644 = vmatpush1.msra.mxu0 0.0
      %4645 = vmatprep.subr.mxu0 0.0
      %4646 = vmatpush1.msra.mxu0 0.0
      %4647 = vmatprep.subr.mxu0 0.0
      %4648 = vmatpush1.msra.mxu0 0.0
      %4649 = vmatprep.subr.mxu0 0.0
      %4650 = vmatpush1.msra.mxu0 0.0
      %4651 = vmatprep.subr.mxu0 0.0
      %4652 = vmatpush1.msra.mxu0 0.0
      %4653 = vmatprep.subr.mxu0 0.0
      %4654 = vmatpush1.msra.mxu0 0.0
      %4655 = vmatprep.subr.mxu0 0.0
      %4656 = vmatpush1.msra.mxu0 0.0
      %4657 = vmatprep.subr.mxu0 0.0
      %4658 = vmatpush1.msra.mxu0 0.0
      %4659 = vmatprep.subr.mxu0 0.0
      %4660 = vmatpush1.msra.mxu0 0.0
      %4661 = vmatprep.subr.mxu0 0.0
      %4662 = vmatpush1.msra.mxu0 0.0
      %4663 = vmatprep.subr.mxu0 0.0
      %4664 = vmatpush1.msra.mxu0 0.0
      %4665 = vmatprep.subr.mxu0 0.0
      %4666 = vmatpush1.msra.mxu0 0.0
      %4667 = vmatprep.subr.mxu0 0.0
      %4668 = vmatpush1.msra.mxu0 0.0
      %4669 = vmatprep.subr.mxu0 0.0
      %4670 = vmatpush1.msra.mxu0 0.0
      %4671 = vmatprep.subr.mxu0 0.0
      %4672 = vmatpush1.msra.mxu0 0.0
      %4673 = vmatprep.subr.mxu0 0.0
      %4674 = vmatpush1.msra.mxu0 0.0
      %4675 = vmatprep.subr.mxu0 0.0
      %4676 = vmatpush1.msra.mxu0 0.0
      %4677 = vmatprep.subr.mxu0 0.0
      %4678 = vmatpush1.msra.mxu0 0.0
      %4679 = vmatprep.subr.mxu0 0.0
      %4680 = vmatpush1.msra.mxu0 0.0
      %4681 = vmatprep.subr.mxu0 0.0
      %4682 = vmatpush1.msra.mxu0 0.0
      %4683 = vmatprep.subr.mxu0 0.0
      %4684 = vmatpush1.msra.mxu0 0.0
      %4685 = vmatprep.subr.mxu0 0.0
      %4686 = vmatpush1.msra.mxu0 0.0
      %4687 = vmatprep.subr.mxu0 0.0
      %4688 = vmatpush1.msra.mxu0 0.0
      %4689 = vmatprep.subr.mxu0 0.0
      %4690 = vmatpush1.msra.mxu0 0.0
      %4691 = vmatprep.subr.mxu0 0.0
      %4692 = vmatpush1.msra.mxu0 0.0
      %4693 = vmatprep.mubr.f32.mxu0 0.0
      %4694 = vmatmul.mubr.f32.gmra.mrb[0].mxu0 %v4627
      %v4695 = vpop.f32.mrb[0].mxu0
      %v4696 = vadd.f32 0.0, %v4695
      %v4697 = vpop.f32.mrb[0].mxu0
      %v4698 = vadd.f32 0.0, %v4697
      %4699 = vdwg.mxu0
      %v4700 = vadd.f32 %v4586, %v4696
      %v4701 = vadd.f32 %v4587, %v4698
      %s4702 = scalar_lea.vmem %s5, 32
      %v4703 = vld [vmem:[%s4702] sm:$0xff]
      %v4705 = vsel %vm4325, %v4703, 0
      %4707 = vmatprep.subr.mxu0 %v4240
      %4708 = vmatpush1.msra.mxu0 %v4239
      %4709 = vmatprep.subr.mxu0 %v4243
      %4710 = vmatpush1.msra.mxu0 %v4242
      %4711 = vmatprep.subr.mxu0 %v4246
      %4712 = vmatpush1.msra.mxu0 %v4245
      %4713 = vmatprep.subr.mxu0 0.0
      %4714 = vmatpush1.msra.mxu0 0.0
      %4715 = vmatprep.subr.mxu0 0.0
      %4716 = vmatpush1.msra.mxu0 0.0
      %4717 = vmatprep.subr.mxu0 0.0
      %4718 = vmatpush1.msra.mxu0 0.0
      %4719 = vmatprep.subr.mxu0 0.0
      %4720 = vmatpush1.msra.mxu0 0.0
      %4721 = vmatprep.subr.mxu0 0.0
      %4722 = vmatpush1.msra.mxu0 0.0
      %4723 = vmatprep.subr.mxu0 0.0
      %4724 = vmatpush1.msra.mxu0 0.0
      %4725 = vmatprep.subr.mxu0 0.0
      %4726 = vmatpush1.msra.mxu0 0.0
      %4727 = vmatprep.subr.mxu0 0.0
      %4728 = vmatpush1.msra.mxu0 0.0
      %4729 = vmatprep.subr.mxu0 0.0
      %4730 = vmatpush1.msra.mxu0 0.0
      %4731 = vmatprep.subr.mxu0 0.0
      %4732 = vmatpush1.msra.mxu0 0.0
      %4733 = vmatprep.subr.mxu0 0.0
      %4734 = vmatpush1.msra.mxu0 0.0
      %4735 = vmatprep.subr.mxu0 0.0
      %4736 = vmatpush1.msra.mxu0 0.0
      %4737 = vmatprep.subr.mxu0 0.0
      %4738 = vmatpush1.msra.mxu0 0.0
      %4739 = vmatprep.subr.mxu0 0.0
      %4740 = vmatpush1.msra.mxu0 0.0
      %4741 = vmatprep.subr.mxu0 0.0
      %4742 = vmatpush1.msra.mxu0 0.0
      %4743 = vmatprep.subr.mxu0 0.0
      %4744 = vmatpush1.msra.mxu0 0.0
      %4745 = vmatprep.subr.mxu0 0.0
      %4746 = vmatpush1.msra.mxu0 0.0
      %4747 = vmatprep.subr.mxu0 0.0
      %4748 = vmatpush1.msra.mxu0 0.0
      %4749 = vmatprep.subr.mxu0 0.0
      %4750 = vmatpush1.msra.mxu0 0.0
      %4751 = vmatprep.subr.mxu0 0.0
      %4752 = vmatpush1.msra.mxu0 0.0
      %4753 = vmatprep.subr.mxu0 0.0
      %4754 = vmatpush1.msra.mxu0 0.0
      %4755 = vmatprep.subr.mxu0 0.0
      %4756 = vmatpush1.msra.mxu0 0.0
      %4757 = vmatprep.subr.mxu0 0.0
      %4758 = vmatpush1.msra.mxu0 0.0
      %4759 = vmatprep.subr.mxu0 0.0
      %4760 = vmatpush1.msra.mxu0 0.0
      %4761 = vmatprep.subr.mxu0 0.0
      %4762 = vmatpush1.msra.mxu0 0.0
      %4763 = vmatprep.subr.mxu0 0.0
      %4764 = vmatpush1.msra.mxu0 0.0
      %4765 = vmatprep.subr.mxu0 0.0
      %4766 = vmatpush1.msra.mxu0 0.0
      %4767 = vmatprep.subr.mxu0 0.0
      %4768 = vmatpush1.msra.mxu0 0.0
      %4769 = vmatprep.subr.mxu0 0.0
      %4770 = vmatpush1.msra.mxu0 0.0
      %4771 = vmatprep.mubr.f32.mxu0 0.0
      %4772 = vmatmul.mubr.f32.gmra.mrb[0].mxu0 %v4705
      %v4773 = vpop.f32.mrb[0].mxu0
      %v4774 = vadd.f32 0.0, %v4773
      %v4775 = vpop.f32.mrb[0].mxu0
      %v4776 = vadd.f32 0.0, %v4775
      %4777 = vdwg.mxu0
      %v4778 = vadd.f32 %v4700, %v4774
      %v4779 = vadd.f32 %v4701, %v4776
      %v4780 = vld [vmem:[#allocation2 + $0x8] sm:$0xff]
      %v4781 = vld [vmem:[#allocation2 + $0x10] sm:$0xff]
      %v4782 = vld [vmem:[#allocation2 + $0x18] sm:$0xff]
      %v4783 = vld [vmem:[#allocation2 + $0x28] sm:$0xff]
      %v4784 = vld [vmem:[#allocation2 + $0x30] sm:$0xff]
      %v4785 = vld [vmem:[#allocation2 + $0x38] sm:$0xff]
      %v4786 = vld [vmem:[#allocation2 + $0x48] sm:$0xff]
      %v4787 = vld [vmem:[#allocation2 + $0x50] sm:$0xff]
      %v4788 = vld [vmem:[#allocation2 + $0x58] sm:$0xff]
      %4798 = vrot.lane.b32.xlu0 %v4780, 127
      %v4799 = vpop.permute.xlu0 %4798
      %4800 = vrot.lane.b32.xlu0 %v4781, 127
      %v4801 = vpop.permute.xlu0 %4800
      %4802 = vrot.lane.b32.xlu0 %v4782, 127
      %v4803 = vpop.permute.xlu0 %4802
      %4804 = vrot.lane.b32.xlu0 %v4783, 127
      %v4805 = vpop.permute.xlu0 %4804
      %4806 = vrot.lane.b32.xlu0 %v4784, 127
      %v4807 = vpop.permute.xlu0 %4806
      %4808 = vrot.lane.b32.xlu0 %v4785, 127
      %v4809 = vpop.permute.xlu0 %4808
      %4810 = vrot.lane.b32.xlu0 %v4786, 127
      %v4811 = vpop.permute.xlu0 %4810
      %4812 = vrot.lane.b32.xlu0 %v4787, 127
      %v4813 = vpop.permute.xlu0 %4812
      %4814 = vrot.lane.b32.xlu0 %v4788, 127
      %v4815 = vpop.permute.xlu0 %4814
      %v4816 = vsel %vm896, %v4799, %v4801
      %v4817 = vsel %vm896, %v4801, %v4803
      %v4818 = vsel %vm896, %v4805, %v4807
      %v4819 = vsel %vm896, %v4807, %v4809
      %v4820 = vsel %vm896, %v4811, %v4813
      %v4821 = vsel %vm896, %v4813, %v4815
      %v4828 = vsel %vm622, %v4816, 0.0
      %v4829 = vsel %vm623, %v4817, 0.0
      %v4830 = vsel %vm622, %v4818, 0.0
      %v4831 = vsel %vm623, %v4819, 0.0
      %v4832 = vsel %vm622, %v4820, 0.0
      %v4833 = vsel %vm623, %v4821, 0.0
      %s4834 = scalar_lea.vmem %s5, 40
      %v4835 = vld [vmem:[%s4834] sm:$0xff]
      %v4837 = vsel %vm4325, %v4835, 0
      %4839 = vmatprep.subr.mxu0 %v4829
      %4840 = vmatpush1.msra.mxu0 %v4828
      %4841 = vmatprep.subr.mxu0 %v4831
      %4842 = vmatpush1.msra.mxu0 %v4830
      %4843 = vmatprep.subr.mxu0 %v4833
      %4844 = vmatpush1.msra.mxu0 %v4832
      %4845 = vmatprep.subr.mxu0 0.0
      %4846 = vmatpush1.msra.mxu0 0.0
      %4847 = vmatprep.subr.mxu0 0.0
      %4848 = vmatpush1.msra.mxu0 0.0
      %4849 = vmatprep.subr.mxu0 0.0
      %4850 = vmatpush1.msra.mxu0 0.0
      %4851 = vmatprep.subr.mxu0 0.0
      %4852 = vmatpush1.msra.mxu0 0.0
      %4853 = vmatprep.subr.mxu0 0.0
      %4854 = vmatpush1.msra.mxu0 0.0
      %4855 = vmatprep.subr.mxu0 0.0
      %4856 = vmatpush1.msra.mxu0 0.0
      %4857 = vmatprep.subr.mxu0 0.0
      %4858 = vmatpush1.msra.mxu0 0.0
      %4859 = vmatprep.subr.mxu0 0.0
      %4860 = vmatpush1.msra.mxu0 0.0
      %4861 = vmatprep.subr.mxu0 0.0
      %4862 = vmatpush1.msra.mxu0 0.0
      %4863 = vmatprep.subr.mxu0 0.0
      %4864 = vmatpush1.msra.mxu0 0.0
      %4865 = vmatprep.subr.mxu0 0.0
      %4866 = vmatpush1.msra.mxu0 0.0
      %4867 = vmatprep.subr.mxu0 0.0
      %4868 = vmatpush1.msra.mxu0 0.0
      %4869 = vmatprep.subr.mxu0 0.0
      %4870 = vmatpush1.msra.mxu0 0.0
      %4871 = vmatprep.subr.mxu0 0.0
      %4872 = vmatpush1.msra.mxu0 0.0
      %4873 = vmatprep.subr.mxu0 0.0
      %4874 = vmatpush1.msra.mxu0 0.0
      %4875 = vmatprep.subr.mxu0 0.0
      %4876 = vmatpush1.msra.mxu0 0.0
      %4877 = vmatprep.subr.mxu0 0.0
      %4878 = vmatpush1.msra.mxu0 0.0
      %4879 = vmatprep.subr.mxu0 0.0
      %4880 = vmatpush1.msra.mxu0 0.0
      %4881 = vmatprep.subr.mxu0 0.0
      %4882 = vmatpush1.msra.mxu0 0.0
      %4883 = vmatprep.subr.mxu0 0.0
      %4884 = vmatpush1.msra.mxu0 0.0
      %4885 = vmatprep.subr.mxu0 0.0
      %4886 = vmatpush1.msra.mxu0 0.0
      %4887 = vmatprep.subr.mxu0 0.0
      %4888 = vmatpush1.msra.mxu0 0.0
      %4889 = vmatprep.subr.mxu0 0.0
      %4890 = vmatpush1.msra.mxu0 0.0
      %4891 = vmatprep.subr.mxu0 0.0
      %4892 = vmatpush1.msra.mxu0 0.0
      %4893 = vmatprep.subr.mxu0 0.0
      %4894 = vmatpush1.msra.mxu0 0.0
      %4895 = vmatprep.subr.mxu0 0.0
      %4896 = vmatpush1.msra.mxu0 0.0
      %4897 = vmatprep.subr.mxu0 0.0
      %4898 = vmatpush1.msra.mxu0 0.0
      %4899 = vmatprep.subr.mxu0 0.0
      %4900 = vmatpush1.msra.mxu0 0.0
      %4901 = vmatprep.subr.mxu0 0.0
      %4902 = vmatpush1.msra.mxu0 0.0
      %4903 = vmatprep.mubr.f32.mxu0 0.0
      %4904 = vmatmul.mubr.f32.gmra.mrb[0].mxu0 %v4837
      %v4905 = vpop.f32.mrb[0].mxu0
      %v4906 = vadd.f32 0.0, %v4905
      %v4907 = vpop.f32.mrb[0].mxu0
      %v4908 = vadd.f32 0.0, %v4907
      %4909 = vdwg.mxu0
      %v4910 = vadd.f32 %v4778, %v4906
      %v4911 = vadd.f32 %v4779, %v4908
      %4912 = vrot.lane.b32.xlu0 %v4780, 113
      %v4913 = vpop.permute.xlu0 %4912
      %4914 = vrot.lane.b32.xlu0 %v4781, 113
      %v4915 = vpop.permute.xlu0 %4914
      %4916 = vrot.lane.b32.xlu0 %v4782, 113
      %v4917 = vpop.permute.xlu0 %4916
      %4918 = vrot.lane.b32.xlu0 %v4783, 113
      %v4919 = vpop.permute.xlu0 %4918
      %4920 = vrot.lane.b32.xlu0 %v4784, 113
      %v4921 = vpop.permute.xlu0 %4920
      %4922 = vrot.lane.b32.xlu0 %v4785, 113
      %v4923 = vpop.permute.xlu0 %4922
      %4924 = vrot.lane.b32.xlu0 %v4786, 113
      %v4925 = vpop.permute.xlu0 %4924
      %4926 = vrot.lane.b32.xlu0 %v4787, 113
      %v4927 = vpop.permute.xlu0 %4926
      %4928 = vrot.lane.b32.xlu0 %v4788, 113
      %v4929 = vpop.permute.xlu0 %4928
      %v4930 = vsel %vm987, %v4913, %v4915
      %v4931 = vsel %vm987, %v4915, %v4917
      %v4932 = vsel %vm987, %v4919, %v4921
      %v4933 = vsel %vm987, %v4921, %v4923
      %v4934 = vsel %vm987, %v4925, %v4927
      %v4935 = vsel %vm987, %v4927, %v4929
      %v4942 = vsel %vm439, %v4930, 0.0
      %v4943 = vsel %vm440, %v4931, 0.0
      %v4944 = vsel %vm439, %v4932, 0.0
      %v4945 = vsel %vm440, %v4933, 0.0
      %v4946 = vsel %vm439, %v4934, 0.0
      %v4947 = vsel %vm440, %v4935, 0.0
      %s4948 = scalar_lea.vmem %s5, 48
      %v4949 = vld [vmem:[%s4948] sm:$0xff]
      %v4951 = vsel %vm4325, %v4949, 0
      %4953 = vmatprep.subr.mxu0 %v4943
      %4954 = vmatpush1.msra.mxu0 %v4942
      %4955 = vmatprep.subr.mxu0 %v4945
      %4956 = vmatpush1.msra.mxu0 %v4944
      %4957 = vmatprep.subr.mxu0 %v4947
      %4958 = vmatpush1.msra.mxu0 %v4946
      %4959 = vmatprep.subr.mxu0 0.0
      %4960 = vmatpush1.msra.mxu0 0.0
      %4961 = vmatprep.subr.mxu0 0.0
      %4962 = vmatpush1.msra.mxu0 0.0
      %4963 = vmatprep.subr.mxu0 0.0
      %4964 = vmatpush1.msra.mxu0 0.0
      %4965 = vmatprep.subr.mxu0 0.0
      %4966 = vmatpush1.msra.mxu0 0.0
      %4967 = vmatprep.subr.mxu0 0.0
      %4968 = vmatpush1.msra.mxu0 0.0
      %4969 = vmatprep.subr.mxu0 0.0
      %4970 = vmatpush1.msra.mxu0 0.0
      %4971 = vmatprep.subr.mxu0 0.0
      %4972 = vmatpush1.msra.mxu0 0.0
      %4973 = vmatprep.subr.mxu0 0.0
      %4974 = vmatpush1.msra.mxu0 0.0
      %4975 = vmatprep.subr.mxu0 0.0
      %4976 = vmatpush1.msra.mxu0 0.0
      %4977 = vmatprep.subr.mxu0 0.0
      %4978 = vmatpush1.msra.mxu0 0.0
      %4979 = vmatprep.subr.mxu0 0.0
      %4980 = vmatpush1.msra.mxu0 0.0
      %4981 = vmatprep.subr.mxu0 0.0
      %4982 = vmatpush1.msra.mxu0 0.0
      %4983 = vmatprep.subr.mxu0 0.0
      %4984 = vmatpush1.msra.mxu0 0.0
      %4985 = vmatprep.subr.mxu0 0.0
      %4986 = vmatpush1.msra.mxu0 0.0
      %4987 = vmatprep.subr.mxu0 0.0
      %4988 = vmatpush1.msra.mxu0 0.0
      %4989 = vmatprep.subr.mxu0 0.0
      %4990 = vmatpush1.msra.mxu0 0.0
      %4991 = vmatprep.subr.mxu0 0.0
      %4992 = vmatpush1.msra.mxu0 0.0
      %4993 = vmatprep.subr.mxu0 0.0
      %4994 = vmatpush1.msra.mxu0 0.0
      %4995 = vmatprep.subr.mxu0 0.0
      %4996 = vmatpush1.msra.mxu0 0.0
      %4997 = vmatprep.subr.mxu0 0.0
      %4998 = vmatpush1.msra.mxu0 0.0
      %4999 = vmatprep.subr.mxu0 0.0
      %5000 = vmatpush1.msra.mxu0 0.0
      %5001 = vmatprep.subr.mxu0 0.0
      %5002 = vmatpush1.msra.mxu0 0.0
      %5003 = vmatprep.subr.mxu0 0.0
      %5004 = vmatpush1.msra.mxu0 0.0
      %5005 = vmatprep.subr.mxu0 0.0
      %5006 = vmatpush1.msra.mxu0 0.0
      %5007 = vmatprep.subr.mxu0 0.0
      %5008 = vmatpush1.msra.mxu0 0.0
      %5009 = vmatprep.subr.mxu0 0.0
      %5010 = vmatpush1.msra.mxu0 0.0
      %5011 = vmatprep.subr.mxu0 0.0
      %5012 = vmatpush1.msra.mxu0 0.0
      %5013 = vmatprep.subr.mxu0 0.0
      %5014 = vmatpush1.msra.mxu0 0.0
      %5015 = vmatprep.subr.mxu0 0.0
      %5016 = vmatpush1.msra.mxu0 0.0
      %5017 = vmatprep.mubr.f32.mxu0 0.0
      %5018 = vmatmul.mubr.f32.gmra.mrb[0].mxu0 %v4951
      %v5019 = vpop.f32.mrb[0].mxu0
      %v5020 = vadd.f32 0.0, %v5019
      %v5021 = vpop.f32.mrb[0].mxu0
      %v5022 = vadd.f32 0.0, %v5021
      %5023 = vdwg.mxu0
      %v5024 = vadd.f32 %v4910, %v5020
      %v5025 = vadd.f32 %v4911, %v5022
      %s5026 = scalar_lea.vmem %s5, 56
      %v5027 = vld [vmem:[%s5026] sm:$0xff]
      %5028 = vrot.lane.b32.xlu0 %v4780, 112
      %v5029 = vpop.permute.xlu0 %5028
      %5030 = vrot.lane.b32.xlu0 %v4781, 112
      %v5031 = vpop.permute.xlu0 %5030
      %5032 = vrot.lane.b32.xlu0 %v4782, 112
      %v5033 = vpop.permute.xlu0 %5032
      %5034 = vrot.lane.b32.xlu0 %v4783, 112
      %v5035 = vpop.permute.xlu0 %5034
      %5036 = vrot.lane.b32.xlu0 %v4784, 112
      %v5037 = vpop.permute.xlu0 %5036
      %5038 = vrot.lane.b32.xlu0 %v4785, 112
      %v5039 = vpop.permute.xlu0 %5038
      %5040 = vrot.lane.b32.xlu0 %v4786, 112
      %v5041 = vpop.permute.xlu0 %5040
      %5042 = vrot.lane.b32.xlu0 %v4787, 112
      %v5043 = vpop.permute.xlu0 %5042
      %5044 = vrot.lane.b32.xlu0 %v4788, 112
      %v5045 = vpop.permute.xlu0 %5044
      %v5046 = vsel %vm1080, %v5029, %v5031
      %v5047 = vsel %vm1080, %v5031, %v5033
      %v5048 = vsel %vm1080, %v5035, %v5037
      %v5049 = vsel %vm1080, %v5037, %v5039
      %v5050 = vsel %vm1080, %v5041, %v5043
      %v5051 = vsel %vm1080, %v5043, %v5045
      %v5059 = vsel %vm4325, %v5027, 0
      %5061 = vmatprep.subr.mxu0 %v5047
      %5062 = vmatpush1.msra.mxu0 %v5046
      %5063 = vmatprep.subr.mxu0 %v5049
      %5064 = vmatpush1.msra.mxu0 %v5048
      %5065 = vmatprep.subr.mxu0 %v5051
      %5066 = vmatpush1.msra.mxu0 %v5050
      %5067 = vmatprep.subr.mxu0 0.0
      %5068 = vmatpush1.msra.mxu0 0.0
      %5069 = vmatprep.subr.mxu0 0.0
      %5070 = vmatpush1.msra.mxu0 0.0
      %5071 = vmatprep.subr.mxu0 0.0
      %5072 = vmatpush1.msra.mxu0 0.0
      %5073 = vmatprep.subr.mxu0 0.0
      %5074 = vmatpush1.msra.mxu0 0.0
      %5075 = vmatprep.subr.mxu0 0.0
      %5076 = vmatpush1.msra.mxu0 0.0
      %5077 = vmatprep.subr.mxu0 0.0
      %5078 = vmatpush1.msra.mxu0 0.0
      %5079 = vmatprep.subr.mxu0 0.0
      %5080 = vmatpush1.msra.mxu0 0.0
      %5081 = vmatprep.subr.mxu0 0.0
      %5082 = vmatpush1.msra.mxu0 0.0
      %5083 = vmatprep.subr.mxu0 0.0
      %5084 = vmatpush1.msra.mxu0 0.0
      %5085 = vmatprep.subr.mxu0 0.0
      %5086 = vmatpush1.msra.mxu0 0.0
      %5087 = vmatprep.subr.mxu0 0.0
      %5088 = vmatpush1.msra.mxu0 0.0
      %5089 = vmatprep.subr.mxu0 0.0
      %5090 = vmatpush1.msra.mxu0 0.0
      %5091 = vmatprep.subr.mxu0 0.0
      %5092 = vmatpush1.msra.mxu0 0.0
      %5093 = vmatprep.subr.mxu0 0.0
      %5094 = vmatpush1.msra.mxu0 0.0
      %5095 = vmatprep.subr.mxu0 0.0
      %5096 = vmatpush1.msra.mxu0 0.0
      %5097 = vmatprep.subr.mxu0 0.0
      %5098 = vmatpush1.msra.mxu0 0.0
      %5099 = vmatprep.subr.mxu0 0.0
      %5100 = vmatpush1.msra.mxu0 0.0
      %5101 = vmatprep.subr.mxu0 0.0
      %5102 = vmatpush1.msra.mxu0 0.0
      %5103 = vmatprep.subr.mxu0 0.0
      %5104 = vmatpush1.msra.mxu0 0.0
      %5105 = vmatprep.subr.mxu0 0.0
      %5106 = vmatpush1.msra.mxu0 0.0
      %5107 = vmatprep.subr.mxu0 0.0
      %5108 = vmatpush1.msra.mxu0 0.0
      %5109 = vmatprep.subr.mxu0 0.0
      %5110 = vmatpush1.msra.mxu0 0.0
      %5111 = vmatprep.subr.mxu0 0.0
      %5112 = vmatpush1.msra.mxu0 0.0
      %5113 = vmatprep.subr.mxu0 0.0
      %5114 = vmatpush1.msra.mxu0 0.0
      %5115 = vmatprep.subr.mxu0 0.0
      %5116 = vmatpush1.msra.mxu0 0.0
      %5117 = vmatprep.subr.mxu0 0.0
      %5118 = vmatpush1.msra.mxu0 0.0
      %5119 = vmatprep.subr.mxu0 0.0
      %5120 = vmatpush1.msra.mxu0 0.0
      %5121 = vmatprep.subr.mxu0 0.0
      %5122 = vmatpush1.msra.mxu0 0.0
      %5123 = vmatprep.subr.mxu0 0.0
      %5124 = vmatpush1.msra.mxu0 0.0
      %5125 = vmatprep.mubr.f32.mxu0 0.0
      %5126 = vmatmul.mubr.f32.gmra.mrb[0].mxu0 %v5059
      %v5127 = vpop.f32.mrb[0].mxu0
      %v5128 = vadd.f32 0.0, %v5127
      %v5129 = vpop.f32.mrb[0].mxu0
      %v5130 = vadd.f32 0.0, %v5129
      %5131 = vdwg.mxu0
      %v5132 = vadd.f32 %v5024, %v5128
      %v5133 = vadd.f32 %v5025, %v5130
      %5134 = vrot.lane.b32.xlu0 %v4780, 111
      %v5135 = vpop.permute.xlu0 %5134
      %5136 = vrot.lane.b32.xlu0 %v4781, 111
      %v5137 = vpop.permute.xlu0 %5136
      %5138 = vrot.lane.b32.xlu0 %v4782, 111
      %v5139 = vpop.permute.xlu0 %5138
      %5140 = vrot.lane.b32.xlu0 %v4783, 111
      %v5141 = vpop.permute.xlu0 %5140
      %5142 = vrot.lane.b32.xlu0 %v4784, 111
      %v5143 = vpop.permute.xlu0 %5142
      %5144 = vrot.lane.b32.xlu0 %v4785, 111
      %v5145 = vpop.permute.xlu0 %5144
      %5146 = vrot.lane.b32.xlu0 %v4786, 111
      %v5147 = vpop.permute.xlu0 %5146
      %5148 = vrot.lane.b32.xlu0 %v4787, 111
      %v5149 = vpop.permute.xlu0 %5148
      %5150 = vrot.lane.b32.xlu0 %v4788, 111
      %v5151 = vpop.permute.xlu0 %5150
      %v5152 = vsel %vm1167, %v5135, %v5137
      %v5153 = vsel %vm1167, %v5137, %v5139
      %v5154 = vsel %vm1167, %v5141, %v5143
      %v5155 = vsel %vm1167, %v5143, %v5145
      %v5156 = vsel %vm1167, %v5147, %v5149
      %v5157 = vsel %vm1167, %v5149, %v5151
      %v5164 = vsel %vm622, %v5152, 0.0
      %v5165 = vsel %vm623, %v5153, 0.0
      %v5166 = vsel %vm622, %v5154, 0.0
      %v5167 = vsel %vm623, %v5155, 0.0
      %v5168 = vsel %vm622, %v5156, 0.0
      %v5169 = vsel %vm623, %v5157, 0.0
      %s5170 = scalar_lea.vmem %s5, 64
      %v5171 = vld [vmem:[%s5170] sm:$0xff]
      %v5173 = vsel %vm4325, %v5171, 0
      %5175 = vmatprep.subr.mxu0 %v5165
      %5176 = vmatpush1.msra.mxu0 %v5164
      %5177 = vmatprep.subr.mxu0 %v5167
      %5178 = vmatpush1.msra.mxu0 %v5166
      %5179 = vmatprep.subr.mxu0 %v5169
      %5180 = vmatpush1.msra.mxu0 %v5168
      %5181 = vmatprep.subr.mxu0 0.0
      %5182 = vmatpush1.msra.mxu0 0.0
      %5183 = vmatprep.subr.mxu0 0.0
      %5184 = vmatpush1.msra.mxu0 0.0
      %5185 = vmatprep.subr.mxu0 0.0
      %5186 = vmatpush1.msra.mxu0 0.0
      %5187 = vmatprep.subr.mxu0 0.0
      %5188 = vmatpush1.msra.mxu0 0.0
      %5189 = vmatprep.subr.mxu0 0.0
      %5190 = vmatpush1.msra.mxu0 0.0
      %5191 = vmatprep.subr.mxu0 0.0
      %5192 = vmatpush1.msra.mxu0 0.0
      %5193 = vmatprep.subr.mxu0 0.0
      %5194 = vmatpush1.msra.mxu0 0.0
      %5195 = vmatprep.subr.mxu0 0.0
      %5196 = vmatpush1.msra.mxu0 0.0
      %5197 = vmatprep.subr.mxu0 0.0
      %5198 = vmatpush1.msra.mxu0 0.0
      %5199 = vmatprep.subr.mxu0 0.0
      %5200 = vmatpush1.msra.mxu0 0.0
      %5201 = vmatprep.subr.mxu0 0.0
      %5202 = vmatpush1.msra.mxu0 0.0
      %5203 = vmatprep.subr.mxu0 0.0
      %5204 = vmatpush1.msra.mxu0 0.0
      %5205 = vmatprep.subr.mxu0 0.0
      %5206 = vmatpush1.msra.mxu0 0.0
      %5207 = vmatprep.subr.mxu0 0.0
      %5208 = vmatpush1.msra.mxu0 0.0
      %5209 = vmatprep.subr.mxu0 0.0
      %5210 = vmatpush1.msra.mxu0 0.0
      %5211 = vmatprep.subr.mxu0 0.0
      %5212 = vmatpush1.msra.mxu0 0.0
      %5213 = vmatprep.subr.mxu0 0.0
      %5214 = vmatpush1.msra.mxu0 0.0
      %5215 = vmatprep.subr.mxu0 0.0
      %5216 = vmatpush1.msra.mxu0 0.0
      %5217 = vmatprep.subr.mxu0 0.0
      %5218 = vmatpush1.msra.mxu0 0.0
      %5219 = vmatprep.subr.mxu0 0.0
      %5220 = vmatpush1.msra.mxu0 0.0
      %5221 = vmatprep.subr.mxu0 0.0
      %5222 = vmatpush1.msra.mxu0 0.0
      %5223 = vmatprep.subr.mxu0 0.0
      %5224 = vmatpush1.msra.mxu0 0.0
      %5225 = vmatprep.subr.mxu0 0.0
      %5226 = vmatpush1.msra.mxu0 0.0
      %5227 = vmatprep.subr.mxu0 0.0
      %5228 = vmatpush1.msra.mxu0 0.0
      %5229 = vmatprep.subr.mxu0 0.0
      %5230 = vmatpush1.msra.mxu0 0.0
      %5231 = vmatprep.subr.mxu0 0.0
      %5232 = vmatpush1.msra.mxu0 0.0
      %5233 = vmatprep.subr.mxu0 0.0
      %5234 = vmatpush1.msra.mxu0 0.0
      %5235 = vmatprep.subr.mxu0 0.0
      %5236 = vmatpush1.msra.mxu0 0.0
      %5237 = vmatprep.subr.mxu0 0.0
      %5238 = vmatpush1.msra.mxu0 0.0
      %5239 = vmatprep.mubr.f32.mxu0 0.0
      %5240 = vmatmul.mubr.f32.gmra.mrb[0].mxu0 %v5173
      %v5241 = vpop.f32.mrb[0].mxu0
      %v5242 = vadd.f32 0.0, %v5241
      %v5243 = vpop.f32.mrb[0].mxu0
      %v5244 = vadd.f32 0.0, %v5243
      %5245 = vdwg.mxu0
      %v5246 = vadd.f32 %v5132, %v5242
      %v5247 = vadd.f32 %v5133, %v5244
      %v5248 = vld [vmem:[%s10] sm:$0xff]
      %5250 = vset.pattern.permute.xlu0 0
      %5251 = vperm.xlu0 %5250, %v5248
      %v5252 = vpop.permute.xlu0 %5251
      %v5254 = vadd.f32 %v5246, %v5252
      %v5255 = vadd.f32 %v5247, %v5252
      %v5256 = vmul.f32 %v5254, 0.2
      %v5257 = vmul.f32 %v5255, 0.2
      %v5258 = vld [vmem:[#allocation2 + $0x8] sm:$0xff]
      %v5259 = vld [vmem:[#allocation2 + $0x10] sm:$0xff]
      %v5260 = vadd.f32 %v5256, %v5258
      %v5261 = vadd.f32 %v5257, %v5259
      %5262 = vst [vmem:[%s386] sm:$0xff] %v5260
      %5263 = vst [vmem:[%s386 + $0x8] sm:$0xff] %v5261
      %p5264 = scmp.lt.s32.totalorder %s22, 1
      %s5265 = scalar_select %p5264, %s22, 1
      %s5266 = smul.addr %s5265, 2
      %s5267 = smul.addr %s5266, 8
      %s5268 = scalar_lea.vmem %s11, %s5267
      // Predicated region
      $region65: #{rdb_forward.1} parent=63 // pred_check
        %p5269 = pneg %p276
      $region66: #{rdb_forward.1} parent=63 // pred_check_branch
        %5271 = sbr.rel (%p5269) target = $region68
      $region67: #{rdb_forward.1} parent=63 // pred_region
        _
      $region68: #{rdb_forward.1} parent=63 // pred_fallthru
        _
    $region64: #{rdb_forward.1} parent=5 // pred_fallthru
      _
    %p5272 = scmp.le.s32.totalorder 2, %s17
    // Predicated region
    $region69: #{rdb_forward.1} parent=5 // pred_check
      %p5273 = pneg %p5272
    $region70: #{rdb_forward.1} parent=5 // pred_check_branch
      %5275 = sbr.rel (%p5273) target = $region72
    $region71: #{rdb_forward.1} parent=5 // pred_region
      %s5276 = ssub.s32 %s17, 2
      // Predicated region
      $region73: #{rdb_forward.1} parent=71 // pred_check
        %p5277 = pneg %p282
      $region74: #{rdb_forward.1} parent=71 // pred_check_branch
        %5279 = sbr.rel (%p5277) target = $region76
      $region75: #{rdb_forward.1} parent=71 // pred_region
        %p5280 = scmp.lt.s32.totalorder %s23, 1
        %s5281 = scalar_select %p5280, %s23, 1
        %s5282 = smul.addr %s5281, 2
        %s5283 = smul.addr %s5282, 8
        %s5284 = scalar_lea.vmem %s11, %s5283
      $region76: #{rdb_forward.1} parent=71 // pred_fallthru
        _
    $region72: #{rdb_forward.1} parent=5 // pred_fallthru
      _
  $region6: #{rdb_forward.1} parent=0 // loop_footer
    %s21 = sadd.s32 1, %s17
  $region7: #{rdb_forward.1} parent=0 // loop_footer_branch
    %16 = sbr.rel target = $region3
  $region8: #{rdb_forward.1} parent=0 // loop_exit
    _

</llo_original>
